<compile_context>
chip_gen: v5e
topology: v5e:2x2
jax: 0.10.0
libtpu: 0.0.40
codegen_flags: <defaults>
</compile_context>

<pallas_src>
import math

import jax
import jax.numpy as jnp
from jax.experimental import pallas as pl
from jax.experimental.pallas import tpu as pltpu

# ---------------- config (small, consistent with the module) ----------------
D_MODEL   = 32
N_HEAD    = 4
D_K       = D_MODEL // N_HEAD
D_V       = D_MODEL // N_HEAD
D_FF      = 64
N_LAYERS  = 2
SRC_VOCAB = 17
TGT_VOCAB = 19
BATCH     = 2
SRC_LEN   = 8
TGT_LEN   = 8
VOCAB_PAD = 128                      # lane-dense padded width for the logits

ENC_W_COLS = 4 * D_MODEL + D_FF      # [Wqkv(3D) | Wo(D) | W1(D_FF)] = 192
DEC_W_COLS = 8 * D_MODEL + D_FF      # [saWqkv|saWo|caWq|caWkv|caWo|W1] = 320
_SCALE = 1.0 / math.sqrt(D_K)

# ========================= in-kernel helper math ============================

def _layer_norm(y, g, b):
    """PyTorch LayerNorm over last dim: biased variance, eps=1e-5."""
    mean = jnp.mean(y, axis=-1, keepdims=True)
    var = jnp.mean((y - mean) * (y - mean), axis=-1, keepdims=True)
    return (y - mean) * jax.lax.rsqrt(var + 1e-5) * g + b


def _split_heads(t):
    """(L, H*Dh) -> (H, L, Dh) via static lane slices + leading-dim stack."""
    return jnp.stack([t[:, h * D_K:(h + 1) * D_K] for h in range(N_HEAD)],
                     axis=0)


def _merge_heads(t):
    """(H, L, Dh) -> (L, H*Dh)."""
    return jnp.concatenate([t[h] for h in range(N_HEAD)], axis=-1)


def _mha(q, k, v, bias):
    """All-heads-batched scaled dot-product attention for one batch element.

    q    : (Lq, H*Dk)    k, v : (Lk, H*Dk) / (Lk, H*Dv)
    bias : (Lq, Lk) float32 additive mask (0 where visible, -1e9 where masked)
    Returns (ctx (Lq, H*Dv), probs (H, Lq, Lk)).  Exact softmax.
    """
    qh, kh, vh = _split_heads(q), _split_heads(k), _split_heads(v)
    s = jnp.einsum("hqd,hkd->hqk", qh, kh,
                   preferred_element_type=jnp.float32) * _SCALE
    s = s + bias[None, :, :]
    s = s - jnp.max(s, axis=-1, keepdims=True)
    e = jnp.exp(s)
    p = e / jnp.sum(e, axis=-1, keepdims=True)          # exact softmax probs
    ctx = jnp.einsum("hqk,hkd->hqd", p, vh,
                     preferred_element_type=jnp.float32)
    return _merge_heads(ctx), p

# ====================== single fused transformer kernel =====================

def _transformer_kernel(enc_x_ref, dec_x_ref,
                        enc_bias_ref, self_bias_ref, cross_bias_ref,
                        enc_w_ref, enc_w2_ref, enc_ln_ref,
                        dec_w_ref, dec_w2_ref, dec_ln_ref, proj_ref,
                        enc_attn_ref, dec_sattn_ref, dec_cattn_ref,
                        logits_ref):
    """Whole forward (encoder + decoder + projection) for one batch element."""
    d = D_MODEL

    # ----------------------------- encoder ---------------------------------
    x = enc_x_ref[0]                                  # (Ls, D)
    enc_bias = enc_bias_ref[0]                        # (Ls, Ls)
    for layer in range(N_LAYERS):                     # static unroll
        wqkv = enc_w_ref[layer, :, 0:3 * d]
        wo   = enc_w_ref[layer, :, 3 * d:4 * d]
        w1   = enc_w_ref[layer, :, 4 * d:4 * d + D_FF]
        w2   = enc_w2_ref[layer]
        g1 = enc_ln_ref[layer, 0:1, :]; b1 = enc_ln_ref[layer, 1:2, :]
        g2 = enc_ln_ref[layer, 2:3, :]; b2 = enc_ln_ref[layer, 3:4, :]

        qkv = jnp.dot(x, wqkv, preferred_element_type=jnp.float32)
        ctx, p = _mha(qkv[:, :d], qkv[:, d:2 * d], qkv[:, 2 * d:], enc_bias)
        enc_attn_ref[layer, 0] = p                    # one store per layer
        x1 = _layer_norm(
            jnp.dot(ctx, wo, preferred_element_type=jnp.float32) + x, g1, b1)
        h = jnp.maximum(
            jnp.dot(x1, w1, preferred_element_type=jnp.float32), 0.0)
        x = _layer_norm(
            jnp.dot(h, w2, preferred_element_type=jnp.float32) + x1, g2, b2)
    enc_out = x                                       # stays in registers/VMEM

    # ----------------------------- decoder ---------------------------------
    y = dec_x_ref[0]                                  # (Lt, D)
    self_bias = self_bias_ref[0]                      # (Lt, Lt)
    cross_bias = cross_bias_ref[0]                    # (Lt, Ls)
    for layer in range(N_LAYERS):
        sa_wqkv = dec_w_ref[layer, :, 0:3 * d]
        sa_wo   = dec_w_ref[layer, :, 3 * d:4 * d]
        ca_wq   = dec_w_ref[layer, :, 4 * d:5 * d]
        ca_wkv  = dec_w_ref[layer, :, 5 * d:7 * d]
        ca_wo   = dec_w_ref[layer, :, 7 * d:8 * d]
        w1      = dec_w_ref[layer, :, 8 * d:8 * d + D_FF]
        w2      = dec_w2_ref[layer]
        sa_g = dec_ln_ref[layer, 0:1, :]; sa_b = dec_ln_ref[layer, 1:2, :]
        ca_g = dec_ln_ref[layer, 2:3, :]; ca_b = dec_ln_ref[layer, 3:4, :]
        ff_g = dec_ln_ref[layer, 4:5, :]; ff_b = dec_ln_ref[layer, 5:6, :]

        # masked self-attention + Add&LN
        qkv = jnp.dot(y, sa_wqkv, preferred_element_type=jnp.float32)
        ctx, p = _mha(qkv[:, :d], qkv[:, d:2 * d], qkv[:, 2 * d:], self_bias)
        dec_sattn_ref[layer, 0] = p
        y1 = _layer_norm(
            jnp.dot(ctx, sa_wo, preferred_element_type=jnp.float32) + y,
            sa_g, sa_b)

        # encoder-decoder cross-attention + Add&LN
        qc = jnp.dot(y1, ca_wq, preferred_element_type=jnp.float32)
        kv = jnp.dot(enc_out, ca_wkv, preferred_element_type=jnp.float32)
        ctx_c, pc = _mha(qc, kv[:, :d], kv[:, d:], cross_bias)
        dec_cattn_ref[layer, 0] = pc
        y2 = _layer_norm(
            jnp.dot(ctx_c, ca_wo, preferred_element_type=jnp.float32) + y1,
            ca_g, ca_b)

        # position-wise FFN + Add&LN
        h = jnp.maximum(
            jnp.dot(y2, w1, preferred_element_type=jnp.float32), 0.0)
        y = _layer_norm(
            jnp.dot(h, w2, preferred_element_type=jnp.float32) + y2,
            ff_g, ff_b)

    # final bias-free projection, lane-dense 128-padded
    logits_ref[0] = jnp.dot(y, proj_ref[...],
                            preferred_element_type=jnp.float32)

# ============================== pallas wrapper ==============================

def transformer_pallas(enc_x, dec_x, enc_bias, self_bias, cross_bias, p):
    const = lambda shape: pl.BlockSpec(shape, lambda b: (0,) * len(shape))
    grid_spec = pltpu.PrefetchScalarGridSpec(
        num_scalar_prefetch=0,
        grid=(BATCH,),
        in_specs=[
            pl.BlockSpec((1, SRC_LEN, D_MODEL), lambda b: (b, 0, 0)),
            pl.BlockSpec((1, TGT_LEN, D_MODEL), lambda b: (b, 0, 0)),
            pl.BlockSpec((1, SRC_LEN, SRC_LEN), lambda b: (b, 0, 0)),
            pl.BlockSpec((1, TGT_LEN, TGT_LEN), lambda b: (b, 0, 0)),
            pl.BlockSpec((1, TGT_LEN, SRC_LEN), lambda b: (b, 0, 0)),
            const((N_LAYERS, D_MODEL, ENC_W_COLS)),   # encoder matmul slab
            const((N_LAYERS, D_FF, D_MODEL)),         # encoder W2 stack
            const((N_LAYERS, 4, D_MODEL)),            # encoder LN params
            const((N_LAYERS, D_MODEL, DEC_W_COLS)),   # decoder matmul slab
            const((N_LAYERS, D_FF, D_MODEL)),         # decoder W2 stack
            const((N_LAYERS, 6, D_MODEL)),            # decoder LN params
            const((D_MODEL, VOCAB_PAD)),              # padded projection
        ],
        out_specs=(
            pl.BlockSpec((N_LAYERS, 1, N_HEAD, SRC_LEN, SRC_LEN),
                         lambda b: (0, b, 0, 0, 0)),
            pl.BlockSpec((N_LAYERS, 1, N_HEAD, TGT_LEN, TGT_LEN),
                         lambda b: (0, b, 0, 0, 0)),
            pl.BlockSpec((N_LAYERS, 1, N_HEAD, TGT_LEN, SRC_LEN),
                         lambda b: (0, b, 0, 0, 0)),
            pl.BlockSpec((1, TGT_LEN, VOCAB_PAD), lambda b: (b, 0, 0)),
        ),
    )
    return pl.pallas_call(
        _transformer_kernel,
        grid_spec=grid_spec,
        out_shape=(
            jax.ShapeDtypeStruct((N_LAYERS, BATCH, N_HEAD, SRC_LEN, SRC_LEN),
                                 jnp.float32),
            jax.ShapeDtypeStruct((N_LAYERS, BATCH, N_HEAD, TGT_LEN, TGT_LEN),
                                 jnp.float32),
            jax.ShapeDtypeStruct((N_LAYERS, BATCH, N_HEAD, TGT_LEN, SRC_LEN),
                                 jnp.float32),
            jax.ShapeDtypeStruct((BATCH, TGT_LEN, VOCAB_PAD), jnp.float32),
        ),
        compiler_params=pltpu.CompilerParams(
            dimension_semantics=("parallel",)),   # 2 TCs on v7x, no-op on v5e/v6e
    )(enc_x, dec_x, enc_bias, self_bias, cross_bias,
      p["enc_w"], p["enc_w2"], p["enc_ln"],
      p["dec_w"], p["dec_w2"], p["dec_ln"], p["proj_pad"])

# ======================= model glue (plain JAX, tiny) =======================

def positional_encoding(length, dim):
    pos = jnp.arange(length, dtype=jnp.float32)[:, None]
    div = jnp.exp(jnp.arange(0, dim, 2, dtype=jnp.float32) *
                  (-math.log(10000.0) / dim))
    pe = jnp.zeros((length, dim), jnp.float32)
    pe = pe.at[:, 0::2].set(jnp.sin(pos * div))
    pe = pe.at[:, 1::2].set(jnp.cos(pos * div))
    return pe            # constant-folded under jit (no traced inputs)


@jax.jit
def transformer_forward(params, enc_inputs, dec_inputs):
    b, ls = enc_inputs.shape
    _, lt = dec_inputs.shape

    # TODO(synk): PositionalEncoding dropout omitted (eval-mode identity).
    # TODO(synk): linear layers assumed bias-free, as in the reference module.
    enc_x = (params["src_emb"][enc_inputs] +
             positional_encoding(ls, D_MODEL)[None])          # (B, Ls, D)
    dec_x = (params["tgt_emb"][dec_inputs] +
             positional_encoding(lt, D_MODEL)[None])          # (B, Lt, D)

    # masks as float32 additive biases (0 visible / -1e9 masked)
    enc_pad = (enc_inputs == 0)[:, None, :]                   # (B, 1, Ls)
    dec_pad = (dec_inputs == 0)[:, None, :]                   # (B, 1, Lt)
    causal = jnp.triu(jnp.ones((lt, lt), dtype=jnp.bool_), k=1)[None]
    enc_bias = jnp.where(jnp.broadcast_to(enc_pad, (b, ls, ls)),
                         -1e9, 0.0).astype(jnp.float32)
    self_bias = jnp.where(jnp.broadcast_to(dec_pad, (b, lt, lt)) | causal,
                          -1e9, 0.0).astype(jnp.float32)
    cross_bias = jnp.where(jnp.broadcast_to(enc_pad, (b, lt, ls)),
                           -1e9, 0.0).astype(jnp.float32)

    enc_attn, dec_sattn, dec_cattn, logits_pad = transformer_pallas(
        enc_x, dec_x, enc_bias, self_bias, cross_bias, params)

    logits = logits_pad.reshape(b * lt, VOCAB_PAD)[:, :TGT_VOCAB]
    enc_self_attns = [enc_attn[l] for l in range(N_LAYERS)]
    dec_self_attns = [dec_sattn[l] for l in range(N_LAYERS)]
    dec_enc_attns = [dec_cattn[l] for l in range(N_LAYERS)]
    return logits, enc_self_attns, dec_self_attns, dec_enc_attns

# ======================= deterministic parameter init =======================

def _norm(key, shape, scale=0.02):
    return scale * jax.random.normal(key, shape, jnp.float32)


def init_params(key):
    ks = jax.random.split(key, 15)
    nl, d = N_LAYERS, D_MODEL
    ones = jnp.ones((nl, 1, d), jnp.float32)
    zeros = jnp.zeros((nl, 1, d), jnp.float32)

    # encoder packed slab: [Wqkv | Wo | W1] along columns, per layer
    enc_w = jnp.concatenate([_norm(ks[0], (nl, d, 3 * d)),
                             _norm(ks[1], (nl, d, d)),
                             _norm(ks[2], (nl, d, D_FF))], axis=-1)
    enc_w2 = _norm(ks[3], (nl, D_FF, d))
    enc_ln = jnp.concatenate([ones, zeros, ones, zeros], axis=1)   # g1,b1,g2,b2

    # decoder packed slab: [saWqkv | saWo | caWq | caWkv | caWo | W1]
    dec_w = jnp.concatenate([_norm(ks[4], (nl, d, 3 * d)),
                             _norm(ks[5], (nl, d, d)),
                             _norm(ks[6], (nl, d, d)),
                             _norm(ks[7], (nl, d, 2 * d)),
                             _norm(ks[8], (nl, d, d)),
                             _norm(ks[9], (nl, d, D_FF))], axis=-1)
    dec_w2 = _norm(ks[10], (nl, D_FF, d))
    dec_ln = jnp.concatenate([ones, zeros, ones, zeros, ones, zeros], axis=1)

    proj = _norm(ks[11], (d, TGT_VOCAB))
    proj_pad = jnp.zeros((d, VOCAB_PAD), jnp.float32).at[:, :TGT_VOCAB].set(proj)

    return {
        "src_emb": _norm(ks[12], (SRC_VOCAB, d), 1.0),
        "tgt_emb": _norm(ks[13], (TGT_VOCAB, d), 1.0),
        "enc_w": enc_w, "enc_w2": enc_w2, "enc_ln": enc_ln,
        "dec_w": dec_w, "dec_w2": dec_w2, "dec_ln": dec_ln,
        "proj_pad": proj_pad,
    }

# ================================== main ====================================

if __name__ == "__main__":
    key = jax.random.PRNGKey(0)
    k_p, k_e, k_d = jax.random.split(key, 3)
    params = init_params(k_p)

    enc_inputs = jax.random.randint(k_e, (BATCH, SRC_LEN), 1, SRC_VOCAB,
                                    dtype=jnp.int32)
    enc_inputs = enc_inputs.at[:, -2:].set(0)          # trailing padding tokens
    dec_inputs = jax.random.randint(k_d, (BATCH, TGT_LEN), 1, TGT_VOCAB,
                                    dtype=jnp.int32)
    dec_inputs = dec_inputs.at[:, -1:].set(0)

    logits, enc_sa, dec_sa, dec_ea = transformer_forward(
        params, enc_inputs, dec_inputs)
    jax.block_until_ready((logits, enc_sa, dec_sa, dec_ea))

    assert logits.shape == (BATCH * TGT_LEN, TGT_VOCAB)
    assert len(enc_sa) == N_LAYERS and len(dec_sa) == N_LAYERS
    assert len(dec_ea) == N_LAYERS
    assert enc_sa[0].shape == (BATCH, N_HEAD, SRC_LEN, SRC_LEN)
    assert dec_sa[0].shape == (BATCH, N_HEAD, TGT_LEN, TGT_LEN)
    assert dec_ea[0].shape == (BATCH, N_HEAD, TGT_LEN, SRC_LEN)
    assert bool(jnp.all(jnp.isfinite(logits)))
    # attention probability rows must sum to 1 (exact softmax in-kernel)
    assert bool(jnp.allclose(jnp.sum(enc_sa[0], axis=-1), 1.0, atol=1e-4))
    print("KERNEL_OK")
</pallas_src>

<mosaic_0001>
module attributes {stable_mosaic.version = 11 : i64} {
  func.func @_transformer_kernel(%arg0: i32, %arg1: memref<1x8x32xf32, #tpu.memory_space<vmem>>, %arg2: memref<1x8x32xf32, #tpu.memory_space<vmem>>, %arg3: memref<1x8x8xf32, #tpu.memory_space<vmem>>, %arg4: memref<1x8x8xf32, #tpu.memory_space<vmem>>, %arg5: memref<1x8x8xf32, #tpu.memory_space<vmem>>, %arg6: memref<2x32x192xf32, #tpu.memory_space<vmem>>, %arg7: memref<2x64x32xf32, #tpu.memory_space<vmem>>, %arg8: memref<2x4x32xf32, #tpu.memory_space<vmem>>, %arg9: memref<2x32x320xf32, #tpu.memory_space<vmem>>, %arg10: memref<2x64x32xf32, #tpu.memory_space<vmem>>, %arg11: memref<2x6x32xf32, #tpu.memory_space<vmem>>, %arg12: memref<32x128xf32, #tpu.memory_space<vmem>>, %arg13: memref<2x1x4x8x8xf32, #tpu.memory_space<vmem>>, %arg14: memref<2x1x4x8x8xf32, #tpu.memory_space<vmem>>, %arg15: memref<2x1x4x8x8xf32, #tpu.memory_space<vmem>>, %arg16: memref<1x8x128xf32, #tpu.memory_space<vmem>>) attributes {dimension_semantics = [#tpu.dimension_semantics<parallel>], iteration_bounds = array<i64: 2>, scalar_prefetch = 0 : i64, scratch_operands = 0 : i64, tpu.core_type = #tpu.core_type<tc>, window_params = [{transform_indices = @transform_0, window_bounds = array<i64: 1, 8, 32>}, {transform_indices = @transform_1, window_bounds = array<i64: 1, 8, 32>}, {transform_indices = @transform_2, window_bounds = array<i64: 1, 8, 8>}, {transform_indices = @transform_3, window_bounds = array<i64: 1, 8, 8>}, {transform_indices = @transform_4, window_bounds = array<i64: 1, 8, 8>}, {pipeline_mode = #tpu.pipeline_mode<synchronous>, transform_indices = @transform_5, window_bounds = array<i64: 2, 32, 192>}, {pipeline_mode = #tpu.pipeline_mode<synchronous>, transform_indices = @transform_6, window_bounds = array<i64: 2, 64, 32>}, {pipeline_mode = #tpu.pipeline_mode<synchronous>, transform_indices = @transform_7, window_bounds = array<i64: 2, 4, 32>}, {pipeline_mode = #tpu.pipeline_mode<synchronous>, transform_indices = @transform_8, window_bounds = array<i64: 2, 32, 320>}, {pipeline_mode = #tpu.pipeline_mode<synchronous>, transform_indices = @transform_9, window_bounds = array<i64: 2, 64, 32>}, {pipeline_mode = #tpu.pipeline_mode<synchronous>, transform_indices = @transform_10, window_bounds = array<i64: 2, 6, 32>}, {pipeline_mode = #tpu.pipeline_mode<synchronous>, transform_indices = @transform_11, window_bounds = array<i64: 32, 128>}, {transform_indices = @transform_12, window_bounds = array<i64: 2, 1, 4, 8, 8>}, {transform_indices = @transform_13, window_bounds = array<i64: 2, 1, 4, 8, 8>}, {transform_indices = @transform_14, window_bounds = array<i64: 2, 1, 4, 8, 8>}, {transform_indices = @transform_15, window_bounds = array<i64: 1, 8, 128>}]} {
    %c0 = arith.constant 0 : index
    %c0_0 = arith.constant 0 : index
    %c0_1 = arith.constant 0 : index
    %0 = vector.load %arg1[%c0, %c0_0, %c0_1] : memref<1x8x32xf32, #tpu.memory_space<vmem>>, vector<1x8x32xf32>
    %1 = vector.shape_cast %0 : vector<1x8x32xf32> to vector<8x32xf32>
    %c0_2 = arith.constant 0 : index
    %c0_3 = arith.constant 0 : index
    %c0_4 = arith.constant 0 : index
    %2 = vector.load %arg3[%c0_2, %c0_3, %c0_4] : memref<1x8x8xf32, #tpu.memory_space<vmem>>, vector<1x8x8xf32>
    %3 = vector.shape_cast %2 : vector<1x8x8xf32> to vector<8x8xf32>
    %c0_5 = arith.constant 0 : index
    %c0_6 = arith.constant 0 : index
    %c0_7 = arith.constant 0 : index
    %4 = vector.load %arg6[%c0_5, %c0_6, %c0_7] : memref<2x32x192xf32, #tpu.memory_space<vmem>>, vector<1x32x96xf32>
    %5 = vector.shape_cast %4 : vector<1x32x96xf32> to vector<32x96xf32>
    %c0_8 = arith.constant 0 : index
    %c0_9 = arith.constant 0 : index
    %c96 = arith.constant 96 : index
    %6 = vector.load %arg6[%c0_8, %c0_9, %c96] : memref<2x32x192xf32, #tpu.memory_space<vmem>>, vector<1x32x32xf32>
    %7 = vector.shape_cast %6 : vector<1x32x32xf32> to vector<32x32xf32>
    %c0_10 = arith.constant 0 : index
    %c0_11 = arith.constant 0 : index
    %c128 = arith.constant 128 : index
    %8 = vector.load %arg6[%c0_10, %c0_11, %c128] : memref<2x32x192xf32, #tpu.memory_space<vmem>>, vector<1x32x64xf32>
    %9 = vector.shape_cast %8 : vector<1x32x64xf32> to vector<32x64xf32>
    %c0_12 = arith.constant 0 : index
    %c0_13 = arith.constant 0 : index
    %c0_14 = arith.constant 0 : index
    %10 = vector.load %arg7[%c0_12, %c0_13, %c0_14] : memref<2x64x32xf32, #tpu.memory_space<vmem>>, vector<1x64x32xf32>
    %11 = vector.shape_cast %10 : vector<1x64x32xf32> to vector<64x32xf32>
    %c0_15 = arith.constant 0 : index
    %c0_16 = arith.constant 0 : index
    %c0_17 = arith.constant 0 : index
    %12 = vector.load %arg8[%c0_15, %c0_16, %c0_17] : memref<2x4x32xf32, #tpu.memory_space<vmem>>, vector<1x1x32xf32>
    %13 = vector.shape_cast %12 : vector<1x1x32xf32> to vector<1x32xf32>
    %c0_18 = arith.constant 0 : index
    %c1 = arith.constant 1 : index
    %c0_19 = arith.constant 0 : index
    %14 = vector.load %arg8[%c0_18, %c1, %c0_19] : memref<2x4x32xf32, #tpu.memory_space<vmem>>, vector<1x1x32xf32>
    %15 = vector.shape_cast %14 : vector<1x1x32xf32> to vector<1x32xf32>
    %c0_20 = arith.constant 0 : index
    %c2 = arith.constant 2 : index
    %c0_21 = arith.constant 0 : index
    %16 = vector.load %arg8[%c0_20, %c2, %c0_21] : memref<2x4x32xf32, #tpu.memory_space<vmem>>, vector<1x1x32xf32>
    %17 = vector.shape_cast %16 : vector<1x1x32xf32> to vector<1x32xf32>
    %c0_22 = arith.constant 0 : index
    %c3 = arith.constant 3 : index
    %c0_23 = arith.constant 0 : index
    %18 = vector.load %arg8[%c0_22, %c3, %c0_23] : memref<2x4x32xf32, #tpu.memory_space<vmem>>, vector<1x1x32xf32>
    %19 = vector.shape_cast %18 : vector<1x1x32xf32> to vector<1x32xf32>
    %cst = arith.constant dense<0.000000e+00> : vector<8x96xf32>
    %20 = tpu.matmul %1, %5, %cst {dimension_numbers = #tpu.dot_dimension_numbers<[1], [0], [0], [1], [0, 0, 1, 1], [], []>} : vector<8x32xf32>, vector<32x96xf32>, vector<8x96xf32> -> vector<8x96xf32>
    %21 = vector.extract_strided_slice %20 {offsets = [0, 0], sizes = [8, 32], strides = [1, 1]} : vector<8x96xf32> to vector<8x32xf32>
    %22 = vector.extract_strided_slice %20 {offsets = [0, 32], sizes = [8, 32], strides = [1, 1]} : vector<8x96xf32> to vector<8x32xf32>
    %23 = vector.extract_strided_slice %20 {offsets = [0, 64], sizes = [8, 32], strides = [1, 1]} : vector<8x96xf32> to vector<8x32xf32>
    %24 = vector.extract_strided_slice %21 {offsets = [0, 0], sizes = [8, 8], strides = [1, 1]} : vector<8x32xf32> to vector<8x8xf32>
    %25 = vector.extract_strided_slice %21 {offsets = [0, 8], sizes = [8, 8], strides = [1, 1]} : vector<8x32xf32> to vector<8x8xf32>
    %26 = vector.extract_strided_slice %21 {offsets = [0, 16], sizes = [8, 8], strides = [1, 1]} : vector<8x32xf32> to vector<8x8xf32>
    %27 = vector.extract_strided_slice %21 {offsets = [0, 24], sizes = [8, 8], strides = [1, 1]} : vector<8x32xf32> to vector<8x8xf32>
    %28 = vector.shape_cast %24 : vector<8x8xf32> to vector<1x8x8xf32>
    %29 = vector.shape_cast %25 : vector<8x8xf32> to vector<1x8x8xf32>
    %30 = vector.shape_cast %26 : vector<8x8xf32> to vector<1x8x8xf32>
    %31 = vector.shape_cast %27 : vector<8x8xf32> to vector<1x8x8xf32>
    %32 = tpu.concatenate %28, %29, %30, %31 in 0 : vector<1x8x8xf32>, vector<1x8x8xf32>, vector<1x8x8xf32>, vector<1x8x8xf32> -> vector<4x8x8xf32>
    %33 = vector.extract_strided_slice %22 {offsets = [0, 0], sizes = [8, 8], strides = [1, 1]} : vector<8x32xf32> to vector<8x8xf32>
    %34 = vector.extract_strided_slice %22 {offsets = [0, 8], sizes = [8, 8], strides = [1, 1]} : vector<8x32xf32> to vector<8x8xf32>
    %35 = vector.extract_strided_slice %22 {offsets = [0, 16], sizes = [8, 8], strides = [1, 1]} : vector<8x32xf32> to vector<8x8xf32>
    %36 = vector.extract_strided_slice %22 {offsets = [0, 24], sizes = [8, 8], strides = [1, 1]} : vector<8x32xf32> to vector<8x8xf32>
    %37 = vector.shape_cast %33 : vector<8x8xf32> to vector<1x8x8xf32>
    %38 = vector.shape_cast %34 : vector<8x8xf32> to vector<1x8x8xf32>
    %39 = vector.shape_cast %35 : vector<8x8xf32> to vector<1x8x8xf32>
    %40 = vector.shape_cast %36 : vector<8x8xf32> to vector<1x8x8xf32>
    %41 = tpu.concatenate %37, %38, %39, %40 in 0 : vector<1x8x8xf32>, vector<1x8x8xf32>, vector<1x8x8xf32>, vector<1x8x8xf32> -> vector<4x8x8xf32>
    %42 = vector.extract_strided_slice %23 {offsets = [0, 0], sizes = [8, 8], strides = [1, 1]} : vector<8x32xf32> to vector<8x8xf32>
    %43 = vector.extract_strided_slice %23 {offsets = [0, 8], sizes = [8, 8], strides = [1, 1]} : vector<8x32xf32> to vector<8x8xf32>
    %44 = vector.extract_strided_slice %23 {offsets = [0, 16], sizes = [8, 8], strides = [1, 1]} : vector<8x32xf32> to vector<8x8xf32>
    %45 = vector.extract_strided_slice %23 {offsets = [0, 24], sizes = [8, 8], strides = [1, 1]} : vector<8x32xf32> to vector<8x8xf32>
    %46 = vector.shape_cast %42 : vector<8x8xf32> to vector<1x8x8xf32>
    %47 = vector.shape_cast %43 : vector<8x8xf32> to vector<1x8x8xf32>
    %48 = vector.shape_cast %44 : vector<8x8xf32> to vector<1x8x8xf32>
    %49 = vector.shape_cast %45 : vector<8x8xf32> to vector<1x8x8xf32>
    %50 = tpu.concatenate %46, %47, %48, %49 in 0 : vector<1x8x8xf32>, vector<1x8x8xf32>, vector<1x8x8xf32>, vector<1x8x8xf32> -> vector<4x8x8xf32>
    "tpu.trace_start"() <{level = 10 : i32, message = "hqd,hkd->hqk"}> : () -> ()
    %cst_24 = arith.constant dense<0.000000e+00> : vector<4x8x8xf32>
    %51 = tpu.matmul %32, %41, %cst_24 {dimension_numbers = #tpu.dot_dimension_numbers<[2], [2], [1], [1], [0, 0, 0, 1, 1, 1], [0], [0]>} : vector<4x8x8xf32>, vector<4x8x8xf32>, vector<4x8x8xf32> -> vector<4x8x8xf32>
    "tpu.trace_stop"() : () -> ()
    %cst_25 = arith.constant 0.353553385 : f32
    %52 = vector.broadcast %cst_25 : f32 to vector<4x8x8xf32>
    %53 = arith.mulf %51, %52 : vector<4x8x8xf32>
    %54 = vector.shape_cast %3 : vector<8x8xf32> to vector<1x8x8xf32>
    %55 = vector.broadcast %54 : vector<1x8x8xf32> to vector<4x8x8xf32>
    %56 = arith.addf %53, %55 : vector<4x8x8xf32>
    %cst_26 = arith.constant dense<0xFF800000> : vector<4x8xf32>
    %57 = vector.multi_reduction <maximumf>, %56, %cst_26 [2] : vector<4x8x8xf32> to vector<4x8xf32>
    %58 = vector.shape_cast %57 : vector<4x8xf32> to vector<4x8x1xf32>
    %59 = vector.broadcast %58 : vector<4x8x1xf32> to vector<4x8x8xf32>
    %60 = arith.subf %56, %59 : vector<4x8x8xf32>
    %61 = math.exp %60 : vector<4x8x8xf32>
    %cst_27 = arith.constant dense<0.000000e+00> : vector<4x8xf32>
    %62 = vector.multi_reduction <add>, %61, %cst_27 [2] : vector<4x8x8xf32> to vector<4x8xf32>
    %63 = vector.shape_cast %62 : vector<4x8xf32> to vector<4x8x1xf32>
    %64 = vector.broadcast %63 : vector<4x8x1xf32> to vector<4x8x8xf32>
    %65 = arith.divf %61, %64 : vector<4x8x8xf32>
    "tpu.trace_start"() <{level = 10 : i32, message = "hqk,hkd->hqd"}> : () -> ()
    %cst_28 = arith.constant dense<0.000000e+00> : vector<4x8x8xf32>
    %66 = tpu.matmul %65, %50, %cst_28 {dimension_numbers = #tpu.dot_dimension_numbers<[2], [1], [1], [2], [0, 0, 0, 1, 1, 2], [0], [0]>} : vector<4x8x8xf32>, vector<4x8x8xf32>, vector<4x8x8xf32> -> vector<4x8x8xf32>
    "tpu.trace_stop"() : () -> ()
    %67 = vector.extract_strided_slice %66 {offsets = [0, 0, 0], sizes = [1, 8, 8], strides = [1, 1, 1]} : vector<4x8x8xf32> to vector<1x8x8xf32>
    %68 = vector.shape_cast %67 : vector<1x8x8xf32> to vector<8x8xf32>
    %69 = vector.extract_strided_slice %66 {offsets = [1, 0, 0], sizes = [1, 8, 8], strides = [1, 1, 1]} : vector<4x8x8xf32> to vector<1x8x8xf32>
    %70 = vector.shape_cast %69 : vector<1x8x8xf32> to vector<8x8xf32>
    %71 = vector.extract_strided_slice %66 {offsets = [2, 0, 0], sizes = [1, 8, 8], strides = [1, 1, 1]} : vector<4x8x8xf32> to vector<1x8x8xf32>
    %72 = vector.shape_cast %71 : vector<1x8x8xf32> to vector<8x8xf32>
    %73 = vector.extract_strided_slice %66 {offsets = [3, 0, 0], sizes = [1, 8, 8], strides = [1, 1, 1]} : vector<4x8x8xf32> to vector<1x8x8xf32>
    %74 = vector.shape_cast %73 : vector<1x8x8xf32> to vector<8x8xf32>
    %75 = tpu.concatenate %68, %70, %72, %74 in 1 : vector<8x8xf32>, vector<8x8xf32>, vector<8x8xf32>, vector<8x8xf32> -> vector<8x32xf32>
    %c0_29 = arith.constant 0 : index
    %c0_30 = arith.constant 0 : index
    %c0_31 = arith.constant 0 : index
    %c0_32 = arith.constant 0 : index
    %c0_33 = arith.constant 0 : index
    %76 = vector.load %arg13[%c0_29, %c0_30, %c0_31, %c0_32, %c0_33] : memref<2x1x4x8x8xf32, #tpu.memory_space<vmem>>, vector<1x1x4x8x8xf32>
    %77 = vector.shape_cast %76 : vector<1x1x4x8x8xf32> to vector<4x8x8xf32>
    %78 = vector.shape_cast %65 : vector<4x8x8xf32> to vector<1x1x4x8x8xf32>
    tpu.vector_store %arg13[%c0_29, %c0_30, %c0_31, %c0_32, %c0_33], %78 {strides = array<i32>} : memref<2x1x4x8x8xf32, #tpu.memory_space<vmem>>, vector<1x1x4x8x8xf32>,
    %cst_34 = arith.constant dense<0.000000e+00> : vector<8x32xf32>
    %79 = tpu.matmul %75, %7, %cst_34 {dimension_numbers = #tpu.dot_dimension_numbers<[1], [0], [0], [1], [0, 0, 1, 1], [], []>} : vector<8x32xf32>, vector<32x32xf32>, vector<8x32xf32> -> vector<8x32xf32>
    %80 = arith.addf %79, %1 : vector<8x32xf32>
    %cst_35 = arith.constant dense<0.000000e+00> : vector<8xf32>
    %81 = vector.multi_reduction <add>, %80, %cst_35 [1] : vector<8x32xf32> to vector<8xf32>
    %82 = vector.shape_cast %81 : vector<8xf32> to vector<8x1xf32>
    %cst_36 = arith.constant 3.200000e+01 : f32
    %83 = vector.broadcast %cst_36 : f32 to vector<8x1xf32>
    %84 = arith.divf %82, %83 : vector<8x1xf32>
    %85 = vector.broadcast %84 : vector<8x1xf32> to vector<8x32xf32>
    %86 = arith.subf %80, %85 : vector<8x32xf32>
    %87 = vector.broadcast %84 : vector<8x1xf32> to vector<8x32xf32>
    %88 = arith.subf %80, %87 : vector<8x32xf32>
    %89 = arith.mulf %86, %88 : vector<8x32xf32>
    %cst_37 = arith.constant dense<0.000000e+00> : vector<8xf32>
    %90 = vector.multi_reduction <add>, %89, %cst_37 [1] : vector<8x32xf32> to vector<8xf32>
    %91 = vector.shape_cast %90 : vector<8xf32> to vector<8x1xf32>
    %cst_38 = arith.constant 3.200000e+01 : f32
    %92 = vector.broadcast %cst_38 : f32 to vector<8x1xf32>
    %93 = arith.divf %91, %92 : vector<8x1xf32>
    %94 = vector.broadcast %84 : vector<8x1xf32> to vector<8x32xf32>
    %95 = arith.subf %80, %94 : vector<8x32xf32>
    %cst_39 = arith.constant 9.99999974E-6 : f32
    %96 = vector.broadcast %cst_39 : f32 to vector<8x1xf32>
    %97 = arith.addf %93, %96 : vector<8x1xf32>
    %98 = math.rsqrt %97 : vector<8x1xf32>
    %99 = vector.broadcast %98 : vector<8x1xf32> to vector<8x32xf32>
    %100 = arith.mulf %95, %99 : vector<8x32xf32>
    %101 = vector.broadcast %13 : vector<1x32xf32> to vector<8x32xf32>
    %102 = arith.mulf %100, %101 : vector<8x32xf32>
    %103 = vector.broadcast %15 : vector<1x32xf32> to vector<8x32xf32>
    %104 = arith.addf %102, %103 : vector<8x32xf32>
    %cst_40 = arith.constant dense<0.000000e+00> : vector<8x64xf32>
    %105 = tpu.matmul %104, %9, %cst_40 {dimension_numbers = #tpu.dot_dimension_numbers<[1], [0], [0], [1], [0, 0, 1, 1], [], []>} : vector<8x32xf32>, vector<32x64xf32>, vector<8x64xf32> -> vector<8x64xf32>
    %cst_41 = arith.constant 0.000000e+00 : f32
    %106 = vector.broadcast %cst_41 : f32 to vector<8x64xf32>
    %107 = arith.maximumf %105, %106 : vector<8x64xf32>
    %cst_42 = arith.constant dense<0.000000e+00> : vector<8x32xf32>
    %108 = tpu.matmul %107, %11, %cst_42 {dimension_numbers = #tpu.dot_dimension_numbers<[1], [0], [0], [1], [0, 0, 1, 1], [], []>} : vector<8x64xf32>, vector<64x32xf32>, vector<8x32xf32> -> vector<8x32xf32>
    %109 = arith.addf %108, %104 : vector<8x32xf32>
    %cst_43 = arith.constant dense<0.000000e+00> : vector<8xf32>
    %110 = vector.multi_reduction <add>, %109, %cst_43 [1] : vector<8x32xf32> to vector<8xf32>
    %111 = vector.shape_cast %110 : vector<8xf32> to vector<8x1xf32>
    %cst_44 = arith.constant 3.200000e+01 : f32
    %112 = vector.broadcast %cst_44 : f32 to vector<8x1xf32>
    %113 = arith.divf %111, %112 : vector<8x1xf32>
    %114 = vector.broadcast %113 : vector<8x1xf32> to vector<8x32xf32>
    %115 = arith.subf %109, %114 : vector<8x32xf32>
    %116 = vector.broadcast %113 : vector<8x1xf32> to vector<8x32xf32>
    %117 = arith.subf %109, %116 : vector<8x32xf32>
    %118 = arith.mulf %115, %117 : vector<8x32xf32>
    %cst_45 = arith.constant dense<0.000000e+00> : vector<8xf32>
    %119 = vector.multi_reduction <add>, %118, %cst_45 [1] : vector<8x32xf32> to vector<8xf32>
    %120 = vector.shape_cast %119 : vector<8xf32> to vector<8x1xf32>
    %cst_46 = arith.constant 3.200000e+01 : f32
    %121 = vector.broadcast %cst_46 : f32 to vector<8x1xf32>
    %122 = arith.divf %120, %121 : vector<8x1xf32>
    %123 = vector.broadcast %113 : vector<8x1xf32> to vector<8x32xf32>
    %124 = arith.subf %109, %123 : vector<8x32xf32>
    %cst_47 = arith.constant 9.99999974E-6 : f32
    %125 = vector.broadcast %cst_47 : f32 to vector<8x1xf32>
    %126 = arith.addf %122, %125 : vector<8x1xf32>
    %127 = math.rsqrt %126 : vector<8x1xf32>
    %128 = vector.broadcast %127 : vector<8x1xf32> to vector<8x32xf32>
    %129 = arith.mulf %124, %128 : vector<8x32xf32>
    %130 = vector.broadcast %17 : vector<1x32xf32> to vector<8x32xf32>
    %131 = arith.mulf %129, %130 : vector<8x32xf32>
    %132 = vector.broadcast %19 : vector<1x32xf32> to vector<8x32xf32>
    %133 = arith.addf %131, %132 : vector<8x32xf32>
    %c1_48 = arith.constant 1 : index
    %c0_49 = arith.constant 0 : index
    %c0_50 = arith.constant 0 : index
    %134 = vector.load %arg6[%c1_48, %c0_49, %c0_50] : memref<2x32x192xf32, #tpu.memory_space<vmem>>, vector<1x32x96xf32>
    %135 = vector.shape_cast %134 : vector<1x32x96xf32> to vector<32x96xf32>
    %c1_51 = arith.constant 1 : index
    %c0_52 = arith.constant 0 : index
    %c96_53 = arith.constant 96 : index
    %136 = vector.load %arg6[%c1_51, %c0_52, %c96_53] : memref<2x32x192xf32, #tpu.memory_space<vmem>>, vector<1x32x32xf32>
    %137 = vector.shape_cast %136 : vector<1x32x32xf32> to vector<32x32xf32>
    %c1_54 = arith.constant 1 : index
    %c0_55 = arith.constant 0 : index
    %c128_56 = arith.constant 128 : index
    %138 = vector.load %arg6[%c1_54, %c0_55, %c128_56] : memref<2x32x192xf32, #tpu.memory_space<vmem>>, vector<1x32x64xf32>
    %139 = vector.shape_cast %138 : vector<1x32x64xf32> to vector<32x64xf32>
    %c1_57 = arith.constant 1 : index
    %c0_58 = arith.constant 0 : index
    %c0_59 = arith.constant 0 : index
    %140 = vector.load %arg7[%c1_57, %c0_58, %c0_59] : memref<2x64x32xf32, #tpu.memory_space<vmem>>, vector<1x64x32xf32>
    %141 = vector.shape_cast %140 : vector<1x64x32xf32> to vector<64x32xf32>
    %c1_60 = arith.constant 1 : index
    %c0_61 = arith.constant 0 : index
    %c0_62 = arith.constant 0 : index
    %142 = vector.load %arg8[%c1_60, %c0_61, %c0_62] : memref<2x4x32xf32, #tpu.memory_space<vmem>>, vector<1x1x32xf32>
    %143 = vector.shape_cast %142 : vector<1x1x32xf32> to vector<1x32xf32>
    %c1_63 = arith.constant 1 : index
    %c1_64 = arith.constant 1 : index
    %c0_65 = arith.constant 0 : index
    %144 = vector.load %arg8[%c1_63, %c1_64, %c0_65] : memref<2x4x32xf32, #tpu.memory_space<vmem>>, vector<1x1x32xf32>
    %145 = vector.shape_cast %144 : vector<1x1x32xf32> to vector<1x32xf32>
    %c1_66 = arith.constant 1 : index
    %c2_67 = arith.constant 2 : index
    %c0_68 = arith.constant 0 : index
    %146 = vector.load %arg8[%c1_66, %c2_67, %c0_68] : memref<2x4x32xf32, #tpu.memory_space<vmem>>, vector<1x1x32xf32>
    %147 = vector.shape_cast %146 : vector<1x1x32xf32> to vector<1x32xf32>
    %c1_69 = arith.constant 1 : index
    %c3_70 = arith.constant 3 : index
    %c0_71 = arith.constant 0 : index
    %148 = vector.load %arg8[%c1_69, %c3_70, %c0_71] : memref<2x4x32xf32, #tpu.memory_space<vmem>>, vector<1x1x32xf32>
    %149 = vector.shape_cast %148 : vector<1x1x32xf32> to vector<1x32xf32>
    %cst_72 = arith.constant dense<0.000000e+00> : vector<8x96xf32>
    %150 = tpu.matmul %133, %135, %cst_72 {dimension_numbers = #tpu.dot_dimension_numbers<[1], [0], [0], [1], [0, 0, 1, 1], [], []>} : vector<8x32xf32>, vector<32x96xf32>, vector<8x96xf32> -> vector<8x96xf32>
    %151 = vector.extract_strided_slice %150 {offsets = [0, 0], sizes = [8, 32], strides = [1, 1]} : vector<8x96xf32> to vector<8x32xf32>
    %152 = vector.extract_strided_slice %150 {offsets = [0, 32], sizes = [8, 32], strides = [1, 1]} : vector<8x96xf32> to vector<8x32xf32>
    %153 = vector.extract_strided_slice %150 {offsets = [0, 64], sizes = [8, 32], strides = [1, 1]} : vector<8x96xf32> to vector<8x32xf32>
    %154 = vector.extract_strided_slice %151 {offsets = [0, 0], sizes = [8, 8], strides = [1, 1]} : vector<8x32xf32> to vector<8x8xf32>
    %155 = vector.extract_strided_slice %151 {offsets = [0, 8], sizes = [8, 8], strides = [1, 1]} : vector<8x32xf32> to vector<8x8xf32>
    %156 = vector.extract_strided_slice %151 {offsets = [0, 16], sizes = [8, 8], strides = [1, 1]} : vector<8x32xf32> to vector<8x8xf32>
    %157 = vector.extract_strided_slice %151 {offsets = [0, 24], sizes = [8, 8], strides = [1, 1]} : vector<8x32xf32> to vector<8x8xf32>
    %158 = vector.shape_cast %154 : vector<8x8xf32> to vector<1x8x8xf32>
    %159 = vector.shape_cast %155 : vector<8x8xf32> to vector<1x8x8xf32>
    %160 = vector.shape_cast %156 : vector<8x8xf32> to vector<1x8x8xf32>
    %161 = vector.shape_cast %157 : vector<8x8xf32> to vector<1x8x8xf32>
    %162 = tpu.concatenate %158, %159, %160, %161 in 0 : vector<1x8x8xf32>, vector<1x8x8xf32>, vector<1x8x8xf32>, vector<1x8x8xf32> -> vector<4x8x8xf32>
    %163 = vector.extract_strided_slice %152 {offsets = [0, 0], sizes = [8, 8], strides = [1, 1]} : vector<8x32xf32> to vector<8x8xf32>
    %164 = vector.extract_strided_slice %152 {offsets = [0, 8], sizes = [8, 8], strides = [1, 1]} : vector<8x32xf32> to vector<8x8xf32>
    %165 = vector.extract_strided_slice %152 {offsets = [0, 16], sizes = [8, 8], strides = [1, 1]} : vector<8x32xf32> to vector<8x8xf32>
    %166 = vector.extract_strided_slice %152 {offsets = [0, 24], sizes = [8, 8], strides = [1, 1]} : vector<8x32xf32> to vector<8x8xf32>
    %167 = vector.shape_cast %163 : vector<8x8xf32> to vector<1x8x8xf32>
    %168 = vector.shape_cast %164 : vector<8x8xf32> to vector<1x8x8xf32>
    %169 = vector.shape_cast %165 : vector<8x8xf32> to vector<1x8x8xf32>
    %170 = vector.shape_cast %166 : vector<8x8xf32> to vector<1x8x8xf32>
    %171 = tpu.concatenate %167, %168, %169, %170 in 0 : vector<1x8x8xf32>, vector<1x8x8xf32>, vector<1x8x8xf32>, vector<1x8x8xf32> -> vector<4x8x8xf32>
    %172 = vector.extract_strided_slice %153 {offsets = [0, 0], sizes = [8, 8], strides = [1, 1]} : vector<8x32xf32> to vector<8x8xf32>
    %173 = vector.extract_strided_slice %153 {offsets = [0, 8], sizes = [8, 8], strides = [1, 1]} : vector<8x32xf32> to vector<8x8xf32>
    %174 = vector.extract_strided_slice %153 {offsets = [0, 16], sizes = [8, 8], strides = [1, 1]} : vector<8x32xf32> to vector<8x8xf32>
    %175 = vector.extract_strided_slice %153 {offsets = [0, 24], sizes = [8, 8], strides = [1, 1]} : vector<8x32xf32> to vector<8x8xf32>
    %176 = vector.shape_cast %172 : vector<8x8xf32> to vector<1x8x8xf32>
    %177 = vector.shape_cast %173 : vector<8x8xf32> to vector<1x8x8xf32>
    %178 = vector.shape_cast %174 : vector<8x8xf32> to vector<1x8x8xf32>
    %179 = vector.shape_cast %175 : vector<8x8xf32> to vector<1x8x8xf32>
    %180 = tpu.concatenate %176, %177, %178, %179 in 0 : vector<1x8x8xf32>, vector<1x8x8xf32>, vector<1x8x8xf32>, vector<1x8x8xf32> -> vector<4x8x8xf32>
    "tpu.trace_start"() <{level = 10 : i32, message = "hqd,hkd->hqk"}> : () -> ()
    %cst_73 = arith.constant dense<0.000000e+00> : vector<4x8x8xf32>
    %181 = tpu.matmul %162, %171, %cst_73 {dimension_numbers = #tpu.dot_dimension_numbers<[2], [2], [1], [1], [0, 0, 0, 1, 1, 1], [0], [0]>} : vector<4x8x8xf32>, vector<4x8x8xf32>, vector<4x8x8xf32> -> vector<4x8x8xf32>
    "tpu.trace_stop"() : () -> ()
    %cst_74 = arith.constant 0.353553385 : f32
    %182 = vector.broadcast %cst_74 : f32 to vector<4x8x8xf32>
    %183 = arith.mulf %181, %182 : vector<4x8x8xf32>
    %184 = vector.shape_cast %3 : vector<8x8xf32> to vector<1x8x8xf32>
    %185 = vector.broadcast %184 : vector<1x8x8xf32> to vector<4x8x8xf32>
    %186 = arith.addf %183, %185 : vector<4x8x8xf32>
    %cst_75 = arith.constant dense<0xFF800000> : vector<4x8xf32>
    %187 = vector.multi_reduction <maximumf>, %186, %cst_75 [2] : vector<4x8x8xf32> to vector<4x8xf32>
    %188 = vector.shape_cast %187 : vector<4x8xf32> to vector<4x8x1xf32>
    %189 = vector.broadcast %188 : vector<4x8x1xf32> to vector<4x8x8xf32>
    %190 = arith.subf %186, %189 : vector<4x8x8xf32>
    %191 = math.exp %190 : vector<4x8x8xf32>
    %cst_76 = arith.constant dense<0.000000e+00> : vector<4x8xf32>
    %192 = vector.multi_reduction <add>, %191, %cst_76 [2] : vector<4x8x8xf32> to vector<4x8xf32>
    %193 = vector.shape_cast %192 : vector<4x8xf32> to vector<4x8x1xf32>
    %194 = vector.broadcast %193 : vector<4x8x1xf32> to vector<4x8x8xf32>
    %195 = arith.divf %191, %194 : vector<4x8x8xf32>
    "tpu.trace_start"() <{level = 10 : i32, message = "hqk,hkd->hqd"}> : () -> ()
    %cst_77 = arith.constant dense<0.000000e+00> : vector<4x8x8xf32>
    %196 = tpu.matmul %195, %180, %cst_77 {dimension_numbers = #tpu.dot_dimension_numbers<[2], [1], [1], [2], [0, 0, 0, 1, 1, 2], [0], [0]>} : vector<4x8x8xf32>, vector<4x8x8xf32>, vector<4x8x8xf32> -> vector<4x8x8xf32>
    "tpu.trace_stop"() : () -> ()
    %197 = vector.extract_strided_slice %196 {offsets = [0, 0, 0], sizes = [1, 8, 8], strides = [1, 1, 1]} : vector<4x8x8xf32> to vector<1x8x8xf32>
    %198 = vector.shape_cast %197 : vector<1x8x8xf32> to vector<8x8xf32>
    %199 = vector.extract_strided_slice %196 {offsets = [1, 0, 0], sizes = [1, 8, 8], strides = [1, 1, 1]} : vector<4x8x8xf32> to vector<1x8x8xf32>
    %200 = vector.shape_cast %199 : vector<1x8x8xf32> to vector<8x8xf32>
    %201 = vector.extract_strided_slice %196 {offsets = [2, 0, 0], sizes = [1, 8, 8], strides = [1, 1, 1]} : vector<4x8x8xf32> to vector<1x8x8xf32>
    %202 = vector.shape_cast %201 : vector<1x8x8xf32> to vector<8x8xf32>
    %203 = vector.extract_strided_slice %196 {offsets = [3, 0, 0], sizes = [1, 8, 8], strides = [1, 1, 1]} : vector<4x8x8xf32> to vector<1x8x8xf32>
    %204 = vector.shape_cast %203 : vector<1x8x8xf32> to vector<8x8xf32>
    %205 = tpu.concatenate %198, %200, %202, %204 in 1 : vector<8x8xf32>, vector<8x8xf32>, vector<8x8xf32>, vector<8x8xf32> -> vector<8x32xf32>
    %c1_78 = arith.constant 1 : index
    %c0_79 = arith.constant 0 : index
    %c0_80 = arith.constant 0 : index
    %c0_81 = arith.constant 0 : index
    %c0_82 = arith.constant 0 : index
    %206 = vector.load %arg13[%c1_78, %c0_79, %c0_80, %c0_81, %c0_82] : memref<2x1x4x8x8xf32, #tpu.memory_space<vmem>>, vector<1x1x4x8x8xf32>
    %207 = vector.shape_cast %206 : vector<1x1x4x8x8xf32> to vector<4x8x8xf32>
    %208 = vector.shape_cast %195 : vector<4x8x8xf32> to vector<1x1x4x8x8xf32>
    tpu.vector_store %arg13[%c1_78, %c0_79, %c0_80, %c0_81, %c0_82], %208 {strides = array<i32>} : memref<2x1x4x8x8xf32, #tpu.memory_space<vmem>>, vector<1x1x4x8x8xf32>,
    %cst_83 = arith.constant dense<0.000000e+00> : vector<8x32xf32>
    %209 = tpu.matmul %205, %137, %cst_83 {dimension_numbers = #tpu.dot_dimension_numbers<[1], [0], [0], [1], [0, 0, 1, 1], [], []>} : vector<8x32xf32>, vector<32x32xf32>, vector<8x32xf32> -> vector<8x32xf32>
    %210 = arith.addf %209, %133 : vector<8x32xf32>
    %cst_84 = arith.constant dense<0.000000e+00> : vector<8xf32>
    %211 = vector.multi_reduction <add>, %210, %cst_84 [1] : vector<8x32xf32> to vector<8xf32>
    %212 = vector.shape_cast %211 : vector<8xf32> to vector<8x1xf32>
    %cst_85 = arith.constant 3.200000e+01 : f32
    %213 = vector.broadcast %cst_85 : f32 to vector<8x1xf32>
    %214 = arith.divf %212, %213 : vector<8x1xf32>
    %215 = vector.broadcast %214 : vector<8x1xf32> to vector<8x32xf32>
    %216 = arith.subf %210, %215 : vector<8x32xf32>
    %217 = vector.broadcast %214 : vector<8x1xf32> to vector<8x32xf32>
    %218 = arith.subf %210, %217 : vector<8x32xf32>
    %219 = arith.mulf %216, %218 : vector<8x32xf32>
    %cst_86 = arith.constant dense<0.000000e+00> : vector<8xf32>
    %220 = vector.multi_reduction <add>, %219, %cst_86 [1] : vector<8x32xf32> to vector<8xf32>
    %221 = vector.shape_cast %220 : vector<8xf32> to vector<8x1xf32>
    %cst_87 = arith.constant 3.200000e+01 : f32
    %222 = vector.broadcast %cst_87 : f32 to vector<8x1xf32>
    %223 = arith.divf %221, %222 : vector<8x1xf32>
    %224 = vector.broadcast %214 : vector<8x1xf32> to vector<8x32xf32>
    %225 = arith.subf %210, %224 : vector<8x32xf32>
    %cst_88 = arith.constant 9.99999974E-6 : f32
    %226 = vector.broadcast %cst_88 : f32 to vector<8x1xf32>
    %227 = arith.addf %223, %226 : vector<8x1xf32>
    %228 = math.rsqrt %227 : vector<8x1xf32>
    %229 = vector.broadcast %228 : vector<8x1xf32> to vector<8x32xf32>
    %230 = arith.mulf %225, %229 : vector<8x32xf32>
    %231 = vector.broadcast %143 : vector<1x32xf32> to vector<8x32xf32>
    %232 = arith.mulf %230, %231 : vector<8x32xf32>
    %233 = vector.broadcast %145 : vector<1x32xf32> to vector<8x32xf32>
    %234 = arith.addf %232, %233 : vector<8x32xf32>
    %cst_89 = arith.constant dense<0.000000e+00> : vector<8x64xf32>
    %235 = tpu.matmul %234, %139, %cst_89 {dimension_numbers = #tpu.dot_dimension_numbers<[1], [0], [0], [1], [0, 0, 1, 1], [], []>} : vector<8x32xf32>, vector<32x64xf32>, vector<8x64xf32> -> vector<8x64xf32>
    %cst_90 = arith.constant 0.000000e+00 : f32
    %236 = vector.broadcast %cst_90 : f32 to vector<8x64xf32>
    %237 = arith.maximumf %235, %236 : vector<8x64xf32>
    %cst_91 = arith.constant dense<0.000000e+00> : vector<8x32xf32>
    %238 = tpu.matmul %237, %141, %cst_91 {dimension_numbers = #tpu.dot_dimension_numbers<[1], [0], [0], [1], [0, 0, 1, 1], [], []>} : vector<8x64xf32>, vector<64x32xf32>, vector<8x32xf32> -> vector<8x32xf32>
    %239 = arith.addf %238, %234 : vector<8x32xf32>
    %cst_92 = arith.constant dense<0.000000e+00> : vector<8xf32>
    %240 = vector.multi_reduction <add>, %239, %cst_92 [1] : vector<8x32xf32> to vector<8xf32>
    %241 = vector.shape_cast %240 : vector<8xf32> to vector<8x1xf32>
    %cst_93 = arith.constant 3.200000e+01 : f32
    %242 = vector.broadcast %cst_93 : f32 to vector<8x1xf32>
    %243 = arith.divf %241, %242 : vector<8x1xf32>
    %244 = vector.broadcast %243 : vector<8x1xf32> to vector<8x32xf32>
    %245 = arith.subf %239, %244 : vector<8x32xf32>
    %246 = vector.broadcast %243 : vector<8x1xf32> to vector<8x32xf32>
    %247 = arith.subf %239, %246 : vector<8x32xf32>
    %248 = arith.mulf %245, %247 : vector<8x32xf32>
    %cst_94 = arith.constant dense<0.000000e+00> : vector<8xf32>
    %249 = vector.multi_reduction <add>, %248, %cst_94 [1] : vector<8x32xf32> to vector<8xf32>
    %250 = vector.shape_cast %249 : vector<8xf32> to vector<8x1xf32>
    %cst_95 = arith.constant 3.200000e+01 : f32
    %251 = vector.broadcast %cst_95 : f32 to vector<8x1xf32>
    %252 = arith.divf %250, %251 : vector<8x1xf32>
    %253 = vector.broadcast %243 : vector<8x1xf32> to vector<8x32xf32>
    %254 = arith.subf %239, %253 : vector<8x32xf32>
    %cst_96 = arith.constant 9.99999974E-6 : f32
    %255 = vector.broadcast %cst_96 : f32 to vector<8x1xf32>
    %256 = arith.addf %252, %255 : vector<8x1xf32>
    %257 = math.rsqrt %256 : vector<8x1xf32>
    %258 = vector.broadcast %257 : vector<8x1xf32> to vector<8x32xf32>
    %259 = arith.mulf %254, %258 : vector<8x32xf32>
    %260 = vector.broadcast %147 : vector<1x32xf32> to vector<8x32xf32>
    %261 = arith.mulf %259, %260 : vector<8x32xf32>
    %262 = vector.broadcast %149 : vector<1x32xf32> to vector<8x32xf32>
    %263 = arith.addf %261, %262 : vector<8x32xf32>
    %c0_97 = arith.constant 0 : index
    %c0_98 = arith.constant 0 : index
    %c0_99 = arith.constant 0 : index
    %264 = vector.load %arg2[%c0_97, %c0_98, %c0_99] : memref<1x8x32xf32, #tpu.memory_space<vmem>>, vector<1x8x32xf32>
    %265 = vector.shape_cast %264 : vector<1x8x32xf32> to vector<8x32xf32>
    %c0_100 = arith.constant 0 : index
    %c0_101 = arith.constant 0 : index
    %c0_102 = arith.constant 0 : index
    %266 = vector.load %arg4[%c0_100, %c0_101, %c0_102] : memref<1x8x8xf32, #tpu.memory_space<vmem>>, vector<1x8x8xf32>
    %267 = vector.shape_cast %266 : vector<1x8x8xf32> to vector<8x8xf32>
    %c0_103 = arith.constant 0 : index
    %c0_104 = arith.constant 0 : index
    %c0_105 = arith.constant 0 : index
    %268 = vector.load %arg5[%c0_103, %c0_104, %c0_105] : memref<1x8x8xf32, #tpu.memory_space<vmem>>, vector<1x8x8xf32>
    %269 = vector.shape_cast %268 : vector<1x8x8xf32> to vector<8x8xf32>
    %c0_106 = arith.constant 0 : index
    %c0_107 = arith.constant 0 : index
    %c0_108 = arith.constant 0 : index
    %270 = vector.load %arg9[%c0_106, %c0_107, %c0_108] : memref<2x32x320xf32, #tpu.memory_space<vmem>>, vector<1x32x96xf32>
    %271 = vector.shape_cast %270 : vector<1x32x96xf32> to vector<32x96xf32>
    %c0_109 = arith.constant 0 : index
    %c0_110 = arith.constant 0 : index
    %c96_111 = arith.constant 96 : index
    %272 = vector.load %arg9[%c0_109, %c0_110, %c96_111] : memref<2x32x320xf32, #tpu.memory_space<vmem>>, vector<1x32x32xf32>
    %273 = vector.shape_cast %272 : vector<1x32x32xf32> to vector<32x32xf32>
    %c0_112 = arith.constant 0 : index
    %c0_113 = arith.constant 0 : index
    %c128_114 = arith.constant 128 : index
    %274 = vector.load %arg9[%c0_112, %c0_113, %c128_114] : memref<2x32x320xf32, #tpu.memory_space<vmem>>, vector<1x32x32xf32>
    %275 = vector.shape_cast %274 : vector<1x32x32xf32> to vector<32x32xf32>
    %c0_115 = arith.constant 0 : index
    %c0_116 = arith.constant 0 : index
    %c160 = arith.constant 160 : index
    %276 = vector.load %arg9[%c0_115, %c0_116, %c160] : memref<2x32x320xf32, #tpu.memory_space<vmem>>, vector<1x32x64xf32>
    %277 = vector.shape_cast %276 : vector<1x32x64xf32> to vector<32x64xf32>
    %c0_117 = arith.constant 0 : index
    %c0_118 = arith.constant 0 : index
    %c224 = arith.constant 224 : index
    %278 = vector.load %arg9[%c0_117, %c0_118, %c224] : memref<2x32x320xf32, #tpu.memory_space<vmem>>, vector<1x32x32xf32>
    %279 = vector.shape_cast %278 : vector<1x32x32xf32> to vector<32x32xf32>
    %c0_119 = arith.constant 0 : index
    %c0_120 = arith.constant 0 : index
    %c256 = arith.constant 256 : index
    %280 = vector.load %arg9[%c0_119, %c0_120, %c256] : memref<2x32x320xf32, #tpu.memory_space<vmem>>, vector<1x32x64xf32>
    %281 = vector.shape_cast %280 : vector<1x32x64xf32> to vector<32x64xf32>
    %c0_121 = arith.constant 0 : index
    %c0_122 = arith.constant 0 : index
    %c0_123 = arith.constant 0 : index
    %282 = vector.load %arg10[%c0_121, %c0_122, %c0_123] : memref<2x64x32xf32, #tpu.memory_space<vmem>>, vector<1x64x32xf32>
    %283 = vector.shape_cast %282 : vector<1x64x32xf32> to vector<64x32xf32>
    %c0_124 = arith.constant 0 : index
    %c0_125 = arith.constant 0 : index
    %c0_126 = arith.constant 0 : index
    %284 = vector.load %arg11[%c0_124, %c0_125, %c0_126] : memref<2x6x32xf32, #tpu.memory_space<vmem>>, vector<1x1x32xf32>
    %285 = vector.shape_cast %284 : vector<1x1x32xf32> to vector<1x32xf32>
    %c0_127 = arith.constant 0 : index
    %c1_128 = arith.constant 1 : index
    %c0_129 = arith.constant 0 : index
    %286 = vector.load %arg11[%c0_127, %c1_128, %c0_129] : memref<2x6x32xf32, #tpu.memory_space<vmem>>, vector<1x1x32xf32>
    %287 = vector.shape_cast %286 : vector<1x1x32xf32> to vector<1x32xf32>
    %c0_130 = arith.constant 0 : index
    %c2_131 = arith.constant 2 : index
    %c0_132 = arith.constant 0 : index
    %288 = vector.load %arg11[%c0_130, %c2_131, %c0_132] : memref<2x6x32xf32, #tpu.memory_space<vmem>>, vector<1x1x32xf32>
    %289 = vector.shape_cast %288 : vector<1x1x32xf32> to vector<1x32xf32>
    %c0_133 = arith.constant 0 : index
    %c3_134 = arith.constant 3 : index
    %c0_135 = arith.constant 0 : index
    %290 = vector.load %arg11[%c0_133, %c3_134, %c0_135] : memref<2x6x32xf32, #tpu.memory_space<vmem>>, vector<1x1x32xf32>
    %291 = vector.shape_cast %290 : vector<1x1x32xf32> to vector<1x32xf32>
    %c0_136 = arith.constant 0 : index
    %c4 = arith.constant 4 : index
    %c0_137 = arith.constant 0 : index
    %292 = vector.load %arg11[%c0_136, %c4, %c0_137] : memref<2x6x32xf32, #tpu.memory_space<vmem>>, vector<1x1x32xf32>
    %293 = vector.shape_cast %292 : vector<1x1x32xf32> to vector<1x32xf32>
    %c0_138 = arith.constant 0 : index
    %c5 = arith.constant 5 : index
    %c0_139 = arith.constant 0 : index
    %294 = vector.load %arg11[%c0_138, %c5, %c0_139] : memref<2x6x32xf32, #tpu.memory_space<vmem>>, vector<1x1x32xf32>
    %295 = vector.shape_cast %294 : vector<1x1x32xf32> to vector<1x32xf32>
    %cst_140 = arith.constant dense<0.000000e+00> : vector<8x96xf32>
    %296 = tpu.matmul %265, %271, %cst_140 {dimension_numbers = #tpu.dot_dimension_numbers<[1], [0], [0], [1], [0, 0, 1, 1], [], []>} : vector<8x32xf32>, vector<32x96xf32>, vector<8x96xf32> -> vector<8x96xf32>
    %297 = vector.extract_strided_slice %296 {offsets = [0, 0], sizes = [8, 32], strides = [1, 1]} : vector<8x96xf32> to vector<8x32xf32>
    %298 = vector.extract_strided_slice %296 {offsets = [0, 32], sizes = [8, 32], strides = [1, 1]} : vector<8x96xf32> to vector<8x32xf32>
    %299 = vector.extract_strided_slice %296 {offsets = [0, 64], sizes = [8, 32], strides = [1, 1]} : vector<8x96xf32> to vector<8x32xf32>
    %300 = vector.extract_strided_slice %297 {offsets = [0, 0], sizes = [8, 8], strides = [1, 1]} : vector<8x32xf32> to vector<8x8xf32>
    %301 = vector.extract_strided_slice %297 {offsets = [0, 8], sizes = [8, 8], strides = [1, 1]} : vector<8x32xf32> to vector<8x8xf32>
    %302 = vector.extract_strided_slice %297 {offsets = [0, 16], sizes = [8, 8], strides = [1, 1]} : vector<8x32xf32> to vector<8x8xf32>
    %303 = vector.extract_strided_slice %297 {offsets = [0, 24], sizes = [8, 8], strides = [1, 1]} : vector<8x32xf32> to vector<8x8xf32>
    %304 = vector.shape_cast %300 : vector<8x8xf32> to vector<1x8x8xf32>
    %305 = vector.shape_cast %301 : vector<8x8xf32> to vector<1x8x8xf32>
    %306 = vector.shape_cast %302 : vector<8x8xf32> to vector<1x8x8xf32>
    %307 = vector.shape_cast %303 : vector<8x8xf32> to vector<1x8x8xf32>
    %308 = tpu.concatenate %304, %305, %306, %307 in 0 : vector<1x8x8xf32>, vector<1x8x8xf32>, vector<1x8x8xf32>, vector<1x8x8xf32> -> vector<4x8x8xf32>
    %309 = vector.extract_strided_slice %298 {offsets = [0, 0], sizes = [8, 8], strides = [1, 1]} : vector<8x32xf32> to vector<8x8xf32>
    %310 = vector.extract_strided_slice %298 {offsets = [0, 8], sizes = [8, 8], strides = [1, 1]} : vector<8x32xf32> to vector<8x8xf32>
    %311 = vector.extract_strided_slice %298 {offsets = [0, 16], sizes = [8, 8], strides = [1, 1]} : vector<8x32xf32> to vector<8x8xf32>
    %312 = vector.extract_strided_slice %298 {offsets = [0, 24], sizes = [8, 8], strides = [1, 1]} : vector<8x32xf32> to vector<8x8xf32>
    %313 = vector.shape_cast %309 : vector<8x8xf32> to vector<1x8x8xf32>
    %314 = vector.shape_cast %310 : vector<8x8xf32> to vector<1x8x8xf32>
    %315 = vector.shape_cast %311 : vector<8x8xf32> to vector<1x8x8xf32>
    %316 = vector.shape_cast %312 : vector<8x8xf32> to vector<1x8x8xf32>
    %317 = tpu.concatenate %313, %314, %315, %316 in 0 : vector<1x8x8xf32>, vector<1x8x8xf32>, vector<1x8x8xf32>, vector<1x8x8xf32> -> vector<4x8x8xf32>
    %318 = vector.extract_strided_slice %299 {offsets = [0, 0], sizes = [8, 8], strides = [1, 1]} : vector<8x32xf32> to vector<8x8xf32>
    %319 = vector.extract_strided_slice %299 {offsets = [0, 8], sizes = [8, 8], strides = [1, 1]} : vector<8x32xf32> to vector<8x8xf32>
    %320 = vector.extract_strided_slice %299 {offsets = [0, 16], sizes = [8, 8], strides = [1, 1]} : vector<8x32xf32> to vector<8x8xf32>
    %321 = vector.extract_strided_slice %299 {offsets = [0, 24], sizes = [8, 8], strides = [1, 1]} : vector<8x32xf32> to vector<8x8xf32>
    %322 = vector.shape_cast %318 : vector<8x8xf32> to vector<1x8x8xf32>
    %323 = vector.shape_cast %319 : vector<8x8xf32> to vector<1x8x8xf32>
    %324 = vector.shape_cast %320 : vector<8x8xf32> to vector<1x8x8xf32>
    %325 = vector.shape_cast %321 : vector<8x8xf32> to vector<1x8x8xf32>
    %326 = tpu.concatenate %322, %323, %324, %325 in 0 : vector<1x8x8xf32>, vector<1x8x8xf32>, vector<1x8x8xf32>, vector<1x8x8xf32> -> vector<4x8x8xf32>
    "tpu.trace_start"() <{level = 10 : i32, message = "hqd,hkd->hqk"}> : () -> ()
    %cst_141 = arith.constant dense<0.000000e+00> : vector<4x8x8xf32>
    %327 = tpu.matmul %308, %317, %cst_141 {dimension_numbers = #tpu.dot_dimension_numbers<[2], [2], [1], [1], [0, 0, 0, 1, 1, 1], [0], [0]>} : vector<4x8x8xf32>, vector<4x8x8xf32>, vector<4x8x8xf32> -> vector<4x8x8xf32>
    "tpu.trace_stop"() : () -> ()
    %cst_142 = arith.constant 0.353553385 : f32
    %328 = vector.broadcast %cst_142 : f32 to vector<4x8x8xf32>
    %329 = arith.mulf %327, %328 : vector<4x8x8xf32>
    %330 = vector.shape_cast %267 : vector<8x8xf32> to vector<1x8x8xf32>
    %331 = vector.broadcast %330 : vector<1x8x8xf32> to vector<4x8x8xf32>
    %332 = arith.addf %329, %331 : vector<4x8x8xf32>
    %cst_143 = arith.constant dense<0xFF800000> : vector<4x8xf32>
    %333 = vector.multi_reduction <maximumf>, %332, %cst_143 [2] : vector<4x8x8xf32> to vector<4x8xf32>
    %334 = vector.shape_cast %333 : vector<4x8xf32> to vector<4x8x1xf32>
    %335 = vector.broadcast %334 : vector<4x8x1xf32> to vector<4x8x8xf32>
    %336 = arith.subf %332, %335 : vector<4x8x8xf32>
    %337 = math.exp %336 : vector<4x8x8xf32>
    %cst_144 = arith.constant dense<0.000000e+00> : vector<4x8xf32>
    %338 = vector.multi_reduction <add>, %337, %cst_144 [2] : vector<4x8x8xf32> to vector<4x8xf32>
    %339 = vector.shape_cast %338 : vector<4x8xf32> to vector<4x8x1xf32>
    %340 = vector.broadcast %339 : vector<4x8x1xf32> to vector<4x8x8xf32>
    %341 = arith.divf %337, %340 : vector<4x8x8xf32>
    "tpu.trace_start"() <{level = 10 : i32, message = "hqk,hkd->hqd"}> : () -> ()
    %cst_145 = arith.constant dense<0.000000e+00> : vector<4x8x8xf32>
    %342 = tpu.matmul %341, %326, %cst_145 {dimension_numbers = #tpu.dot_dimension_numbers<[2], [1], [1], [2], [0, 0, 0, 1, 1, 2], [0], [0]>} : vector<4x8x8xf32>, vector<4x8x8xf32>, vector<4x8x8xf32> -> vector<4x8x8xf32>
    "tpu.trace_stop"() : () -> ()
    %343 = vector.extract_strided_slice %342 {offsets = [0, 0, 0], sizes = [1, 8, 8], strides = [1, 1, 1]} : vector<4x8x8xf32> to vector<1x8x8xf32>
    %344 = vector.shape_cast %343 : vector<1x8x8xf32> to vector<8x8xf32>
    %345 = vector.extract_strided_slice %342 {offsets = [1, 0, 0], sizes = [1, 8, 8], strides = [1, 1, 1]} : vector<4x8x8xf32> to vector<1x8x8xf32>
    %346 = vector.shape_cast %345 : vector<1x8x8xf32> to vector<8x8xf32>
    %347 = vector.extract_strided_slice %342 {offsets = [2, 0, 0], sizes = [1, 8, 8], strides = [1, 1, 1]} : vector<4x8x8xf32> to vector<1x8x8xf32>
    %348 = vector.shape_cast %347 : vector<1x8x8xf32> to vector<8x8xf32>
    %349 = vector.extract_strided_slice %342 {offsets = [3, 0, 0], sizes = [1, 8, 8], strides = [1, 1, 1]} : vector<4x8x8xf32> to vector<1x8x8xf32>
    %350 = vector.shape_cast %349 : vector<1x8x8xf32> to vector<8x8xf32>
    %351 = tpu.concatenate %344, %346, %348, %350 in 1 : vector<8x8xf32>, vector<8x8xf32>, vector<8x8xf32>, vector<8x8xf32> -> vector<8x32xf32>
    %c0_146 = arith.constant 0 : index
    %c0_147 = arith.constant 0 : index
    %c0_148 = arith.constant 0 : index
    %c0_149 = arith.constant 0 : index
    %c0_150 = arith.constant 0 : index
    %352 = vector.load %arg14[%c0_146, %c0_147, %c0_148, %c0_149, %c0_150] : memref<2x1x4x8x8xf32, #tpu.memory_space<vmem>>, vector<1x1x4x8x8xf32>
    %353 = vector.shape_cast %352 : vector<1x1x4x8x8xf32> to vector<4x8x8xf32>
    %354 = vector.shape_cast %341 : vector<4x8x8xf32> to vector<1x1x4x8x8xf32>
    tpu.vector_store %arg14[%c0_146, %c0_147, %c0_148, %c0_149, %c0_150], %354 {strides = array<i32>} : memref<2x1x4x8x8xf32, #tpu.memory_space<vmem>>, vector<1x1x4x8x8xf32>,
    %cst_151 = arith.constant dense<0.000000e+00> : vector<8x32xf32>
    %355 = tpu.matmul %351, %273, %cst_151 {dimension_numbers = #tpu.dot_dimension_numbers<[1], [0], [0], [1], [0, 0, 1, 1], [], []>} : vector<8x32xf32>, vector<32x32xf32>, vector<8x32xf32> -> vector<8x32xf32>
    %356 = arith.addf %355, %265 : vector<8x32xf32>
    %cst_152 = arith.constant dense<0.000000e+00> : vector<8xf32>
    %357 = vector.multi_reduction <add>, %356, %cst_152 [1] : vector<8x32xf32> to vector<8xf32>
    %358 = vector.shape_cast %357 : vector<8xf32> to vector<8x1xf32>
    %cst_153 = arith.constant 3.200000e+01 : f32
    %359 = vector.broadcast %cst_153 : f32 to vector<8x1xf32>
    %360 = arith.divf %358, %359 : vector<8x1xf32>
    %361 = vector.broadcast %360 : vector<8x1xf32> to vector<8x32xf32>
    %362 = arith.subf %356, %361 : vector<8x32xf32>
    %363 = vector.broadcast %360 : vector<8x1xf32> to vector<8x32xf32>
    %364 = arith.subf %356, %363 : vector<8x32xf32>
    %365 = arith.mulf %362, %364 : vector<8x32xf32>
    %cst_154 = arith.constant dense<0.000000e+00> : vector<8xf32>
    %366 = vector.multi_reduction <add>, %365, %cst_154 [1] : vector<8x32xf32> to vector<8xf32>
    %367 = vector.shape_cast %366 : vector<8xf32> to vector<8x1xf32>
    %cst_155 = arith.constant 3.200000e+01 : f32
    %368 = vector.broadcast %cst_155 : f32 to vector<8x1xf32>
    %369 = arith.divf %367, %368 : vector<8x1xf32>
    %370 = vector.broadcast %360 : vector<8x1xf32> to vector<8x32xf32>
    %371 = arith.subf %356, %370 : vector<8x32xf32>
    %cst_156 = arith.constant 9.99999974E-6 : f32
    %372 = vector.broadcast %cst_156 : f32 to vector<8x1xf32>
    %373 = arith.addf %369, %372 : vector<8x1xf32>
    %374 = math.rsqrt %373 : vector<8x1xf32>
    %375 = vector.broadcast %374 : vector<8x1xf32> to vector<8x32xf32>
    %376 = arith.mulf %371, %375 : vector<8x32xf32>
    %377 = vector.broadcast %285 : vector<1x32xf32> to vector<8x32xf32>
    %378 = arith.mulf %376, %377 : vector<8x32xf32>
    %379 = vector.broadcast %287 : vector<1x32xf32> to vector<8x32xf32>
    %380 = arith.addf %378, %379 : vector<8x32xf32>
    %cst_157 = arith.constant dense<0.000000e+00> : vector<8x32xf32>
    %381 = tpu.matmul %380, %275, %cst_157 {dimension_numbers = #tpu.dot_dimension_numbers<[1], [0], [0], [1], [0, 0, 1, 1], [], []>} : vector<8x32xf32>, vector<32x32xf32>, vector<8x32xf32> -> vector<8x32xf32>
    %cst_158 = arith.constant dense<0.000000e+00> : vector<8x64xf32>
    %382 = tpu.matmul %263, %277, %cst_158 {dimension_numbers = #tpu.dot_dimension_numbers<[1], [0], [0], [1], [0, 0, 1, 1], [], []>} : vector<8x32xf32>, vector<32x64xf32>, vector<8x64xf32> -> vector<8x64xf32>
    %383 = vector.extract_strided_slice %382 {offsets = [0, 0], sizes = [8, 32], strides = [1, 1]} : vector<8x64xf32> to vector<8x32xf32>
    %384 = vector.extract_strided_slice %382 {offsets = [0, 32], sizes = [8, 32], strides = [1, 1]} : vector<8x64xf32> to vector<8x32xf32>
    %385 = vector.extract_strided_slice %381 {offsets = [0, 0], sizes = [8, 8], strides = [1, 1]} : vector<8x32xf32> to vector<8x8xf32>
    %386 = vector.extract_strided_slice %381 {offsets = [0, 8], sizes = [8, 8], strides = [1, 1]} : vector<8x32xf32> to vector<8x8xf32>
    %387 = vector.extract_strided_slice %381 {offsets = [0, 16], sizes = [8, 8], strides = [1, 1]} : vector<8x32xf32> to vector<8x8xf32>
    %388 = vector.extract_strided_slice %381 {offsets = [0, 24], sizes = [8, 8], strides = [1, 1]} : vector<8x32xf32> to vector<8x8xf32>
    %389 = vector.shape_cast %385 : vector<8x8xf32> to vector<1x8x8xf32>
    %390 = vector.shape_cast %386 : vector<8x8xf32> to vector<1x8x8xf32>
    %391 = vector.shape_cast %387 : vector<8x8xf32> to vector<1x8x8xf32>
    %392 = vector.shape_cast %388 : vector<8x8xf32> to vector<1x8x8xf32>
    %393 = tpu.concatenate %389, %390, %391, %392 in 0 : vector<1x8x8xf32>, vector<1x8x8xf32>, vector<1x8x8xf32>, vector<1x8x8xf32> -> vector<4x8x8xf32>
    %394 = vector.extract_strided_slice %383 {offsets = [0, 0], sizes = [8, 8], strides = [1, 1]} : vector<8x32xf32> to vector<8x8xf32>
    %395 = vector.extract_strided_slice %383 {offsets = [0, 8], sizes = [8, 8], strides = [1, 1]} : vector<8x32xf32> to vector<8x8xf32>
    %396 = vector.extract_strided_slice %383 {offsets = [0, 16], sizes = [8, 8], strides = [1, 1]} : vector<8x32xf32> to vector<8x8xf32>
    %397 = vector.extract_strided_slice %383 {offsets = [0, 24], sizes = [8, 8], strides = [1, 1]} : vector<8x32xf32> to vector<8x8xf32>
    %398 = vector.shape_cast %394 : vector<8x8xf32> to vector<1x8x8xf32>
    %399 = vector.shape_cast %395 : vector<8x8xf32> to vector<1x8x8xf32>
    %400 = vector.shape_cast %396 : vector<8x8xf32> to vector<1x8x8xf32>
    %401 = vector.shape_cast %397 : vector<8x8xf32> to vector<1x8x8xf32>
    %402 = tpu.concatenate %398, %399, %400, %401 in 0 : vector<1x8x8xf32>, vector<1x8x8xf32>, vector<1x8x8xf32>, vector<1x8x8xf32> -> vector<4x8x8xf32>
    %403 = vector.extract_strided_slice %384 {offsets = [0, 0], sizes = [8, 8], strides = [1, 1]} : vector<8x32xf32> to vector<8x8xf32>
    %404 = vector.extract_strided_slice %384 {offsets = [0, 8], sizes = [8, 8], strides = [1, 1]} : vector<8x32xf32> to vector<8x8xf32>
    %405 = vector.extract_strided_slice %384 {offsets = [0, 16], sizes = [8, 8], strides = [1, 1]} : vector<8x32xf32> to vector<8x8xf32>
    %406 = vector.extract_strided_slice %384 {offsets = [0, 24], sizes = [8, 8], strides = [1, 1]} : vector<8x32xf32> to vector<8x8xf32>
    %407 = vector.shape_cast %403 : vector<8x8xf32> to vector<1x8x8xf32>
    %408 = vector.shape_cast %404 : vector<8x8xf32> to vector<1x8x8xf32>
    %409 = vector.shape_cast %405 : vector<8x8xf32> to vector<1x8x8xf32>
    %410 = vector.shape_cast %406 : vector<8x8xf32> to vector<1x8x8xf32>
    %411 = tpu.concatenate %407, %408, %409, %410 in 0 : vector<1x8x8xf32>, vector<1x8x8xf32>, vector<1x8x8xf32>, vector<1x8x8xf32> -> vector<4x8x8xf32>
    "tpu.trace_start"() <{level = 10 : i32, message = "hqd,hkd->hqk"}> : () -> ()
    %cst_159 = arith.constant dense<0.000000e+00> : vector<4x8x8xf32>
    %412 = tpu.matmul %393, %402, %cst_159 {dimension_numbers = #tpu.dot_dimension_numbers<[2], [2], [1], [1], [0, 0, 0, 1, 1, 1], [0], [0]>} : vector<4x8x8xf32>, vector<4x8x8xf32>, vector<4x8x8xf32> -> vector<4x8x8xf32>
    "tpu.trace_stop"() : () -> ()
    %cst_160 = arith.constant 0.353553385 : f32
    %413 = vector.broadcast %cst_160 : f32 to vector<4x8x8xf32>
    %414 = arith.mulf %412, %413 : vector<4x8x8xf32>
    %415 = vector.shape_cast %269 : vector<8x8xf32> to vector<1x8x8xf32>
    %416 = vector.broadcast %415 : vector<1x8x8xf32> to vector<4x8x8xf32>
    %417 = arith.addf %414, %416 : vector<4x8x8xf32>
    %cst_161 = arith.constant dense<0xFF800000> : vector<4x8xf32>
    %418 = vector.multi_reduction <maximumf>, %417, %cst_161 [2] : vector<4x8x8xf32> to vector<4x8xf32>
    %419 = vector.shape_cast %418 : vector<4x8xf32> to vector<4x8x1xf32>
    %420 = vector.broadcast %419 : vector<4x8x1xf32> to vector<4x8x8xf32>
    %421 = arith.subf %417, %420 : vector<4x8x8xf32>
    %422 = math.exp %421 : vector<4x8x8xf32>
    %cst_162 = arith.constant dense<0.000000e+00> : vector<4x8xf32>
    %423 = vector.multi_reduction <add>, %422, %cst_162 [2] : vector<4x8x8xf32> to vector<4x8xf32>
    %424 = vector.shape_cast %423 : vector<4x8xf32> to vector<4x8x1xf32>
    %425 = vector.broadcast %424 : vector<4x8x1xf32> to vector<4x8x8xf32>
    %426 = arith.divf %422, %425 : vector<4x8x8xf32>
    "tpu.trace_start"() <{level = 10 : i32, message = "hqk,hkd->hqd"}> : () -> ()
    %cst_163 = arith.constant dense<0.000000e+00> : vector<4x8x8xf32>
    %427 = tpu.matmul %426, %411, %cst_163 {dimension_numbers = #tpu.dot_dimension_numbers<[2], [1], [1], [2], [0, 0, 0, 1, 1, 2], [0], [0]>} : vector<4x8x8xf32>, vector<4x8x8xf32>, vector<4x8x8xf32> -> vector<4x8x8xf32>
    "tpu.trace_stop"() : () -> ()
    %428 = vector.extract_strided_slice %427 {offsets = [0, 0, 0], sizes = [1, 8, 8], strides = [1, 1, 1]} : vector<4x8x8xf32> to vector<1x8x8xf32>
    %429 = vector.shape_cast %428 : vector<1x8x8xf32> to vector<8x8xf32>
    %430 = vector.extract_strided_slice %427 {offsets = [1, 0, 0], sizes = [1, 8, 8], strides = [1, 1, 1]} : vector<4x8x8xf32> to vector<1x8x8xf32>
    %431 = vector.shape_cast %430 : vector<1x8x8xf32> to vector<8x8xf32>
    %432 = vector.extract_strided_slice %427 {offsets = [2, 0, 0], sizes = [1, 8, 8], strides = [1, 1, 1]} : vector<4x8x8xf32> to vector<1x8x8xf32>
    %433 = vector.shape_cast %432 : vector<1x8x8xf32> to vector<8x8xf32>
    %434 = vector.extract_strided_slice %427 {offsets = [3, 0, 0], sizes = [1, 8, 8], strides = [1, 1, 1]} : vector<4x8x8xf32> to vector<1x8x8xf32>
    %435 = vector.shape_cast %434 : vector<1x8x8xf32> to vector<8x8xf32>
    %436 = tpu.concatenate %429, %431, %433, %435 in 1 : vector<8x8xf32>, vector<8x8xf32>, vector<8x8xf32>, vector<8x8xf32> -> vector<8x32xf32>
    %c0_164 = arith.constant 0 : index
    %c0_165 = arith.constant 0 : index
    %c0_166 = arith.constant 0 : index
    %c0_167 = arith.constant 0 : index
    %c0_168 = arith.constant 0 : index
    %437 = vector.load %arg15[%c0_164, %c0_165, %c0_166, %c0_167, %c0_168] : memref<2x1x4x8x8xf32, #tpu.memory_space<vmem>>, vector<1x1x4x8x8xf32>
    %438 = vector.shape_cast %437 : vector<1x1x4x8x8xf32> to vector<4x8x8xf32>
    %439 = vector.shape_cast %426 : vector<4x8x8xf32> to vector<1x1x4x8x8xf32>
    tpu.vector_store %arg15[%c0_164, %c0_165, %c0_166, %c0_167, %c0_168], %439 {strides = array<i32>} : memref<2x1x4x8x8xf32, #tpu.memory_space<vmem>>, vector<1x1x4x8x8xf32>,
    %cst_169 = arith.constant dense<0.000000e+00> : vector<8x32xf32>
    %440 = tpu.matmul %436, %279, %cst_169 {dimension_numbers = #tpu.dot_dimension_numbers<[1], [0], [0], [1], [0, 0, 1, 1], [], []>} : vector<8x32xf32>, vector<32x32xf32>, vector<8x32xf32> -> vector<8x32xf32>
    %441 = arith.addf %440, %380 : vector<8x32xf32>
    %cst_170 = arith.constant dense<0.000000e+00> : vector<8xf32>
    %442 = vector.multi_reduction <add>, %441, %cst_170 [1] : vector<8x32xf32> to vector<8xf32>
    %443 = vector.shape_cast %442 : vector<8xf32> to vector<8x1xf32>
    %cst_171 = arith.constant 3.200000e+01 : f32
    %444 = vector.broadcast %cst_171 : f32 to vector<8x1xf32>
    %445 = arith.divf %443, %444 : vector<8x1xf32>
    %446 = vector.broadcast %445 : vector<8x1xf32> to vector<8x32xf32>
    %447 = arith.subf %441, %446 : vector<8x32xf32>
    %448 = vector.broadcast %445 : vector<8x1xf32> to vector<8x32xf32>
    %449 = arith.subf %441, %448 : vector<8x32xf32>
    %450 = arith.mulf %447, %449 : vector<8x32xf32>
    %cst_172 = arith.constant dense<0.000000e+00> : vector<8xf32>
    %451 = vector.multi_reduction <add>, %450, %cst_172 [1] : vector<8x32xf32> to vector<8xf32>
    %452 = vector.shape_cast %451 : vector<8xf32> to vector<8x1xf32>
    %cst_173 = arith.constant 3.200000e+01 : f32
    %453 = vector.broadcast %cst_173 : f32 to vector<8x1xf32>
    %454 = arith.divf %452, %453 : vector<8x1xf32>
    %455 = vector.broadcast %445 : vector<8x1xf32> to vector<8x32xf32>
    %456 = arith.subf %441, %455 : vector<8x32xf32>
    %cst_174 = arith.constant 9.99999974E-6 : f32
    %457 = vector.broadcast %cst_174 : f32 to vector<8x1xf32>
    %458 = arith.addf %454, %457 : vector<8x1xf32>
    %459 = math.rsqrt %458 : vector<8x1xf32>
    %460 = vector.broadcast %459 : vector<8x1xf32> to vector<8x32xf32>
    %461 = arith.mulf %456, %460 : vector<8x32xf32>
    %462 = vector.broadcast %289 : vector<1x32xf32> to vector<8x32xf32>
    %463 = arith.mulf %461, %462 : vector<8x32xf32>
    %464 = vector.broadcast %291 : vector<1x32xf32> to vector<8x32xf32>
    %465 = arith.addf %463, %464 : vector<8x32xf32>
    %cst_175 = arith.constant dense<0.000000e+00> : vector<8x64xf32>
    %466 = tpu.matmul %465, %281, %cst_175 {dimension_numbers = #tpu.dot_dimension_numbers<[1], [0], [0], [1], [0, 0, 1, 1], [], []>} : vector<8x32xf32>, vector<32x64xf32>, vector<8x64xf32> -> vector<8x64xf32>
    %cst_176 = arith.constant 0.000000e+00 : f32
    %467 = vector.broadcast %cst_176 : f32 to vector<8x64xf32>
    %468 = arith.maximumf %466, %467 : vector<8x64xf32>
    %cst_177 = arith.constant dense<0.000000e+00> : vector<8x32xf32>
    %469 = tpu.matmul %468, %283, %cst_177 {dimension_numbers = #tpu.dot_dimension_numbers<[1], [0], [0], [1], [0, 0, 1, 1], [], []>} : vector<8x64xf32>, vector<64x32xf32>, vector<8x32xf32> -> vector<8x32xf32>
    %470 = arith.addf %469, %465 : vector<8x32xf32>
    %cst_178 = arith.constant dense<0.000000e+00> : vector<8xf32>
    %471 = vector.multi_reduction <add>, %470, %cst_178 [1] : vector<8x32xf32> to vector<8xf32>
    %472 = vector.shape_cast %471 : vector<8xf32> to vector<8x1xf32>
    %cst_179 = arith.constant 3.200000e+01 : f32
    %473 = vector.broadcast %cst_179 : f32 to vector<8x1xf32>
    %474 = arith.divf %472, %473 : vector<8x1xf32>
    %475 = vector.broadcast %474 : vector<8x1xf32> to vector<8x32xf32>
    %476 = arith.subf %470, %475 : vector<8x32xf32>
    %477 = vector.broadcast %474 : vector<8x1xf32> to vector<8x32xf32>
    %478 = arith.subf %470, %477 : vector<8x32xf32>
    %479 = arith.mulf %476, %478 : vector<8x32xf32>
    %cst_180 = arith.constant dense<0.000000e+00> : vector<8xf32>
    %480 = vector.multi_reduction <add>, %479, %cst_180 [1] : vector<8x32xf32> to vector<8xf32>
    %481 = vector.shape_cast %480 : vector<8xf32> to vector<8x1xf32>
    %cst_181 = arith.constant 3.200000e+01 : f32
    %482 = vector.broadcast %cst_181 : f32 to vector<8x1xf32>
    %483 = arith.divf %481, %482 : vector<8x1xf32>
    %484 = vector.broadcast %474 : vector<8x1xf32> to vector<8x32xf32>
    %485 = arith.subf %470, %484 : vector<8x32xf32>
    %cst_182 = arith.constant 9.99999974E-6 : f32
    %486 = vector.broadcast %cst_182 : f32 to vector<8x1xf32>
    %487 = arith.addf %483, %486 : vector<8x1xf32>
    %488 = math.rsqrt %487 : vector<8x1xf32>
    %489 = vector.broadcast %488 : vector<8x1xf32> to vector<8x32xf32>
    %490 = arith.mulf %485, %489 : vector<8x32xf32>
    %491 = vector.broadcast %293 : vector<1x32xf32> to vector<8x32xf32>
    %492 = arith.mulf %490, %491 : vector<8x32xf32>
    %493 = vector.broadcast %295 : vector<1x32xf32> to vector<8x32xf32>
    %494 = arith.addf %492, %493 : vector<8x32xf32>
    %c1_183 = arith.constant 1 : index
    %c0_184 = arith.constant 0 : index
    %c0_185 = arith.constant 0 : index
    %495 = vector.load %arg9[%c1_183, %c0_184, %c0_185] : memref<2x32x320xf32, #tpu.memory_space<vmem>>, vector<1x32x96xf32>
    %496 = vector.shape_cast %495 : vector<1x32x96xf32> to vector<32x96xf32>
    %c1_186 = arith.constant 1 : index
    %c0_187 = arith.constant 0 : index
    %c96_188 = arith.constant 96 : index
    %497 = vector.load %arg9[%c1_186, %c0_187, %c96_188] : memref<2x32x320xf32, #tpu.memory_space<vmem>>, vector<1x32x32xf32>
    %498 = vector.shape_cast %497 : vector<1x32x32xf32> to vector<32x32xf32>
    %c1_189 = arith.constant 1 : index
    %c0_190 = arith.constant 0 : index
    %c128_191 = arith.constant 128 : index
    %499 = vector.load %arg9[%c1_189, %c0_190, %c128_191] : memref<2x32x320xf32, #tpu.memory_space<vmem>>, vector<1x32x32xf32>
    %500 = vector.shape_cast %499 : vector<1x32x32xf32> to vector<32x32xf32>
    %c1_192 = arith.constant 1 : index
    %c0_193 = arith.constant 0 : index
    %c160_194 = arith.constant 160 : index
    %501 = vector.load %arg9[%c1_192, %c0_193, %c160_194] : memref<2x32x320xf32, #tpu.memory_space<vmem>>, vector<1x32x64xf32>
    %502 = vector.shape_cast %501 : vector<1x32x64xf32> to vector<32x64xf32>
    %c1_195 = arith.constant 1 : index
    %c0_196 = arith.constant 0 : index
    %c224_197 = arith.constant 224 : index
    %503 = vector.load %arg9[%c1_195, %c0_196, %c224_197] : memref<2x32x320xf32, #tpu.memory_space<vmem>>, vector<1x32x32xf32>
    %504 = vector.shape_cast %503 : vector<1x32x32xf32> to vector<32x32xf32>
    %c1_198 = arith.constant 1 : index
    %c0_199 = arith.constant 0 : index
    %c256_200 = arith.constant 256 : index
    %505 = vector.load %arg9[%c1_198, %c0_199, %c256_200] : memref<2x32x320xf32, #tpu.memory_space<vmem>>, vector<1x32x64xf32>
    %506 = vector.shape_cast %505 : vector<1x32x64xf32> to vector<32x64xf32>
    %c1_201 = arith.constant 1 : index
    %c0_202 = arith.constant 0 : index
    %c0_203 = arith.constant 0 : index
    %507 = vector.load %arg10[%c1_201, %c0_202, %c0_203] : memref<2x64x32xf32, #tpu.memory_space<vmem>>, vector<1x64x32xf32>
    %508 = vector.shape_cast %507 : vector<1x64x32xf32> to vector<64x32xf32>
    %c1_204 = arith.constant 1 : index
    %c0_205 = arith.constant 0 : index
    %c0_206 = arith.constant 0 : index
    %509 = vector.load %arg11[%c1_204, %c0_205, %c0_206] : memref<2x6x32xf32, #tpu.memory_space<vmem>>, vector<1x1x32xf32>
    %510 = vector.shape_cast %509 : vector<1x1x32xf32> to vector<1x32xf32>
    %c1_207 = arith.constant 1 : index
    %c1_208 = arith.constant 1 : index
    %c0_209 = arith.constant 0 : index
    %511 = vector.load %arg11[%c1_207, %c1_208, %c0_209] : memref<2x6x32xf32, #tpu.memory_space<vmem>>, vector<1x1x32xf32>
    %512 = vector.shape_cast %511 : vector<1x1x32xf32> to vector<1x32xf32>
    %c1_210 = arith.constant 1 : index
    %c2_211 = arith.constant 2 : index
    %c0_212 = arith.constant 0 : index
    %513 = vector.load %arg11[%c1_210, %c2_211, %c0_212] : memref<2x6x32xf32, #tpu.memory_space<vmem>>, vector<1x1x32xf32>
    %514 = vector.shape_cast %513 : vector<1x1x32xf32> to vector<1x32xf32>
    %c1_213 = arith.constant 1 : index
    %c3_214 = arith.constant 3 : index
    %c0_215 = arith.constant 0 : index
    %515 = vector.load %arg11[%c1_213, %c3_214, %c0_215] : memref<2x6x32xf32, #tpu.memory_space<vmem>>, vector<1x1x32xf32>
    %516 = vector.shape_cast %515 : vector<1x1x32xf32> to vector<1x32xf32>
    %c1_216 = arith.constant 1 : index
    %c4_217 = arith.constant 4 : index
    %c0_218 = arith.constant 0 : index
    %517 = vector.load %arg11[%c1_216, %c4_217, %c0_218] : memref<2x6x32xf32, #tpu.memory_space<vmem>>, vector<1x1x32xf32>
    %518 = vector.shape_cast %517 : vector<1x1x32xf32> to vector<1x32xf32>
    %c1_219 = arith.constant 1 : index
    %c5_220 = arith.constant 5 : index
    %c0_221 = arith.constant 0 : index
    %519 = vector.load %arg11[%c1_219, %c5_220, %c0_221] : memref<2x6x32xf32, #tpu.memory_space<vmem>>, vector<1x1x32xf32>
    %520 = vector.shape_cast %519 : vector<1x1x32xf32> to vector<1x32xf32>
    %cst_222 = arith.constant dense<0.000000e+00> : vector<8x96xf32>
    %521 = tpu.matmul %494, %496, %cst_222 {dimension_numbers = #tpu.dot_dimension_numbers<[1], [0], [0], [1], [0, 0, 1, 1], [], []>} : vector<8x32xf32>, vector<32x96xf32>, vector<8x96xf32> -> vector<8x96xf32>
    %522 = vector.extract_strided_slice %521 {offsets = [0, 0], sizes = [8, 32], strides = [1, 1]} : vector<8x96xf32> to vector<8x32xf32>
    %523 = vector.extract_strided_slice %521 {offsets = [0, 32], sizes = [8, 32], strides = [1, 1]} : vector<8x96xf32> to vector<8x32xf32>
    %524 = vector.extract_strided_slice %521 {offsets = [0, 64], sizes = [8, 32], strides = [1, 1]} : vector<8x96xf32> to vector<8x32xf32>
    %525 = vector.extract_strided_slice %522 {offsets = [0, 0], sizes = [8, 8], strides = [1, 1]} : vector<8x32xf32> to vector<8x8xf32>
    %526 = vector.extract_strided_slice %522 {offsets = [0, 8], sizes = [8, 8], strides = [1, 1]} : vector<8x32xf32> to vector<8x8xf32>
    %527 = vector.extract_strided_slice %522 {offsets = [0, 16], sizes = [8, 8], strides = [1, 1]} : vector<8x32xf32> to vector<8x8xf32>
    %528 = vector.extract_strided_slice %522 {offsets = [0, 24], sizes = [8, 8], strides = [1, 1]} : vector<8x32xf32> to vector<8x8xf32>
    %529 = vector.shape_cast %525 : vector<8x8xf32> to vector<1x8x8xf32>
    %530 = vector.shape_cast %526 : vector<8x8xf32> to vector<1x8x8xf32>
    %531 = vector.shape_cast %527 : vector<8x8xf32> to vector<1x8x8xf32>
    %532 = vector.shape_cast %528 : vector<8x8xf32> to vector<1x8x8xf32>
    %533 = tpu.concatenate %529, %530, %531, %532 in 0 : vector<1x8x8xf32>, vector<1x8x8xf32>, vector<1x8x8xf32>, vector<1x8x8xf32> -> vector<4x8x8xf32>
    %534 = vector.extract_strided_slice %523 {offsets = [0, 0], sizes = [8, 8], strides = [1, 1]} : vector<8x32xf32> to vector<8x8xf32>
    %535 = vector.extract_strided_slice %523 {offsets = [0, 8], sizes = [8, 8], strides = [1, 1]} : vector<8x32xf32> to vector<8x8xf32>
    %536 = vector.extract_strided_slice %523 {offsets = [0, 16], sizes = [8, 8], strides = [1, 1]} : vector<8x32xf32> to vector<8x8xf32>
    %537 = vector.extract_strided_slice %523 {offsets = [0, 24], sizes = [8, 8], strides = [1, 1]} : vector<8x32xf32> to vector<8x8xf32>
    %538 = vector.shape_cast %534 : vector<8x8xf32> to vector<1x8x8xf32>
    %539 = vector.shape_cast %535 : vector<8x8xf32> to vector<1x8x8xf32>
    %540 = vector.shape_cast %536 : vector<8x8xf32> to vector<1x8x8xf32>
    %541 = vector.shape_cast %537 : vector<8x8xf32> to vector<1x8x8xf32>
    %542 = tpu.concatenate %538, %539, %540, %541 in 0 : vector<1x8x8xf32>, vector<1x8x8xf32>, vector<1x8x8xf32>, vector<1x8x8xf32> -> vector<4x8x8xf32>
    %543 = vector.extract_strided_slice %524 {offsets = [0, 0], sizes = [8, 8], strides = [1, 1]} : vector<8x32xf32> to vector<8x8xf32>
    %544 = vector.extract_strided_slice %524 {offsets = [0, 8], sizes = [8, 8], strides = [1, 1]} : vector<8x32xf32> to vector<8x8xf32>
    %545 = vector.extract_strided_slice %524 {offsets = [0, 16], sizes = [8, 8], strides = [1, 1]} : vector<8x32xf32> to vector<8x8xf32>
    %546 = vector.extract_strided_slice %524 {offsets = [0, 24], sizes = [8, 8], strides = [1, 1]} : vector<8x32xf32> to vector<8x8xf32>
    %547 = vector.shape_cast %543 : vector<8x8xf32> to vector<1x8x8xf32>
    %548 = vector.shape_cast %544 : vector<8x8xf32> to vector<1x8x8xf32>
    %549 = vector.shape_cast %545 : vector<8x8xf32> to vector<1x8x8xf32>
    %550 = vector.shape_cast %546 : vector<8x8xf32> to vector<1x8x8xf32>
    %551 = tpu.concatenate %547, %548, %549, %550 in 0 : vector<1x8x8xf32>, vector<1x8x8xf32>, vector<1x8x8xf32>, vector<1x8x8xf32> -> vector<4x8x8xf32>
    "tpu.trace_start"() <{level = 10 : i32, message = "hqd,hkd->hqk"}> : () -> ()
    %cst_223 = arith.constant dense<0.000000e+00> : vector<4x8x8xf32>
    %552 = tpu.matmul %533, %542, %cst_223 {dimension_numbers = #tpu.dot_dimension_numbers<[2], [2], [1], [1], [0, 0, 0, 1, 1, 1], [0], [0]>} : vector<4x8x8xf32>, vector<4x8x8xf32>, vector<4x8x8xf32> -> vector<4x8x8xf32>
    "tpu.trace_stop"() : () -> ()
    %cst_224 = arith.constant 0.353553385 : f32
    %553 = vector.broadcast %cst_224 : f32 to vector<4x8x8xf32>
    %554 = arith.mulf %552, %553 : vector<4x8x8xf32>
    %555 = vector.shape_cast %267 : vector<8x8xf32> to vector<1x8x8xf32>
    %556 = vector.broadcast %555 : vector<1x8x8xf32> to vector<4x8x8xf32>
    %557 = arith.addf %554, %556 : vector<4x8x8xf32>
    %cst_225 = arith.constant dense<0xFF800000> : vector<4x8xf32>
    %558 = vector.multi_reduction <maximumf>, %557, %cst_225 [2] : vector<4x8x8xf32> to vector<4x8xf32>
    %559 = vector.shape_cast %558 : vector<4x8xf32> to vector<4x8x1xf32>
    %560 = vector.broadcast %559 : vector<4x8x1xf32> to vector<4x8x8xf32>
    %561 = arith.subf %557, %560 : vector<4x8x8xf32>
    %562 = math.exp %561 : vector<4x8x8xf32>
    %cst_226 = arith.constant dense<0.000000e+00> : vector<4x8xf32>
    %563 = vector.multi_reduction <add>, %562, %cst_226 [2] : vector<4x8x8xf32> to vector<4x8xf32>
    %564 = vector.shape_cast %563 : vector<4x8xf32> to vector<4x8x1xf32>
    %565 = vector.broadcast %564 : vector<4x8x1xf32> to vector<4x8x8xf32>
    %566 = arith.divf %562, %565 : vector<4x8x8xf32>
    "tpu.trace_start"() <{level = 10 : i32, message = "hqk,hkd->hqd"}> : () -> ()
    %cst_227 = arith.constant dense<0.000000e+00> : vector<4x8x8xf32>
    %567 = tpu.matmul %566, %551, %cst_227 {dimension_numbers = #tpu.dot_dimension_numbers<[2], [1], [1], [2], [0, 0, 0, 1, 1, 2], [0], [0]>} : vector<4x8x8xf32>, vector<4x8x8xf32>, vector<4x8x8xf32> -> vector<4x8x8xf32>
    "tpu.trace_stop"() : () -> ()
    %568 = vector.extract_strided_slice %567 {offsets = [0, 0, 0], sizes = [1, 8, 8], strides = [1, 1, 1]} : vector<4x8x8xf32> to vector<1x8x8xf32>
    %569 = vector.shape_cast %568 : vector<1x8x8xf32> to vector<8x8xf32>
    %570 = vector.extract_strided_slice %567 {offsets = [1, 0, 0], sizes = [1, 8, 8], strides = [1, 1, 1]} : vector<4x8x8xf32> to vector<1x8x8xf32>
    %571 = vector.shape_cast %570 : vector<1x8x8xf32> to vector<8x8xf32>
    %572 = vector.extract_strided_slice %567 {offsets = [2, 0, 0], sizes = [1, 8, 8], strides = [1, 1, 1]} : vector<4x8x8xf32> to vector<1x8x8xf32>
    %573 = vector.shape_cast %572 : vector<1x8x8xf32> to vector<8x8xf32>
    %574 = vector.extract_strided_slice %567 {offsets = [3, 0, 0], sizes = [1, 8, 8], strides = [1, 1, 1]} : vector<4x8x8xf32> to vector<1x8x8xf32>
    %575 = vector.shape_cast %574 : vector<1x8x8xf32> to vector<8x8xf32>
    %576 = tpu.concatenate %569, %571, %573, %575 in 1 : vector<8x8xf32>, vector<8x8xf32>, vector<8x8xf32>, vector<8x8xf32> -> vector<8x32xf32>
    %c1_228 = arith.constant 1 : index
    %c0_229 = arith.constant 0 : index
    %c0_230 = arith.constant 0 : index
    %c0_231 = arith.constant 0 : index
    %c0_232 = arith.constant 0 : index
    %577 = vector.load %arg14[%c1_228, %c0_229, %c0_230, %c0_231, %c0_232] : memref<2x1x4x8x8xf32, #tpu.memory_space<vmem>>, vector<1x1x4x8x8xf32>
    %578 = vector.shape_cast %577 : vector<1x1x4x8x8xf32> to vector<4x8x8xf32>
    %579 = vector.shape_cast %566 : vector<4x8x8xf32> to vector<1x1x4x8x8xf32>
    tpu.vector_store %arg14[%c1_228, %c0_229, %c0_230, %c0_231, %c0_232], %579 {strides = array<i32>} : memref<2x1x4x8x8xf32, #tpu.memory_space<vmem>>, vector<1x1x4x8x8xf32>,
    %cst_233 = arith.constant dense<0.000000e+00> : vector<8x32xf32>
    %580 = tpu.matmul %576, %498, %cst_233 {dimension_numbers = #tpu.dot_dimension_numbers<[1], [0], [0], [1], [0, 0, 1, 1], [], []>} : vector<8x32xf32>, vector<32x32xf32>, vector<8x32xf32> -> vector<8x32xf32>
    %581 = arith.addf %580, %494 : vector<8x32xf32>
    %cst_234 = arith.constant dense<0.000000e+00> : vector<8xf32>
    %582 = vector.multi_reduction <add>, %581, %cst_234 [1] : vector<8x32xf32> to vector<8xf32>
    %583 = vector.shape_cast %582 : vector<8xf32> to vector<8x1xf32>
    %cst_235 = arith.constant 3.200000e+01 : f32
    %584 = vector.broadcast %cst_235 : f32 to vector<8x1xf32>
    %585 = arith.divf %583, %584 : vector<8x1xf32>
    %586 = vector.broadcast %585 : vector<8x1xf32> to vector<8x32xf32>
    %587 = arith.subf %581, %586 : vector<8x32xf32>
    %588 = vector.broadcast %585 : vector<8x1xf32> to vector<8x32xf32>
    %589 = arith.subf %581, %588 : vector<8x32xf32>
    %590 = arith.mulf %587, %589 : vector<8x32xf32>
    %cst_236 = arith.constant dense<0.000000e+00> : vector<8xf32>
    %591 = vector.multi_reduction <add>, %590, %cst_236 [1] : vector<8x32xf32> to vector<8xf32>
    %592 = vector.shape_cast %591 : vector<8xf32> to vector<8x1xf32>
    %cst_237 = arith.constant 3.200000e+01 : f32
    %593 = vector.broadcast %cst_237 : f32 to vector<8x1xf32>
    %594 = arith.divf %592, %593 : vector<8x1xf32>
    %595 = vector.broadcast %585 : vector<8x1xf32> to vector<8x32xf32>
    %596 = arith.subf %581, %595 : vector<8x32xf32>
    %cst_238 = arith.constant 9.99999974E-6 : f32
    %597 = vector.broadcast %cst_238 : f32 to vector<8x1xf32>
    %598 = arith.addf %594, %597 : vector<8x1xf32>
    %599 = math.rsqrt %598 : vector<8x1xf32>
    %600 = vector.broadcast %599 : vector<8x1xf32> to vector<8x32xf32>
    %601 = arith.mulf %596, %600 : vector<8x32xf32>
    %602 = vector.broadcast %510 : vector<1x32xf32> to vector<8x32xf32>
    %603 = arith.mulf %601, %602 : vector<8x32xf32>
    %604 = vector.broadcast %512 : vector<1x32xf32> to vector<8x32xf32>
    %605 = arith.addf %603, %604 : vector<8x32xf32>
    %cst_239 = arith.constant dense<0.000000e+00> : vector<8x32xf32>
    %606 = tpu.matmul %605, %500, %cst_239 {dimension_numbers = #tpu.dot_dimension_numbers<[1], [0], [0], [1], [0, 0, 1, 1], [], []>} : vector<8x32xf32>, vector<32x32xf32>, vector<8x32xf32> -> vector<8x32xf32>
    %cst_240 = arith.constant dense<0.000000e+00> : vector<8x64xf32>
    %607 = tpu.matmul %263, %502, %cst_240 {dimension_numbers = #tpu.dot_dimension_numbers<[1], [0], [0], [1], [0, 0, 1, 1], [], []>} : vector<8x32xf32>, vector<32x64xf32>, vector<8x64xf32> -> vector<8x64xf32>
    %608 = vector.extract_strided_slice %607 {offsets = [0, 0], sizes = [8, 32], strides = [1, 1]} : vector<8x64xf32> to vector<8x32xf32>
    %609 = vector.extract_strided_slice %607 {offsets = [0, 32], sizes = [8, 32], strides = [1, 1]} : vector<8x64xf32> to vector<8x32xf32>
    %610 = vector.extract_strided_slice %606 {offsets = [0, 0], sizes = [8, 8], strides = [1, 1]} : vector<8x32xf32> to vector<8x8xf32>
    %611 = vector.extract_strided_slice %606 {offsets = [0, 8], sizes = [8, 8], strides = [1, 1]} : vector<8x32xf32> to vector<8x8xf32>
    %612 = vector.extract_strided_slice %606 {offsets = [0, 16], sizes = [8, 8], strides = [1, 1]} : vector<8x32xf32> to vector<8x8xf32>
    %613 = vector.extract_strided_slice %606 {offsets = [0, 24], sizes = [8, 8], strides = [1, 1]} : vector<8x32xf32> to vector<8x8xf32>
    %614 = vector.shape_cast %610 : vector<8x8xf32> to vector<1x8x8xf32>
    %615 = vector.shape_cast %611 : vector<8x8xf32> to vector<1x8x8xf32>
    %616 = vector.shape_cast %612 : vector<8x8xf32> to vector<1x8x8xf32>
    %617 = vector.shape_cast %613 : vector<8x8xf32> to vector<1x8x8xf32>
    %618 = tpu.concatenate %614, %615, %616, %617 in 0 : vector<1x8x8xf32>, vector<1x8x8xf32>, vector<1x8x8xf32>, vector<1x8x8xf32> -> vector<4x8x8xf32>
    %619 = vector.extract_strided_slice %608 {offsets = [0, 0], sizes = [8, 8], strides = [1, 1]} : vector<8x32xf32> to vector<8x8xf32>
    %620 = vector.extract_strided_slice %608 {offsets = [0, 8], sizes = [8, 8], strides = [1, 1]} : vector<8x32xf32> to vector<8x8xf32>
    %621 = vector.extract_strided_slice %608 {offsets = [0, 16], sizes = [8, 8], strides = [1, 1]} : vector<8x32xf32> to vector<8x8xf32>
    %622 = vector.extract_strided_slice %608 {offsets = [0, 24], sizes = [8, 8], strides = [1, 1]} : vector<8x32xf32> to vector<8x8xf32>
    %623 = vector.shape_cast %619 : vector<8x8xf32> to vector<1x8x8xf32>
    %624 = vector.shape_cast %620 : vector<8x8xf32> to vector<1x8x8xf32>
    %625 = vector.shape_cast %621 : vector<8x8xf32> to vector<1x8x8xf32>
    %626 = vector.shape_cast %622 : vector<8x8xf32> to vector<1x8x8xf32>
    %627 = tpu.concatenate %623, %624, %625, %626 in 0 : vector<1x8x8xf32>, vector<1x8x8xf32>, vector<1x8x8xf32>, vector<1x8x8xf32> -> vector<4x8x8xf32>
    %628 = vector.extract_strided_slice %609 {offsets = [0, 0], sizes = [8, 8], strides = [1, 1]} : vector<8x32xf32> to vector<8x8xf32>
    %629 = vector.extract_strided_slice %609 {offsets = [0, 8], sizes = [8, 8], strides = [1, 1]} : vector<8x32xf32> to vector<8x8xf32>
    %630 = vector.extract_strided_slice %609 {offsets = [0, 16], sizes = [8, 8], strides = [1, 1]} : vector<8x32xf32> to vector<8x8xf32>
    %631 = vector.extract_strided_slice %609 {offsets = [0, 24], sizes = [8, 8], strides = [1, 1]} : vector<8x32xf32> to vector<8x8xf32>
    %632 = vector.shape_cast %628 : vector<8x8xf32> to vector<1x8x8xf32>
    %633 = vector.shape_cast %629 : vector<8x8xf32> to vector<1x8x8xf32>
    %634 = vector.shape_cast %630 : vector<8x8xf32> to vector<1x8x8xf32>
    %635 = vector.shape_cast %631 : vector<8x8xf32> to vector<1x8x8xf32>
    %636 = tpu.concatenate %632, %633, %634, %635 in 0 : vector<1x8x8xf32>, vector<1x8x8xf32>, vector<1x8x8xf32>, vector<1x8x8xf32> -> vector<4x8x8xf32>
    "tpu.trace_start"() <{level = 10 : i32, message = "hqd,hkd->hqk"}> : () -> ()
    %cst_241 = arith.constant dense<0.000000e+00> : vector<4x8x8xf32>
    %637 = tpu.matmul %618, %627, %cst_241 {dimension_numbers = #tpu.dot_dimension_numbers<[2], [2], [1], [1], [0, 0, 0, 1, 1, 1], [0], [0]>} : vector<4x8x8xf32>, vector<4x8x8xf32>, vector<4x8x8xf32> -> vector<4x8x8xf32>
    "tpu.trace_stop"() : () -> ()
    %cst_242 = arith.constant 0.353553385 : f32
    %638 = vector.broadcast %cst_242 : f32 to vector<4x8x8xf32>
    %639 = arith.mulf %637, %638 : vector<4x8x8xf32>
    %640 = vector.shape_cast %269 : vector<8x8xf32> to vector<1x8x8xf32>
    %641 = vector.broadcast %640 : vector<1x8x8xf32> to vector<4x8x8xf32>
    %642 = arith.addf %639, %641 : vector<4x8x8xf32>
    %cst_243 = arith.constant dense<0xFF800000> : vector<4x8xf32>
    %643 = vector.multi_reduction <maximumf>, %642, %cst_243 [2] : vector<4x8x8xf32> to vector<4x8xf32>
    %644 = vector.shape_cast %643 : vector<4x8xf32> to vector<4x8x1xf32>
    %645 = vector.broadcast %644 : vector<4x8x1xf32> to vector<4x8x8xf32>
    %646 = arith.subf %642, %645 : vector<4x8x8xf32>
    %647 = math.exp %646 : vector<4x8x8xf32>
    %cst_244 = arith.constant dense<0.000000e+00> : vector<4x8xf32>
    %648 = vector.multi_reduction <add>, %647, %cst_244 [2] : vector<4x8x8xf32> to vector<4x8xf32>
    %649 = vector.shape_cast %648 : vector<4x8xf32> to vector<4x8x1xf32>
    %650 = vector.broadcast %649 : vector<4x8x1xf32> to vector<4x8x8xf32>
    %651 = arith.divf %647, %650 : vector<4x8x8xf32>
    "tpu.trace_start"() <{level = 10 : i32, message = "hqk,hkd->hqd"}> : () -> ()
    %cst_245 = arith.constant dense<0.000000e+00> : vector<4x8x8xf32>
    %652 = tpu.matmul %651, %636, %cst_245 {dimension_numbers = #tpu.dot_dimension_numbers<[2], [1], [1], [2], [0, 0, 0, 1, 1, 2], [0], [0]>} : vector<4x8x8xf32>, vector<4x8x8xf32>, vector<4x8x8xf32> -> vector<4x8x8xf32>
    "tpu.trace_stop"() : () -> ()
    %653 = vector.extract_strided_slice %652 {offsets = [0, 0, 0], sizes = [1, 8, 8], strides = [1, 1, 1]} : vector<4x8x8xf32> to vector<1x8x8xf32>
    %654 = vector.shape_cast %653 : vector<1x8x8xf32> to vector<8x8xf32>
    %655 = vector.extract_strided_slice %652 {offsets = [1, 0, 0], sizes = [1, 8, 8], strides = [1, 1, 1]} : vector<4x8x8xf32> to vector<1x8x8xf32>
    %656 = vector.shape_cast %655 : vector<1x8x8xf32> to vector<8x8xf32>
    %657 = vector.extract_strided_slice %652 {offsets = [2, 0, 0], sizes = [1, 8, 8], strides = [1, 1, 1]} : vector<4x8x8xf32> to vector<1x8x8xf32>
    %658 = vector.shape_cast %657 : vector<1x8x8xf32> to vector<8x8xf32>
    %659 = vector.extract_strided_slice %652 {offsets = [3, 0, 0], sizes = [1, 8, 8], strides = [1, 1, 1]} : vector<4x8x8xf32> to vector<1x8x8xf32>
    %660 = vector.shape_cast %659 : vector<1x8x8xf32> to vector<8x8xf32>
    %661 = tpu.concatenate %654, %656, %658, %660 in 1 : vector<8x8xf32>, vector<8x8xf32>, vector<8x8xf32>, vector<8x8xf32> -> vector<8x32xf32>
    %c1_246 = arith.constant 1 : index
    %c0_247 = arith.constant 0 : index
    %c0_248 = arith.constant 0 : index
    %c0_249 = arith.constant 0 : index
    %c0_250 = arith.constant 0 : index
    %662 = vector.load %arg15[%c1_246, %c0_247, %c0_248, %c0_249, %c0_250] : memref<2x1x4x8x8xf32, #tpu.memory_space<vmem>>, vector<1x1x4x8x8xf32>
    %663 = vector.shape_cast %662 : vector<1x1x4x8x8xf32> to vector<4x8x8xf32>
    %664 = vector.shape_cast %651 : vector<4x8x8xf32> to vector<1x1x4x8x8xf32>
    tpu.vector_store %arg15[%c1_246, %c0_247, %c0_248, %c0_249, %c0_250], %664 {strides = array<i32>} : memref<2x1x4x8x8xf32, #tpu.memory_space<vmem>>, vector<1x1x4x8x8xf32>,
    %cst_251 = arith.constant dense<0.000000e+00> : vector<8x32xf32>
    %665 = tpu.matmul %661, %504, %cst_251 {dimension_numbers = #tpu.dot_dimension_numbers<[1], [0], [0], [1], [0, 0, 1, 1], [], []>} : vector<8x32xf32>, vector<32x32xf32>, vector<8x32xf32> -> vector<8x32xf32>
    %666 = arith.addf %665, %605 : vector<8x32xf32>
    %cst_252 = arith.constant dense<0.000000e+00> : vector<8xf32>
    %667 = vector.multi_reduction <add>, %666, %cst_252 [1] : vector<8x32xf32> to vector<8xf32>
    %668 = vector.shape_cast %667 : vector<8xf32> to vector<8x1xf32>
    %cst_253 = arith.constant 3.200000e+01 : f32
    %669 = vector.broadcast %cst_253 : f32 to vector<8x1xf32>
    %670 = arith.divf %668, %669 : vector<8x1xf32>
    %671 = vector.broadcast %670 : vector<8x1xf32> to vector<8x32xf32>
    %672 = arith.subf %666, %671 : vector<8x32xf32>
    %673 = vector.broadcast %670 : vector<8x1xf32> to vector<8x32xf32>
    %674 = arith.subf %666, %673 : vector<8x32xf32>
    %675 = arith.mulf %672, %674 : vector<8x32xf32>
    %cst_254 = arith.constant dense<0.000000e+00> : vector<8xf32>
    %676 = vector.multi_reduction <add>, %675, %cst_254 [1] : vector<8x32xf32> to vector<8xf32>
    %677 = vector.shape_cast %676 : vector<8xf32> to vector<8x1xf32>
    %cst_255 = arith.constant 3.200000e+01 : f32
    %678 = vector.broadcast %cst_255 : f32 to vector<8x1xf32>
    %679 = arith.divf %677, %678 : vector<8x1xf32>
    %680 = vector.broadcast %670 : vector<8x1xf32> to vector<8x32xf32>
    %681 = arith.subf %666, %680 : vector<8x32xf32>
    %cst_256 = arith.constant 9.99999974E-6 : f32
    %682 = vector.broadcast %cst_256 : f32 to vector<8x1xf32>
    %683 = arith.addf %679, %682 : vector<8x1xf32>
    %684 = math.rsqrt %683 : vector<8x1xf32>
    %685 = vector.broadcast %684 : vector<8x1xf32> to vector<8x32xf32>
    %686 = arith.mulf %681, %685 : vector<8x32xf32>
    %687 = vector.broadcast %514 : vector<1x32xf32> to vector<8x32xf32>
    %688 = arith.mulf %686, %687 : vector<8x32xf32>
    %689 = vector.broadcast %516 : vector<1x32xf32> to vector<8x32xf32>
    %690 = arith.addf %688, %689 : vector<8x32xf32>
    %cst_257 = arith.constant dense<0.000000e+00> : vector<8x64xf32>
    %691 = tpu.matmul %690, %506, %cst_257 {dimension_numbers = #tpu.dot_dimension_numbers<[1], [0], [0], [1], [0, 0, 1, 1], [], []>} : vector<8x32xf32>, vector<32x64xf32>, vector<8x64xf32> -> vector<8x64xf32>
    %cst_258 = arith.constant 0.000000e+00 : f32
    %692 = vector.broadcast %cst_258 : f32 to vector<8x64xf32>
    %693 = arith.maximumf %691, %692 : vector<8x64xf32>
    %cst_259 = arith.constant dense<0.000000e+00> : vector<8x32xf32>
    %694 = tpu.matmul %693, %508, %cst_259 {dimension_numbers = #tpu.dot_dimension_numbers<[1], [0], [0], [1], [0, 0, 1, 1], [], []>} : vector<8x64xf32>, vector<64x32xf32>, vector<8x32xf32> -> vector<8x32xf32>
    %695 = arith.addf %694, %690 : vector<8x32xf32>
    %cst_260 = arith.constant dense<0.000000e+00> : vector<8xf32>
    %696 = vector.multi_reduction <add>, %695, %cst_260 [1] : vector<8x32xf32> to vector<8xf32>
    %697 = vector.shape_cast %696 : vector<8xf32> to vector<8x1xf32>
    %cst_261 = arith.constant 3.200000e+01 : f32
    %698 = vector.broadcast %cst_261 : f32 to vector<8x1xf32>
    %699 = arith.divf %697, %698 : vector<8x1xf32>
    %700 = vector.broadcast %699 : vector<8x1xf32> to vector<8x32xf32>
    %701 = arith.subf %695, %700 : vector<8x32xf32>
    %702 = vector.broadcast %699 : vector<8x1xf32> to vector<8x32xf32>
    %703 = arith.subf %695, %702 : vector<8x32xf32>
    %704 = arith.mulf %701, %703 : vector<8x32xf32>
    %cst_262 = arith.constant dense<0.000000e+00> : vector<8xf32>
    %705 = vector.multi_reduction <add>, %704, %cst_262 [1] : vector<8x32xf32> to vector<8xf32>
    %706 = vector.shape_cast %705 : vector<8xf32> to vector<8x1xf32>
    %cst_263 = arith.constant 3.200000e+01 : f32
    %707 = vector.broadcast %cst_263 : f32 to vector<8x1xf32>
    %708 = arith.divf %706, %707 : vector<8x1xf32>
    %709 = vector.broadcast %699 : vector<8x1xf32> to vector<8x32xf32>
    %710 = arith.subf %695, %709 : vector<8x32xf32>
    %cst_264 = arith.constant 9.99999974E-6 : f32
    %711 = vector.broadcast %cst_264 : f32 to vector<8x1xf32>
    %712 = arith.addf %708, %711 : vector<8x1xf32>
    %713 = math.rsqrt %712 : vector<8x1xf32>
    %714 = vector.broadcast %713 : vector<8x1xf32> to vector<8x32xf32>
    %715 = arith.mulf %710, %714 : vector<8x32xf32>
    %716 = vector.broadcast %518 : vector<1x32xf32> to vector<8x32xf32>
    %717 = arith.mulf %715, %716 : vector<8x32xf32>
    %718 = vector.broadcast %520 : vector<1x32xf32> to vector<8x32xf32>
    %719 = arith.addf %717, %718 : vector<8x32xf32>
    %c0_265 = arith.constant 0 : index
    %c0_266 = arith.constant 0 : index
    %720 = vector.load %arg12[%c0_265, %c0_266] : memref<32x128xf32, #tpu.memory_space<vmem>>, vector<32x128xf32>
    %cst_267 = arith.constant dense<0.000000e+00> : vector<8x128xf32>
    %721 = tpu.matmul %719, %720, %cst_267 {dimension_numbers = #tpu.dot_dimension_numbers<[1], [0], [0], [1], [0, 0, 1, 1], [], []>} : vector<8x32xf32>, vector<32x128xf32>, vector<8x128xf32> -> vector<8x128xf32>
    %c0_268 = arith.constant 0 : index
    %c0_269 = arith.constant 0 : index
    %c0_270 = arith.constant 0 : index
    %722 = vector.load %arg16[%c0_268, %c0_269, %c0_270] : memref<1x8x128xf32, #tpu.memory_space<vmem>>, vector<1x8x128xf32>
    %723 = vector.shape_cast %722 : vector<1x8x128xf32> to vector<8x128xf32>
    %724 = vector.shape_cast %721 : vector<8x128xf32> to vector<1x8x128xf32>
    tpu.vector_store %arg16[%c0_268, %c0_269, %c0_270], %724 {strides = array<i32>} : memref<1x8x128xf32, #tpu.memory_space<vmem>>, vector<1x8x128xf32>,
    return
  }
  func.func @transform_0(%arg0: i32) -> (i32, i32, i32) {
    %c0_i32 = arith.constant 0 : i32
    %c0_i32_0 = arith.constant 0 : i32
    %c0_i32_1 = arith.constant 0 : i32
    return %arg0, %c0_i32, %c0_i32_0 : i32, i32, i32
  }
  func.func @transform_1(%arg0: i32) -> (i32, i32, i32) {
    %c0_i32 = arith.constant 0 : i32
    %c0_i32_0 = arith.constant 0 : i32
    %c0_i32_1 = arith.constant 0 : i32
    return %arg0, %c0_i32, %c0_i32_0 : i32, i32, i32
  }
  func.func @transform_2(%arg0: i32) -> (i32, i32, i32) {
    %c0_i32 = arith.constant 0 : i32
    %c0_i32_0 = arith.constant 0 : i32
    %c0_i32_1 = arith.constant 0 : i32
    return %arg0, %c0_i32, %c0_i32_0 : i32, i32, i32
  }
  func.func @transform_3(%arg0: i32) -> (i32, i32, i32) {
    %c0_i32 = arith.constant 0 : i32
    %c0_i32_0 = arith.constant 0 : i32
    %c0_i32_1 = arith.constant 0 : i32
    return %arg0, %c0_i32, %c0_i32_0 : i32, i32, i32
  }
  func.func @transform_4(%arg0: i32) -> (i32, i32, i32) {
    %c0_i32 = arith.constant 0 : i32
    %c0_i32_0 = arith.constant 0 : i32
    %c0_i32_1 = arith.constant 0 : i32
    return %arg0, %c0_i32, %c0_i32_0 : i32, i32, i32
  }
  func.func @transform_5(%arg0: i32) -> (i32, i32, i32) {
    %c0_i32 = arith.constant 0 : i32
    %c0_i32_0 = arith.constant 0 : i32
    %c0_i32_1 = arith.constant 0 : i32
    %c0_i32_2 = arith.constant 0 : i32
    return %c0_i32, %c0_i32_0, %c0_i32_1 : i32, i32, i32
  }
  func.func @transform_6(%arg0: i32) -> (i32, i32, i32) {
    %c0_i32 = arith.constant 0 : i32
    %c0_i32_0 = arith.constant 0 : i32
    %c0_i32_1 = arith.constant 0 : i32
    %c0_i32_2 = arith.constant 0 : i32
    return %c0_i32, %c0_i32_0, %c0_i32_1 : i32, i32, i32
  }
  func.func @transform_7(%arg0: i32) -> (i32, i32, i32) {
    %c0_i32 = arith.constant 0 : i32
    %c0_i32_0 = arith.constant 0 : i32
    %c0_i32_1 = arith.constant 0 : i32
    %c0_i32_2 = arith.constant 0 : i32
    return %c0_i32, %c0_i32_0, %c0_i32_1 : i32, i32, i32
  }
  func.func @transform_8(%arg0: i32) -> (i32, i32, i32) {
    %c0_i32 = arith.constant 0 : i32
    %c0_i32_0 = arith.constant 0 : i32
    %c0_i32_1 = arith.constant 0 : i32
    %c0_i32_2 = arith.constant 0 : i32
    return %c0_i32, %c0_i32_0, %c0_i32_1 : i32, i32, i32
  }
  func.func @transform_9(%arg0: i32) -> (i32, i32, i32) {
    %c0_i32 = arith.constant 0 : i32
    %c0_i32_0 = arith.constant 0 : i32
    %c0_i32_1 = arith.constant 0 : i32
    %c0_i32_2 = arith.constant 0 : i32
    return %c0_i32, %c0_i32_0, %c0_i32_1 : i32, i32, i32
  }
  func.func @transform_10(%arg0: i32) -> (i32, i32, i32) {
    %c0_i32 = arith.constant 0 : i32
    %c0_i32_0 = arith.constant 0 : i32
    %c0_i32_1 = arith.constant 0 : i32
    %c0_i32_2 = arith.constant 0 : i32
    return %c0_i32, %c0_i32_0, %c0_i32_1 : i32, i32, i32
  }
  func.func @transform_11(%arg0: i32) -> (i32, i32) {
    %c0_i32 = arith.constant 0 : i32
    %c0_i32_0 = arith.constant 0 : i32
    %c0_i32_1 = arith.constant 0 : i32
    return %c0_i32, %c0_i32_0 : i32, i32
  }
  func.func @transform_12(%arg0: i32) -> (i32, i32, i32, i32, i32) {
    %c0_i32 = arith.constant 0 : i32
    %c0_i32_0 = arith.constant 0 : i32
    %c0_i32_1 = arith.constant 0 : i32
    %c0_i32_2 = arith.constant 0 : i32
    %c0_i32_3 = arith.constant 0 : i32
    return %c0_i32, %arg0, %c0_i32_0, %c0_i32_1, %c0_i32_2 : i32, i32, i32, i32, i32
  }
  func.func @transform_13(%arg0: i32) -> (i32, i32, i32, i32, i32) {
    %c0_i32 = arith.constant 0 : i32
    %c0_i32_0 = arith.constant 0 : i32
    %c0_i32_1 = arith.constant 0 : i32
    %c0_i32_2 = arith.constant 0 : i32
    %c0_i32_3 = arith.constant 0 : i32
    return %c0_i32, %arg0, %c0_i32_0, %c0_i32_1, %c0_i32_2 : i32, i32, i32, i32, i32
  }
  func.func @transform_14(%arg0: i32) -> (i32, i32, i32, i32, i32) {
    %c0_i32 = arith.constant 0 : i32
    %c0_i32_0 = arith.constant 0 : i32
    %c0_i32_1 = arith.constant 0 : i32
    %c0_i32_2 = arith.constant 0 : i32
    %c0_i32_3 = arith.constant 0 : i32
    return %c0_i32, %arg0, %c0_i32_0, %c0_i32_1, %c0_i32_2 : i32, i32, i32, i32, i32
  }
  func.func @transform_15(%arg0: i32) -> (i32, i32, i32) {
    %c0_i32 = arith.constant 0 : i32
    %c0_i32_0 = arith.constant 0 : i32
    %c0_i32_1 = arith.constant 0 : i32
    return %arg0, %c0_i32, %c0_i32_0 : i32, i32, i32
  }
}

</mosaic_0001>

<llo_original>
// kernel: transformer_forward.1
$region0: #{transformer_forward.1}
  #allocation0 [shape = 'u32[]', space=smem, size = 0x4, offset = 0x4, fixed_abs, tag = 'smem constant byte address 0x4 - core index']
  #allocation1 [shape = 'u32[72,128]{1,0:T(1,128)}', space=vmem, size = 0x9000, scoped, tag = 'internal scratch']
  %s0 = inlined_call_operand.vmem [shape: f32[2,8,32], index: 0, kind: input, shape index: {}]
  %s1 = inlined_call_operand.vmem [shape: f32[2,8,32], index: 1, kind: input, shape index: {}]
  %s2 = inlined_call_operand.vmem [shape: f32[2,8,8], index: 2, kind: input, shape index: {}, may-alias: {2,4}]
  %s3 = inlined_call_operand.vmem [shape: f32[2,8,8], index: 3, kind: input, shape index: {}]
  %s4 = inlined_call_operand.vmem [shape: f32[2,8,8], index: 4, kind: input, shape index: {}, may-alias: {2,4}]
  %s5 = inlined_call_operand.vmem [shape: f32[2,32,192], index: 5, kind: input, shape index: {}]
  %s6 = inlined_call_operand.vmem [shape: f32[2,64,32], index: 6, kind: input, shape index: {}]
  %s7 = inlined_call_operand.vmem [shape: f32[2,4,32], index: 7, kind: input, shape index: {}]
  %s8 = inlined_call_operand.vmem [shape: f32[2,32,320], index: 8, kind: input, shape index: {}]
  %s9 = inlined_call_operand.vmem [shape: f32[2,64,32], index: 9, kind: input, shape index: {}]
  %s10 = inlined_call_operand.vmem [shape: f32[2,6,32], index: 10, kind: input, shape index: {}]
  %s11 = inlined_call_operand.vmem [shape: f32[32,128], index: 11, kind: input, shape index: {}]
  %s12 = inlined_call_operand.vmem [shape: f32[2,2,4,8,8], index: 12, kind: output, shape index: {0}]
  %s13 = inlined_call_operand.vmem [shape: f32[2,2,4,8,8], index: 13, kind: output, shape index: {1}]
  %s14 = inlined_call_operand.vmem [shape: f32[2,2,4,8,8], index: 14, kind: output, shape index: {2}]
  %s15 = inlined_call_operand.hbm [shape: f32[2,8,128], index: 15, kind: output, shape index: {3}]
  %16 = xla_tuple %s12, %s13, %s14, %s15
  %s17 = sld [smem:[#allocation0]]
  $region207: #{transformer_forward.1} parent=0
    _
  %s19 = ssub.s32 1, %s17
  %s20 = scalar_select 0, %s19, %s17
  $region1: #{transformer_forward.1} parent=0
    #allocation2 [shape = 'u8[65536]{0}', space=vmem, size = 0x10000, scoped, tag = 'output window, operand 0']
    #allocation3 [shape = 'u8[65536]{0}', space=vmem, size = 0x10000, scoped, tag = 'output window, operand 1']
    #allocation4 [shape = 'u8[65536]{0}', space=vmem, size = 0x10000, scoped, tag = 'output window, operand 2']
    #allocation5 [shape = 'u8[8192]{0}', space=vmem, size = 0x2000, scoped, tag = 'output window, operand 3']
    #allocation6 [shape = 's32[2]{0}', space=sflag, size = 0x8, scoped, tag = 'scoped memory for transformer_forward.1']
    %21 = vsyncpa [#allocation6], 0
    %s22 = scalar_lea.sflag [#allocation6], 1
    %23 = vsyncpa %s22, 0
    loop: start=0, step=1, limit=4
    $region2: #{transformer_forward.1} parent=1 // loop_pre_header
      _
    $region3: #{transformer_forward.1} parent=1 // loop_header
      %s25 = sphi 0, %s29
      %p26 = scmp.ge.s32.totalorder %s25, 4
      %s35 = sphi 0, %s37
      %s38 = sphi 0, %s35
      %s39 = sphi 0, %s38
      %s55 = sphi 0, %s39
      %s61 = sphi 0, %s63
      %s64 = sphi 0, %s61
      %s65 = sphi 0, %s64
      %s81 = sphi 0, %s65
      %s87 = sphi 0, %s89
      %s90 = sphi 0, %s87
      %s91 = sphi 0, %s90
      %s107 = sphi 0, %s91
      %s113 = sphi 0, %s115
      %s116 = sphi 0, %s113
      %s117 = sphi 0, %s116
      %s133 = sphi 0, %s117
      %s139 = sphi 0, %s141
      %s142 = sphi 0, %s139
      %s143 = sphi 0, %s142
      %s159 = sphi 0, %s143
      %s163 = sphi 0, %s163
      %s165 = sphi 0, %s163
      %s166 = sphi 0, %s165
      %s180 = sphi 0, %s166
      %s184 = sphi 0, %s184
      %s186 = sphi 0, %s184
      %s187 = sphi 0, %s186
      %s201 = sphi 0, %s187
      %s205 = sphi 0, %s205
      %s207 = sphi 0, %s205
      %s208 = sphi 0, %s207
      %s222 = sphi 0, %s208
      %s226 = sphi 0, %s226
      %s228 = sphi 0, %s226
      %s229 = sphi 0, %s228
      %s243 = sphi 0, %s229
      %s247 = sphi 0, %s247
      %s249 = sphi 0, %s247
      %s250 = sphi 0, %s249
      %s264 = sphi 0, %s250
      %s268 = sphi 0, %s268
      %s270 = sphi 0, %s268
      %s271 = sphi 0, %s270
      %s285 = sphi 0, %s271
      %s289 = sphi 0, %s289
      %s291 = sphi 0, %s289
      %s292 = sphi 0, %s291
      %s306 = sphi 0, %s292
      %s312 = sphi 0, %s314
      %s315 = sphi 0, %s312
      %s316 = sphi 0, %s315
      %s332 = sphi 0, %s316
      %s338 = sphi 0, %s340
      %s341 = sphi 0, %s338
      %s342 = sphi 0, %s341
      %s358 = sphi 0, %s342
      %s364 = sphi 0, %s366
      %s367 = sphi 0, %s364
      %s368 = sphi 0, %s367
      %s384 = sphi 0, %s368
      %s390 = sphi 0, %s392
      %s393 = sphi 0, %s390
      %s394 = sphi 0, %s393
      %s410 = sphi 0, %s394
    $region4: #{transformer_forward.1} parent=1 // loop_header_branch
      %28 = sbr.rel (%p26) target = $region8
    $region5: #{transformer_forward.1} parent=1 // loop_body
      %s30 = ssub.s32 %s25, 1
      %s31 = ssub.s32 %s25, 2
      %s32 = sadd.s32 %s25, 1
      %s33 = ssub.s32 %s25, %s32
      %p34 = scmp.eq.s32.totalorder %s33, 0
      %s36 = sadd.s32 %s35, 1
      %s37 = scalar_select %p34, %s35, %s36
      %p40 = pneg %p34
      %p41 = scmp.eq.s32.totalorder %s25, 1
      %p42 = por %p40, %p41
      %p43 = scmp.ne.s32.totalorder %s35, %s38
      %p44 = scmp.eq.s32.totalorder %s25, 0
      %p45 = por %p43, %p44
      %p46 = scmp.ne.s32.totalorder %s35, %s38
      %p47 = scmp.eq.s32.totalorder %s30, 1
      %p48 = por %p46, %p47
      %p49 = scmp.ne.s32.totalorder %s38, %s39
      %p50 = scmp.eq.s32.totalorder %s30, 0
      %p51 = por %p49, %p50
      %p52 = scmp.ne.s32.totalorder %s38, %s39
      %p53 = scmp.eq.s32.totalorder %s31, 1
      %p54 = por %p52, %p53
      %p56 = scmp.ne.s32.totalorder %s39, %s55
      %p57 = scmp.eq.s32.totalorder %s31, 0
      %p58 = por %p56, %p57
      %s59 = ssub.s32 %s25, %s32
      %p60 = scmp.eq.s32.totalorder %s59, 0
      %s62 = sadd.s32 %s61, 1
      %s63 = scalar_select %p60, %s61, %s62
      %p66 = pneg %p60
      %p67 = scmp.eq.s32.totalorder %s25, 1
      %p68 = por %p66, %p67
      %p69 = scmp.ne.s32.totalorder %s61, %s64
      %p70 = scmp.eq.s32.totalorder %s25, 0
      %p71 = por %p69, %p70
      %p72 = scmp.ne.s32.totalorder %s61, %s64
      %p73 = scmp.eq.s32.totalorder %s30, 1
      %p74 = por %p72, %p73
      %p75 = scmp.ne.s32.totalorder %s64, %s65
      %p76 = scmp.eq.s32.totalorder %s30, 0
      %p77 = por %p75, %p76
      %p78 = scmp.ne.s32.totalorder %s64, %s65
      %p79 = scmp.eq.s32.totalorder %s31, 1
      %p80 = por %p78, %p79
      %p82 = scmp.ne.s32.totalorder %s65, %s81
      %p83 = scmp.eq.s32.totalorder %s31, 0
      %p84 = por %p82, %p83
      %s85 = ssub.s32 %s25, %s32
      %p86 = scmp.eq.s32.totalorder %s85, 0
      %s88 = sadd.s32 %s87, 1
      %s89 = scalar_select %p86, %s87, %s88
      %p92 = pneg %p86
      %p93 = scmp.eq.s32.totalorder %s25, 1
      %p94 = por %p92, %p93
      %p95 = scmp.ne.s32.totalorder %s87, %s90
      %p96 = scmp.eq.s32.totalorder %s25, 0
      %p97 = por %p95, %p96
      %p98 = scmp.ne.s32.totalorder %s87, %s90
      %p99 = scmp.eq.s32.totalorder %s30, 1
      %p100 = por %p98, %p99
      %p101 = scmp.ne.s32.totalorder %s90, %s91
      %p102 = scmp.eq.s32.totalorder %s30, 0
      %p103 = por %p101, %p102
      %p104 = scmp.ne.s32.totalorder %s90, %s91
      %p105 = scmp.eq.s32.totalorder %s31, 1
      %p106 = por %p104, %p105
      %p108 = scmp.ne.s32.totalorder %s91, %s107
      %p109 = scmp.eq.s32.totalorder %s31, 0
      %p110 = por %p108, %p109
      %s111 = ssub.s32 %s25, %s32
      %p112 = scmp.eq.s32.totalorder %s111, 0
      %s114 = sadd.s32 %s113, 1
      %s115 = scalar_select %p112, %s113, %s114
      %p118 = pneg %p112
      %p119 = scmp.eq.s32.totalorder %s25, 1
      %p120 = por %p118, %p119
      %p121 = scmp.ne.s32.totalorder %s113, %s116
      %p122 = scmp.eq.s32.totalorder %s25, 0
      %p123 = por %p121, %p122
      %p124 = scmp.ne.s32.totalorder %s113, %s116
      %p125 = scmp.eq.s32.totalorder %s30, 1
      %p126 = por %p124, %p125
      %p127 = scmp.ne.s32.totalorder %s116, %s117
      %p128 = scmp.eq.s32.totalorder %s30, 0
      %p129 = por %p127, %p128
      %p130 = scmp.ne.s32.totalorder %s116, %s117
      %p131 = scmp.eq.s32.totalorder %s31, 1
      %p132 = por %p130, %p131
      %p134 = scmp.ne.s32.totalorder %s117, %s133
      %p135 = scmp.eq.s32.totalorder %s31, 0
      %p136 = por %p134, %p135
      %s137 = ssub.s32 %s25, %s32
      %p138 = scmp.eq.s32.totalorder %s137, 0
      %s140 = sadd.s32 %s139, 1
      %s141 = scalar_select %p138, %s139, %s140
      %p144 = pneg %p138
      %p145 = scmp.eq.s32.totalorder %s25, 1
      %p146 = por %p144, %p145
      %p147 = scmp.ne.s32.totalorder %s139, %s142
      %p148 = scmp.eq.s32.totalorder %s25, 0
      %p149 = por %p147, %p148
      %p150 = scmp.ne.s32.totalorder %s139, %s142
      %p151 = scmp.eq.s32.totalorder %s30, 1
      %p152 = por %p150, %p151
      %p153 = scmp.ne.s32.totalorder %s142, %s143
      %p154 = scmp.eq.s32.totalorder %s30, 0
      %p155 = por %p153, %p154
      %p156 = scmp.ne.s32.totalorder %s142, %s143
      %p157 = scmp.eq.s32.totalorder %s31, 1
      %p158 = por %p156, %p157
      %p160 = scmp.ne.s32.totalorder %s143, %s159
      %p161 = scmp.eq.s32.totalorder %s31, 0
      %p162 = por %p160, %p161
      %s164 = sadd.s32 %s163, 1
      %p167 = scmp.eq.s32.totalorder %s25, 1
      %p168 = scmp.ne.s32.totalorder %s163, %s165
      %p169 = scmp.eq.s32.totalorder %s25, 0
      %p170 = por %p168, %p169
      %p171 = scmp.ne.s32.totalorder %s163, %s165
      %p172 = scmp.eq.s32.totalorder %s30, 1
      %p173 = por %p171, %p172
      %p174 = scmp.ne.s32.totalorder %s165, %s166
      %p175 = scmp.eq.s32.totalorder %s30, 0
      %p176 = por %p174, %p175
      %p177 = scmp.ne.s32.totalorder %s165, %s166
      %p178 = scmp.eq.s32.totalorder %s31, 1
      %p179 = por %p177, %p178
      %p181 = scmp.ne.s32.totalorder %s166, %s180
      %p182 = scmp.eq.s32.totalorder %s31, 0
      %p183 = por %p181, %p182
      %s185 = sadd.s32 %s184, 1
      %p188 = scmp.eq.s32.totalorder %s25, 1
      %p189 = scmp.ne.s32.totalorder %s184, %s186
      %p190 = scmp.eq.s32.totalorder %s25, 0
      %p191 = por %p189, %p190
      %p192 = scmp.ne.s32.totalorder %s184, %s186
      %p193 = scmp.eq.s32.totalorder %s30, 1
      %p194 = por %p192, %p193
      %p195 = scmp.ne.s32.totalorder %s186, %s187
      %p196 = scmp.eq.s32.totalorder %s30, 0
      %p197 = por %p195, %p196
      %p198 = scmp.ne.s32.totalorder %s186, %s187
      %p199 = scmp.eq.s32.totalorder %s31, 1
      %p200 = por %p198, %p199
      %p202 = scmp.ne.s32.totalorder %s187, %s201
      %p203 = scmp.eq.s32.totalorder %s31, 0
      %p204 = por %p202, %p203
      %s206 = sadd.s32 %s205, 1
      %p209 = scmp.eq.s32.totalorder %s25, 1
      %p210 = scmp.ne.s32.totalorder %s205, %s207
      %p211 = scmp.eq.s32.totalorder %s25, 0
      %p212 = por %p210, %p211
      %p213 = scmp.ne.s32.totalorder %s205, %s207
      %p214 = scmp.eq.s32.totalorder %s30, 1
      %p215 = por %p213, %p214
      %p216 = scmp.ne.s32.totalorder %s207, %s208
      %p217 = scmp.eq.s32.totalorder %s30, 0
      %p218 = por %p216, %p217
      %p219 = scmp.ne.s32.totalorder %s207, %s208
      %p220 = scmp.eq.s32.totalorder %s31, 1
      %p221 = por %p219, %p220
      %p223 = scmp.ne.s32.totalorder %s208, %s222
      %p224 = scmp.eq.s32.totalorder %s31, 0
      %p225 = por %p223, %p224
      %s227 = sadd.s32 %s226, 1
      %p230 = scmp.eq.s32.totalorder %s25, 1
      %p231 = scmp.ne.s32.totalorder %s226, %s228
      %p232 = scmp.eq.s32.totalorder %s25, 0
      %p233 = por %p231, %p232
      %p234 = scmp.ne.s32.totalorder %s226, %s228
      %p235 = scmp.eq.s32.totalorder %s30, 1
      %p236 = por %p234, %p235
      %p237 = scmp.ne.s32.totalorder %s228, %s229
      %p238 = scmp.eq.s32.totalorder %s30, 0
      %p239 = por %p237, %p238
      %p240 = scmp.ne.s32.totalorder %s228, %s229
      %p241 = scmp.eq.s32.totalorder %s31, 1
      %p242 = por %p240, %p241
      %p244 = scmp.ne.s32.totalorder %s229, %s243
      %p245 = scmp.eq.s32.totalorder %s31, 0
      %p246 = por %p244, %p245
      %s248 = sadd.s32 %s247, 1
      %p251 = scmp.eq.s32.totalorder %s25, 1
      %p252 = scmp.ne.s32.totalorder %s247, %s249
      %p253 = scmp.eq.s32.totalorder %s25, 0
      %p254 = por %p252, %p253
      %p255 = scmp.ne.s32.totalorder %s247, %s249
      %p256 = scmp.eq.s32.totalorder %s30, 1
      %p257 = por %p255, %p256
      %p258 = scmp.ne.s32.totalorder %s249, %s250
      %p259 = scmp.eq.s32.totalorder %s30, 0
      %p260 = por %p258, %p259
      %p261 = scmp.ne.s32.totalorder %s249, %s250
      %p262 = scmp.eq.s32.totalorder %s31, 1
      %p263 = por %p261, %p262
      %p265 = scmp.ne.s32.totalorder %s250, %s264
      %p266 = scmp.eq.s32.totalorder %s31, 0
      %p267 = por %p265, %p266
      %s269 = sadd.s32 %s268, 1
      %p272 = scmp.eq.s32.totalorder %s25, 1
      %p273 = scmp.ne.s32.totalorder %s268, %s270
      %p274 = scmp.eq.s32.totalorder %s25, 0
      %p275 = por %p273, %p274
      %p276 = scmp.ne.s32.totalorder %s268, %s270
      %p277 = scmp.eq.s32.totalorder %s30, 1
      %p278 = por %p276, %p277
      %p279 = scmp.ne.s32.totalorder %s270, %s271
      %p280 = scmp.eq.s32.totalorder %s30, 0
      %p281 = por %p279, %p280
      %p282 = scmp.ne.s32.totalorder %s270, %s271
      %p283 = scmp.eq.s32.totalorder %s31, 1
      %p284 = por %p282, %p283
      %p286 = scmp.ne.s32.totalorder %s271, %s285
      %p287 = scmp.eq.s32.totalorder %s31, 0
      %p288 = por %p286, %p287
      %s290 = sadd.s32 %s289, 1
      %p293 = scmp.eq.s32.totalorder %s25, 1
      %p294 = scmp.ne.s32.totalorder %s289, %s291
      %p295 = scmp.eq.s32.totalorder %s25, 0
      %p296 = por %p294, %p295
      %p297 = scmp.ne.s32.totalorder %s289, %s291
      %p298 = scmp.eq.s32.totalorder %s30, 1
      %p299 = por %p297, %p298
      %p300 = scmp.ne.s32.totalorder %s291, %s292
      %p301 = scmp.eq.s32.totalorder %s30, 0
      %p302 = por %p300, %p301
      %p303 = scmp.ne.s32.totalorder %s291, %s292
      %p304 = scmp.eq.s32.totalorder %s31, 1
      %p305 = por %p303, %p304
      %p307 = scmp.ne.s32.totalorder %s292, %s306
      %p308 = scmp.eq.s32.totalorder %s31, 0
      %p309 = por %p307, %p308
      %s310 = ssub.s32 %s25, %s32
      %p311 = scmp.eq.s32.totalorder %s310, 0
      %s313 = sadd.s32 %s312, 1
      %s314 = scalar_select %p311, %s312, %s313
      %p317 = pneg %p311
      %p318 = scmp.eq.s32.totalorder %s25, 1
      %p319 = por %p317, %p318
      %p320 = scmp.ne.s32.totalorder %s312, %s315
      %p321 = scmp.eq.s32.totalorder %s25, 0
      %p322 = por %p320, %p321
      %p323 = scmp.ne.s32.totalorder %s312, %s315
      %p324 = scmp.eq.s32.totalorder %s30, 1
      %p325 = por %p323, %p324
      %p326 = scmp.ne.s32.totalorder %s315, %s316
      %p327 = scmp.eq.s32.totalorder %s30, 0
      %p328 = por %p326, %p327
      %p329 = scmp.ne.s32.totalorder %s315, %s316
      %p330 = scmp.eq.s32.totalorder %s31, 1
      %p331 = por %p329, %p330
      %p333 = scmp.ne.s32.totalorder %s316, %s332
      %p334 = scmp.eq.s32.totalorder %s31, 0
      %p335 = por %p333, %p334
      %s336 = ssub.s32 %s25, %s32
      %p337 = scmp.eq.s32.totalorder %s336, 0
      %s339 = sadd.s32 %s338, 1
      %s340 = scalar_select %p337, %s338, %s339
      %p343 = pneg %p337
      %p344 = scmp.eq.s32.totalorder %s25, 1
      %p345 = por %p343, %p344
      %p346 = scmp.ne.s32.totalorder %s338, %s341
      %p347 = scmp.eq.s32.totalorder %s25, 0
      %p348 = por %p346, %p347
      %p349 = scmp.ne.s32.totalorder %s338, %s341
      %p350 = scmp.eq.s32.totalorder %s30, 1
      %p351 = por %p349, %p350
      %p352 = scmp.ne.s32.totalorder %s341, %s342
      %p353 = scmp.eq.s32.totalorder %s30, 0
      %p354 = por %p352, %p353
      %p355 = scmp.ne.s32.totalorder %s341, %s342
      %p356 = scmp.eq.s32.totalorder %s31, 1
      %p357 = por %p355, %p356
      %p359 = scmp.ne.s32.totalorder %s342, %s358
      %p360 = scmp.eq.s32.totalorder %s31, 0
      %p361 = por %p359, %p360
      %s362 = ssub.s32 %s25, %s32
      %p363 = scmp.eq.s32.totalorder %s362, 0
      %s365 = sadd.s32 %s364, 1
      %s366 = scalar_select %p363, %s364, %s365
      %p369 = pneg %p363
      %p370 = scmp.eq.s32.totalorder %s25, 1
      %p371 = por %p369, %p370
      %p372 = scmp.ne.s32.totalorder %s364, %s367
      %p373 = scmp.eq.s32.totalorder %s25, 0
      %p374 = por %p372, %p373
      %p375 = scmp.ne.s32.totalorder %s364, %s367
      %p376 = scmp.eq.s32.totalorder %s30, 1
      %p377 = por %p375, %p376
      %p378 = scmp.ne.s32.totalorder %s367, %s368
      %p379 = scmp.eq.s32.totalorder %s30, 0
      %p380 = por %p378, %p379
      %p381 = scmp.ne.s32.totalorder %s367, %s368
      %p382 = scmp.eq.s32.totalorder %s31, 1
      %p383 = por %p381, %p382
      %p385 = scmp.ne.s32.totalorder %s368, %s384
      %p386 = scmp.eq.s32.totalorder %s31, 0
      %p387 = por %p385, %p386
      %s388 = ssub.s32 %s25, %s32
      %p389 = scmp.eq.s32.totalorder %s388, 0
      %s391 = sadd.s32 %s390, 1
      %s392 = scalar_select %p389, %s390, %s391
      %p395 = pneg %p389
      %p396 = scmp.eq.s32.totalorder %s25, 1
      %p397 = por %p395, %p396
      %p398 = scmp.ne.s32.totalorder %s390, %s393
      %p399 = scmp.eq.s32.totalorder %s25, 0
      %p400 = por %p398, %p399
      %p401 = scmp.ne.s32.totalorder %s390, %s393
      %p402 = scmp.eq.s32.totalorder %s30, 1
      %p403 = por %p401, %p402
      %p404 = scmp.ne.s32.totalorder %s393, %s394
      %p405 = scmp.eq.s32.totalorder %s30, 0
      %p406 = por %p404, %p405
      %p407 = scmp.ne.s32.totalorder %s393, %s394
      %p408 = scmp.eq.s32.totalorder %s31, 1
      %p409 = por %p407, %p408
      %p411 = scmp.ne.s32.totalorder %s394, %s410
      %p412 = scmp.eq.s32.totalorder %s31, 0
      %p413 = por %p411, %p412
      %p414 = scmp.le.s32.totalorder 1, %s25
      %p415 = scmp.lt.s32.totalorder %s25, 3
      %p416 = pnand %p414, %p415
      %p417 = pneg %p416
      // Predicated region
      $region9: #{transformer_forward.1} parent=5 // pred_check
        _
      $region10: #{transformer_forward.1} parent=5 // pred_check_branch
        %419 = sbr.rel (%p416) target = $region12
      $region11: #{transformer_forward.1} parent=5 // pred_region
        %s420 = ssub.s32 %s25, 1
        // Predicated region
        $region13: #{transformer_forward.1} parent=11 // pred_check
          %p421 = pneg %p176
        $region14: #{transformer_forward.1} parent=11 // pred_check_branch
          %423 = sbr.rel (%p421) target = $region16
        $region15: #{transformer_forward.1} parent=11 // pred_region
          _
        $region16: #{transformer_forward.1} parent=11 // pred_fallthru
          _
        // Predicated region
        $region17: #{transformer_forward.1} parent=11 // pred_check
          %p424 = pneg %p197
        $region18: #{transformer_forward.1} parent=11 // pred_check_branch
          %426 = sbr.rel (%p424) target = $region20
        $region19: #{transformer_forward.1} parent=11 // pred_region
          _
        $region20: #{transformer_forward.1} parent=11 // pred_fallthru
          _
        // Predicated region
        $region21: #{transformer_forward.1} parent=11 // pred_check
          %p427 = pneg %p218
        $region22: #{transformer_forward.1} parent=11 // pred_check_branch
          %429 = sbr.rel (%p427) target = $region24
        $region23: #{transformer_forward.1} parent=11 // pred_region
          _
        $region24: #{transformer_forward.1} parent=11 // pred_fallthru
          _
        // Predicated region
        $region25: #{transformer_forward.1} parent=11 // pred_check
          %p430 = pneg %p239
        $region26: #{transformer_forward.1} parent=11 // pred_check_branch
          %432 = sbr.rel (%p430) target = $region28
        $region27: #{transformer_forward.1} parent=11 // pred_region
          _
        $region28: #{transformer_forward.1} parent=11 // pred_fallthru
          _
        // Predicated region
        $region29: #{transformer_forward.1} parent=11 // pred_check
          %p433 = pneg %p260
        $region30: #{transformer_forward.1} parent=11 // pred_check_branch
          %435 = sbr.rel (%p433) target = $region32
        $region31: #{transformer_forward.1} parent=11 // pred_region
          _
        $region32: #{transformer_forward.1} parent=11 // pred_fallthru
          _
        // Predicated region
        $region33: #{transformer_forward.1} parent=11 // pred_check
          %p436 = pneg %p281
        $region34: #{transformer_forward.1} parent=11 // pred_check_branch
          %438 = sbr.rel (%p436) target = $region36
        $region35: #{transformer_forward.1} parent=11 // pred_region
          _
        $region36: #{transformer_forward.1} parent=11 // pred_fallthru
          _
        // Predicated region
        $region37: #{transformer_forward.1} parent=11 // pred_check
          %p439 = pneg %p302
        $region38: #{transformer_forward.1} parent=11 // pred_check_branch
          %441 = sbr.rel (%p439) target = $region40
        $region39: #{transformer_forward.1} parent=11 // pred_region
          _
        $region40: #{transformer_forward.1} parent=11 // pred_fallthru
          _
      $region12: #{transformer_forward.1} parent=5 // pred_fallthru
        _
      %p442 = scmp.lt.s32.totalorder %s25, 2
      // Predicated region
      $region41: #{transformer_forward.1} parent=5 // pred_check
        %p443 = pneg %p442
      $region42: #{transformer_forward.1} parent=5 // pred_check_branch
        %445 = sbr.rel (%p443) target = $region44
      $region43: #{transformer_forward.1} parent=5 // pred_region
        // Predicated region
        $region45: #{transformer_forward.1} parent=43 // pred_check
          %p446 = pneg %p45
        $region46: #{transformer_forward.1} parent=43 // pred_check_branch
          %448 = sbr.rel (%p446) target = $region48
        $region47: #{transformer_forward.1} parent=43 // pred_region
          %p449 = scmp.lt.s32.totalorder %s25, 1
          %s450 = scalar_select %p449, %s25, 1
          %s451 = smul.addr %s450, 8
          %s452 = scalar_lea.vmem %s0, %s451
        $region48: #{transformer_forward.1} parent=43 // pred_fallthru
          _
        // Predicated region
        $region49: #{transformer_forward.1} parent=43 // pred_check
          %p453 = pneg %p71
        $region50: #{transformer_forward.1} parent=43 // pred_check_branch
          %455 = sbr.rel (%p453) target = $region52
        $region51: #{transformer_forward.1} parent=43 // pred_region
          %p456 = scmp.lt.s32.totalorder %s25, 1
          %s457 = scalar_select %p456, %s25, 1
          %s458 = smul.addr %s457, 8
          %s459 = scalar_lea.vmem %s1, %s458
        $region52: #{transformer_forward.1} parent=43 // pred_fallthru
          _
        // Predicated region
        $region53: #{transformer_forward.1} parent=43 // pred_check
          %p460 = pneg %p97
        $region54: #{transformer_forward.1} parent=43 // pred_check_branch
          %462 = sbr.rel (%p460) target = $region56
        $region55: #{transformer_forward.1} parent=43 // pred_region
          %p463 = scmp.lt.s32.totalorder %s25, 1
          %s464 = scalar_select %p463, %s25, 1
          %s465 = smul.addr %s464, 8
          %s466 = scalar_lea.vmem %s2, %s465
        $region56: #{transformer_forward.1} parent=43 // pred_fallthru
          _
        // Predicated region
        $region57: #{transformer_forward.1} parent=43 // pred_check
          %p467 = pneg %p123
        $region58: #{transformer_forward.1} parent=43 // pred_check_branch
          %469 = sbr.rel (%p467) target = $region60
        $region59: #{transformer_forward.1} parent=43 // pred_region
          %p470 = scmp.lt.s32.totalorder %s25, 1
          %s471 = scalar_select %p470, %s25, 1
          %s472 = smul.addr %s471, 8
          %s473 = scalar_lea.vmem %s3, %s472
        $region60: #{transformer_forward.1} parent=43 // pred_fallthru
          _
        // Predicated region
        $region61: #{transformer_forward.1} parent=43 // pred_check
          %p474 = pneg %p149
        $region62: #{transformer_forward.1} parent=43 // pred_check_branch
          %476 = sbr.rel (%p474) target = $region64
        $region63: #{transformer_forward.1} parent=43 // pred_region
          %p477 = scmp.lt.s32.totalorder %s25, 1
          %s478 = scalar_select %p477, %s25, 1
          %s479 = smul.addr %s478, 8
          %s480 = scalar_lea.vmem %s4, %s479
        $region64: #{transformer_forward.1} parent=43 // pred_fallthru
          _
      $region44: #{transformer_forward.1} parent=5 // pred_fallthru
        _
      %p481 = scmp.le.s32.totalorder 1, %s25
      %p482 = scmp.lt.s32.totalorder %s25, 3
      %p483 = pnand %p481, %p482
      %p484 = pneg %p483
      // Predicated region
      $region65: #{transformer_forward.1} parent=5 // pred_check
        _
      $region66: #{transformer_forward.1} parent=5 // pred_check_branch
        %486 = sbr.rel (%p483) target = $region68
      $region67: #{transformer_forward.1} parent=5 // pred_region
        %s487 = ssub.s32 %s25, 1
        %p488 = scmp.lt.s32.totalorder %s30, 1
        %s489 = scalar_select %p488, %s30, 1
        %s490 = smul.addr %s489, 8
        %s491 = scalar_lea.vmem %s0, %s490
        %p492 = pneg %p51
        %p493 = pneg %p48
        %p494 = scmp.lt.s32.totalorder %s30, 1
        %s495 = scalar_select %p494, %s30, 1
        %s496 = smul.addr %s495, 8
        %s497 = scalar_lea.vmem %s1, %s496
        %p498 = pneg %p77
        %p499 = pneg %p74
        %p500 = scmp.lt.s32.totalorder %s30, 1
        %s501 = scalar_select %p500, %s30, 1
        %s502 = smul.addr %s501, 8
        %s503 = scalar_lea.vmem %s2, %s502
        %p504 = pneg %p103
        %p505 = pneg %p100
        %p506 = scmp.lt.s32.totalorder %s30, 1
        %s507 = scalar_select %p506, %s30, 1
        %s508 = smul.addr %s507, 8
        %s509 = scalar_lea.vmem %s3, %s508
        %p510 = pneg %p129
        %p511 = pneg %p126
        %p512 = scmp.lt.s32.totalorder %s30, 1
        %s513 = scalar_select %p512, %s30, 1
        %s514 = smul.addr %s513, 8
        %s515 = scalar_lea.vmem %s4, %s514
        %p516 = pneg %p155
        %p517 = pneg %p152
        %p518 = pneg %p176
        %p519 = pneg %p173
        %p520 = pneg %p197
        %p521 = pneg %p194
        %p522 = pneg %p218
        %p523 = pneg %p215
        %p524 = pneg %p239
        %p525 = pneg %p236
        %p526 = pneg %p260
        %p527 = pneg %p257
        %p528 = pneg %p281
        %p529 = pneg %p278
        %p530 = pneg %p302
        %p531 = pneg %p299
        %p532 = pneg %p328
        %p533 = pneg %p325
        %s534 = sand.u32 %s315, 1
        %s535 = sand.u32 %s315, 1
        %s536 = smul.addr %s535, 64
        %s537 = scalar_lea.vmem [#allocation2], %s536
        %p538 = pneg %p354
        %p539 = pneg %p351
        %s540 = sand.u32 %s341, 1
        %s541 = sand.u32 %s341, 1
        %s542 = smul.addr %s541, 64
        %s543 = scalar_lea.vmem [#allocation3], %s542
        %p544 = pneg %p380
        %p545 = pneg %p377
        %s546 = sand.u32 %s367, 1
        %s547 = sand.u32 %s367, 1
        %s548 = smul.addr %s547, 64
        %s549 = scalar_lea.vmem [#allocation4], %s548
        %p550 = pneg %p406
        %p551 = pneg %p403
        %s552 = sand.u32 %s393, 1
        %s553 = scalar_lea.sflag [#allocation6], %s552
        %s554 = sand.u32 %s393, 1
        %s555 = smul.addr %s554, 8
        %s556 = scalar_lea.vmem [#allocation5], %s555
        %p557 = scmp.lt.s32.totalorder %s30, 1
        %s558 = scalar_select %p557, %s30, 1
        %s559 = smul.addr %s558, 8
        %s560 = scalar_lea.vmem %s0, %s559
        %p561 = scmp.lt.s32.totalorder %s30, 1
        %s562 = scalar_select %p561, %s30, 1
        %s563 = smul.addr %s562, 8
        %s564 = scalar_lea.vmem %s1, %s563
        %p565 = scmp.lt.s32.totalorder %s30, 1
        %s566 = scalar_select %p565, %s30, 1
        %s567 = smul.addr %s566, 8
        %s568 = scalar_lea.vmem %s2, %s567
        %p569 = scmp.lt.s32.totalorder %s30, 1
        %s570 = scalar_select %p569, %s30, 1
        %s571 = smul.addr %s570, 8
        %s572 = scalar_lea.vmem %s3, %s571
        %p573 = scmp.lt.s32.totalorder %s30, 1
        %s574 = scalar_select %p573, %s30, 1
        %s575 = smul.addr %s574, 8
        %s576 = scalar_lea.vmem %s4, %s575
        %v577 = vld [vmem:[%s560] sm:$0xff]
        %v578 = vld [vmem:[%s568] sm:$0xff]
        %v579 = vld [vmem:[%s5] sm:$0xff]
        %v580 = vld [vmem:[%s5 + $0x10] sm:$0xff]
        %v581 = vld [vmem:[%s5 + $0x20] sm:$0xff]
        %v582 = vld [vmem:[%s5 + $0x30] sm:$0xff]
        %v583 = vld [vmem:[%s5 + $0x8] sm:$0xff]
        %v584 = vld [vmem:[%s5 + $0x18] sm:$0xff]
        %v585 = vld [vmem:[%s5 + $0x28] sm:$0xff]
        %v586 = vld [vmem:[%s5 + $0x38] sm:$0xff]
        %v587 = vld [vmem:[%s6] sm:$0xff]
        %v588 = vld [vmem:[%s6 + $0x8] sm:$0xff]
        %v589 = vld [vmem:[%s6 + $0x10] sm:$0xff]
        %v590 = vld [vmem:[%s6 + $0x18] sm:$0xff]
        %v591 = vld [vmem:[%s6 + $0x20] sm:$0xff]
        %v592 = vld [vmem:[%s6 + $0x28] sm:$0xff]
        %v593 = vld [vmem:[%s6 + $0x30] sm:$0xff]
        %v594 = vld [vmem:[%s6 + $0x38] sm:$0xff]
        %v595 = vld [vmem:[%s7] sm:$0x1]
        %v596 = vld [vmem:[%s7 + $0x1] sm:$0x1]
        %v597 = vld [vmem:[%s7 + $0x2] sm:$0x1]
        %v598 = vld [vmem:[%s7 + $0x3] sm:$0x1]
        %vm599 = vcmask 261120
        %v601 = vsel %vm599, %v577, 0
        %603 = vmatpush.msra.mxu0 0.0
        %604 = vmatpush.msra.mxu0 0.0
        %605 = vmatpush.msra.mxu0 0.0
        %606 = vmatpush.msra.mxu0 0.0
        %607 = vmatpush.msra.mxu0 0.0
        %608 = vmatpush.msra.mxu0 0.0
        %609 = vmatpush.msra.mxu0 0.0
        %610 = vmatpush.msra.mxu0 0.0
        %611 = vmatpush.msra.mxu0 0.0
        %612 = vmatpush.msra.mxu0 0.0
        %613 = vmatpush.msra.mxu0 0.0
        %614 = vmatpush.msra.mxu0 0.0
        %615 = vmatpush.msra.mxu0 %v582
        %616 = vmatpush.msra.mxu0 %v581
        %617 = vmatpush.msra.mxu0 %v580
        %618 = vmatpush.msra.mxu0 %v579
        %619 = vmatmul.f32.gmra.mxu0 %v601
        %v620 = vpop.f32.mrf.mxu0
        %v621 = vadd.f32 0.0, %v620
        %622 = vdwg.mxu0
        %624 = vrot.lane.b32.xlu0 %v621, 120
        %v625 = vpop.permute.xlu0 %624
        %626 = vrot.lane.b32.xlu0 %v621, 112
        %v627 = vpop.permute.xlu0 %626
        %628 = vrot.lane.b32.xlu0 %v621, 104
        %v629 = vpop.permute.xlu0 %628
        %630 = vrot.lane.b32.xlu0 %v621, 96
        %v631 = vpop.permute.xlu0 %630
        %vm632 = vcmask 64512
        %v633 = vsel %vm632, %v621, 0
        %v635 = vsel %vm632, %v631, 0
        %637 = vmatpush.xpose.msra.mxu0 0.0
        %638 = vmatpush.xpose.msra.mxu0 0.0
        %639 = vmatpush.xpose.msra.mxu0 0.0
        %640 = vmatpush.xpose.msra.mxu0 0.0
        %641 = vmatpush.xpose.msra.mxu0 0.0
        %642 = vmatpush.xpose.msra.mxu0 0.0
        %643 = vmatpush.xpose.msra.mxu0 0.0
        %644 = vmatpush.xpose.msra.mxu0 0.0
        %645 = vmatpush.xpose.msra.mxu0 0.0
        %646 = vmatpush.xpose.msra.mxu0 0.0
        %647 = vmatpush.xpose.msra.mxu0 0.0
        %648 = vmatpush.xpose.msra.mxu0 0.0
        %649 = vmatpush.xpose.msra.mxu0 0.0
        %650 = vmatpush.xpose.msra.mxu0 0.0
        %651 = vmatpush.xpose.msra.mxu0 0.0
        %652 = vmatpush.xpose.msra.mxu0 %v635
        %653 = vmatmul.f32.gmra.mxu0 %v633
        %v654 = vpop.f32.mrf.mxu0
        %v655 = vadd.f32 0.0, %v654
        %656 = vdwg.mxu0
        %657 = vrot.lane.b32.xlu0 %v625, 96
        %v658 = vpop.permute.xlu0 %657
        %v659 = vsel %vm632, %v625, 0
        %v661 = vsel %vm632, %v658, 0
        %663 = vmatpush.xpose.msra.mxu0 0.0
        %664 = vmatpush.xpose.msra.mxu0 0.0
        %665 = vmatpush.xpose.msra.mxu0 0.0
        %666 = vmatpush.xpose.msra.mxu0 0.0
        %667 = vmatpush.xpose.msra.mxu0 0.0
        %668 = vmatpush.xpose.msra.mxu0 0.0
        %669 = vmatpush.xpose.msra.mxu0 0.0
        %670 = vmatpush.xpose.msra.mxu0 0.0
        %671 = vmatpush.xpose.msra.mxu0 0.0
        %672 = vmatpush.xpose.msra.mxu0 0.0
        %673 = vmatpush.xpose.msra.mxu0 0.0
        %674 = vmatpush.xpose.msra.mxu0 0.0
        %675 = vmatpush.xpose.msra.mxu0 0.0
        %676 = vmatpush.xpose.msra.mxu0 0.0
        %677 = vmatpush.xpose.msra.mxu0 0.0
        %678 = vmatpush.xpose.msra.mxu0 %v661
        %679 = vmatmul.f32.gmra.mxu0 %v659
        %v680 = vpop.f32.mrf.mxu0
        %v681 = vadd.f32 0.0, %v680
        %682 = vdwg.mxu0
        %683 = vrot.lane.b32.xlu0 %v627, 96
        %v684 = vpop.permute.xlu0 %683
        %v685 = vsel %vm632, %v627, 0
        %v687 = vsel %vm632, %v684, 0
        %689 = vmatpush.xpose.msra.mxu0 0.0
        %690 = vmatpush.xpose.msra.mxu0 0.0
        %691 = vmatpush.xpose.msra.mxu0 0.0
        %692 = vmatpush.xpose.msra.mxu0 0.0
        %693 = vmatpush.xpose.msra.mxu0 0.0
        %694 = vmatpush.xpose.msra.mxu0 0.0
        %695 = vmatpush.xpose.msra.mxu0 0.0
        %696 = vmatpush.xpose.msra.mxu0 0.0
        %697 = vmatpush.xpose.msra.mxu0 0.0
        %698 = vmatpush.xpose.msra.mxu0 0.0
        %699 = vmatpush.xpose.msra.mxu0 0.0
        %700 = vmatpush.xpose.msra.mxu0 0.0
        %701 = vmatpush.xpose.msra.mxu0 0.0
        %702 = vmatpush.xpose.msra.mxu0 0.0
        %703 = vmatpush.xpose.msra.mxu0 0.0
        %704 = vmatpush.xpose.msra.mxu0 %v687
        %705 = vmatmul.f32.gmra.mxu0 %v685
        %v706 = vpop.f32.mrf.mxu0
        %v707 = vadd.f32 0.0, %v706
        %708 = vdwg.mxu0
        %709 = vrot.lane.b32.xlu0 %v629, 96
        %v710 = vpop.permute.xlu0 %709
        %v711 = vsel %vm632, %v629, 0
        %v713 = vsel %vm632, %v710, 0
        %715 = vmatpush.xpose.msra.mxu0 0.0
        %716 = vmatpush.xpose.msra.mxu0 0.0
        %717 = vmatpush.xpose.msra.mxu0 0.0
        %718 = vmatpush.xpose.msra.mxu0 0.0
        %719 = vmatpush.xpose.msra.mxu0 0.0
        %720 = vmatpush.xpose.msra.mxu0 0.0
        %721 = vmatpush.xpose.msra.mxu0 0.0
        %722 = vmatpush.xpose.msra.mxu0 0.0
        %723 = vmatpush.xpose.msra.mxu0 0.0
        %724 = vmatpush.xpose.msra.mxu0 0.0
        %725 = vmatpush.xpose.msra.mxu0 0.0
        %726 = vmatpush.xpose.msra.mxu0 0.0
        %727 = vmatpush.xpose.msra.mxu0 0.0
        %728 = vmatpush.xpose.msra.mxu0 0.0
        %729 = vmatpush.xpose.msra.mxu0 0.0
        %730 = vmatpush.xpose.msra.mxu0 %v713
        %731 = vmatmul.f32.gmra.mxu0 %v711
        %v732 = vpop.f32.mrf.mxu0
        %v733 = vadd.f32 0.0, %v732
        %734 = vdwg.mxu0
        %v735 = vmul.f32 %v655, 0.35355338
        %v736 = vmul.f32 %v681, 0.35355338
        %v737 = vmul.f32 %v707, 0.35355338
        %v738 = vmul.f32 %v733, 0.35355338
        %v739 = vadd.f32 %v735, %v578
        %v740 = vadd.f32 %v736, %v578
        %v741 = vadd.f32 %v737, %v578
        %v742 = vadd.f32 %v738, %v578
        %v743 = vsel %vm632, %v739, -inf
        %744 = vmax.xlane.f32.xlu0 %v743
        %v745 = vpop.xlane.xlu0 %744
        %v746 = vsel %vm632, %v740, -inf
        %747 = vmax.xlane.f32.xlu0 %v746
        %v748 = vpop.xlane.xlu0 %747
        %v749 = vsel %vm632, %v741, -inf
        %750 = vmax.xlane.f32.xlu0 %v749
        %v751 = vpop.xlane.xlu0 %750
        %v752 = vsel %vm632, %v742, -inf
        %753 = vmax.xlane.f32.xlu0 %v752
        %v754 = vpop.xlane.xlu0 %753
        %v755 = vsub.f32 %v739, %v745
        %v756 = vsub.f32 %v740, %v748
        %v757 = vsub.f32 %v741, %v751
        %v758 = vsub.f32 %v742, %v754
        %v759 = vmul.f32 %v755, 1.442695
        %v760 = vpow.pop %v759
        %v761 = vmul.f32 %v756, 1.442695
        %v762 = vpow.pop %v761
        %v763 = vmul.f32 %v757, 1.442695
        %v764 = vpow.pop %v763
        %v765 = vmul.f32 %v758, 1.442695
        %v766 = vpow.pop %v765
        %v767 = vsel %vm632, %v760, 0.0
        %768 = vadd.xlane.f32.xlu0 %v767
        %v769 = vpop.xlane.xlu0 %768
        %v770 = vsel %vm632, %v762, 0.0
        %771 = vadd.xlane.f32.xlu0 %v770
        %v772 = vpop.xlane.xlu0 %771
        %v773 = vsel %vm632, %v764, 0.0
        %774 = vadd.xlane.f32.xlu0 %v773
        %v775 = vpop.xlane.xlu0 %774
        %v776 = vsel %vm632, %v766, 0.0
        %777 = vadd.xlane.f32.xlu0 %v776
        %v778 = vpop.xlane.xlu0 %777
        %v779 = vrcp.pop %v769
        %v780 = vmul.f32 %v769, %v779
        %v781 = vsub.f32 1.0, %v780
        %v782 = vmul.f32 %v779, %v781
        %v783 = vadd.f32 %v779, %v782
        %vm784 = vweird.f32 %v769
        %vm785 = vweird.f32 %v779
        %vm786 = vmor %vm784, %vm785
        %v787 = vsel %vm786, %v779, %v783
        %v788 = vand.u32 2147483647, %v769
        %vm789 = vcmp.eq.f32.partialorder %v788, 8.507059e+37
        %v790 = vand.u32 %v769, 2147483648
        %v791 = vor.u32 1.1754944e-38, %v790
        %v792 = vsel %vm789, %v791, %v787
        %v793 = vmul.f32 %v760, %v792
        %v794 = vrcp.pop %v772
        %v795 = vmul.f32 %v772, %v794
        %v796 = vsub.f32 1.0, %v795
        %v797 = vmul.f32 %v794, %v796
        %v798 = vadd.f32 %v794, %v797
        %vm799 = vweird.f32 %v772
        %vm800 = vweird.f32 %v794
        %vm801 = vmor %vm799, %vm800
        %v802 = vsel %vm801, %v794, %v798
        %v803 = vand.u32 2147483647, %v772
        %vm804 = vcmp.eq.f32.partialorder %v803, 8.507059e+37
        %v805 = vand.u32 %v772, 2147483648
        %v806 = vor.u32 1.1754944e-38, %v805
        %v807 = vsel %vm804, %v806, %v802
        %v808 = vmul.f32 %v762, %v807
        %v809 = vrcp.pop %v775
        %v810 = vmul.f32 %v775, %v809
        %v811 = vsub.f32 1.0, %v810
        %v812 = vmul.f32 %v809, %v811
        %v813 = vadd.f32 %v809, %v812
        %vm814 = vweird.f32 %v775
        %vm815 = vweird.f32 %v809
        %vm816 = vmor %vm814, %vm815
        %v817 = vsel %vm816, %v809, %v813
        %v818 = vand.u32 2147483647, %v775
        %vm819 = vcmp.eq.f32.partialorder %v818, 8.507059e+37
        %v820 = vand.u32 %v775, 2147483648
        %v821 = vor.u32 1.1754944e-38, %v820
        %v822 = vsel %vm819, %v821, %v817
        %v823 = vmul.f32 %v764, %v822
        %v824 = vrcp.pop %v778
        %v825 = vmul.f32 %v778, %v824
        %v826 = vsub.f32 1.0, %v825
        %v827 = vmul.f32 %v824, %v826
        %v828 = vadd.f32 %v824, %v827
        %vm829 = vweird.f32 %v778
        %vm830 = vweird.f32 %v824
        %vm831 = vmor %vm829, %vm830
        %v832 = vsel %vm831, %v824, %v828
        %v833 = vand.u32 2147483647, %v778
        %vm834 = vcmp.eq.f32.partialorder %v833, 8.507059e+37
        %v835 = vand.u32 %v778, 2147483648
        %v836 = vor.u32 1.1754944e-38, %v835
        %v837 = vsel %vm834, %v836, %v832
        %v838 = vmul.f32 %v766, %v837
        %839 = vrot.lane.b32.xlu0 %v621, 64
        %v840 = vpop.permute.xlu0 %839
        %v843 = vsel %vm632, %v793, 0
        %845 = vmatpush.msra.mxu0 0.0
        %846 = vmatpush.msra.mxu0 0.0
        %847 = vmatpush.msra.mxu0 0.0
        %848 = vmatpush.msra.mxu0 0.0
        %849 = vmatpush.msra.mxu0 0.0
        %850 = vmatpush.msra.mxu0 0.0
        %851 = vmatpush.msra.mxu0 0.0
        %852 = vmatpush.msra.mxu0 0.0
        %853 = vmatpush.msra.mxu0 0.0
        %854 = vmatpush.msra.mxu0 0.0
        %855 = vmatpush.msra.mxu0 0.0
        %856 = vmatpush.msra.mxu0 0.0
        %857 = vmatpush.msra.mxu0 0.0
        %858 = vmatpush.msra.mxu0 0.0
        %859 = vmatpush.msra.mxu0 0.0
        %860 = vmatpush.msra.mxu0 %v840
        %861 = vmatmul.f32.gmra.mxu0 %v843
        %v862 = vpop.f32.mrf.mxu0
        %v863 = vadd.f32 0.0, %v862
        %864 = vdwg.mxu0
        %865 = vrot.lane.b32.xlu0 %v625, 64
        %v866 = vpop.permute.xlu0 %865
        %v869 = vsel %vm632, %v808, 0
        %871 = vmatpush.msra.mxu0 0.0
        %872 = vmatpush.msra.mxu0 0.0
        %873 = vmatpush.msra.mxu0 0.0
        %874 = vmatpush.msra.mxu0 0.0
        %875 = vmatpush.msra.mxu0 0.0
        %876 = vmatpush.msra.mxu0 0.0
        %877 = vmatpush.msra.mxu0 0.0
        %878 = vmatpush.msra.mxu0 0.0
        %879 = vmatpush.msra.mxu0 0.0
        %880 = vmatpush.msra.mxu0 0.0
        %881 = vmatpush.msra.mxu0 0.0
        %882 = vmatpush.msra.mxu0 0.0
        %883 = vmatpush.msra.mxu0 0.0
        %884 = vmatpush.msra.mxu0 0.0
        %885 = vmatpush.msra.mxu0 0.0
        %886 = vmatpush.msra.mxu0 %v866
        %887 = vmatmul.f32.gmra.mxu0 %v869
        %v888 = vpop.f32.mrf.mxu0
        %v889 = vadd.f32 0.0, %v888
        %890 = vdwg.mxu0
        %891 = vrot.lane.b32.xlu0 %v627, 64
        %v892 = vpop.permute.xlu0 %891
        %v895 = vsel %vm632, %v823, 0
        %897 = vmatpush.msra.mxu0 0.0
        %898 = vmatpush.msra.mxu0 0.0
        %899 = vmatpush.msra.mxu0 0.0
        %900 = vmatpush.msra.mxu0 0.0
        %901 = vmatpush.msra.mxu0 0.0
        %902 = vmatpush.msra.mxu0 0.0
        %903 = vmatpush.msra.mxu0 0.0
        %904 = vmatpush.msra.mxu0 0.0
        %905 = vmatpush.msra.mxu0 0.0
        %906 = vmatpush.msra.mxu0 0.0
        %907 = vmatpush.msra.mxu0 0.0
        %908 = vmatpush.msra.mxu0 0.0
        %909 = vmatpush.msra.mxu0 0.0
        %910 = vmatpush.msra.mxu0 0.0
        %911 = vmatpush.msra.mxu0 0.0
        %912 = vmatpush.msra.mxu0 %v892
        %913 = vmatmul.f32.gmra.mxu0 %v895
        %v914 = vpop.f32.mrf.mxu0
        %v915 = vadd.f32 0.0, %v914
        %916 = vdwg.mxu0
        %917 = vrot.lane.b32.xlu0 %v629, 64
        %v918 = vpop.permute.xlu0 %917
        %v921 = vsel %vm632, %v838, 0
        %923 = vmatpush.msra.mxu0 0.0
        %924 = vmatpush.msra.mxu0 0.0
        %925 = vmatpush.msra.mxu0 0.0
        %926 = vmatpush.msra.mxu0 0.0
        %927 = vmatpush.msra.mxu0 0.0
        %928 = vmatpush.msra.mxu0 0.0
        %929 = vmatpush.msra.mxu0 0.0
        %930 = vmatpush.msra.mxu0 0.0
        %931 = vmatpush.msra.mxu0 0.0
        %932 = vmatpush.msra.mxu0 0.0
        %933 = vmatpush.msra.mxu0 0.0
        %934 = vmatpush.msra.mxu0 0.0
        %935 = vmatpush.msra.mxu0 0.0
        %936 = vmatpush.msra.mxu0 0.0
        %937 = vmatpush.msra.mxu0 0.0
        %938 = vmatpush.msra.mxu0 %v918
        %939 = vmatmul.f32.gmra.mxu0 %v921
        %v940 = vpop.f32.mrf.mxu0
        %v941 = vadd.f32 0.0, %v940
        %942 = vdwg.mxu0
        %944 = vrot.lane.b32.xlu0 %v889, 8
        %v945 = vpop.permute.xlu0 %944
        %948 = vrot.lane.b32.xlu0 %v915, 16
        %v949 = vpop.permute.xlu0 %948
        %952 = vrot.lane.b32.xlu0 %v941, 24
        %v953 = vpop.permute.xlu0 %952
        %v955 = vsel %vm632, %v863, %v945
        %vm956 = vcmask 130048
        %v957 = vsel %vm956, %v955, %v949
        %vm958 = vcmask 195584
        %v959 = vsel %vm958, %v957, %v953
        %960 = vst.msk [vmem:[%s537] sm:$0xff] %vm632, %v793
        %961 = vst.msk [vmem:[%s537 + $0x8] sm:$0xff] %vm632, %v808
        %962 = vst.msk [vmem:[%s537 + $0x10] sm:$0xff] %vm632, %v823
        %963 = vst.msk [vmem:[%s537 + $0x18] sm:$0xff] %vm632, %v838
        %968 = vrot.lane.b32.xlu0 %v579, 32
        %v969 = vpop.permute.xlu0 %968
        %970 = vrot.lane.b32.xlu0 %v580, 32
        %v971 = vpop.permute.xlu0 %970
        %972 = vrot.lane.b32.xlu0 %v581, 32
        %v973 = vpop.permute.xlu0 %972
        %974 = vrot.lane.b32.xlu0 %v582, 32
        %v975 = vpop.permute.xlu0 %974
        %v981 = vsel %vm599, %v959, 0
        %983 = vmatpush.msra.mxu0 0.0
        %984 = vmatpush.msra.mxu0 0.0
        %985 = vmatpush.msra.mxu0 0.0
        %986 = vmatpush.msra.mxu0 0.0
        %987 = vmatpush.msra.mxu0 0.0
        %988 = vmatpush.msra.mxu0 0.0
        %989 = vmatpush.msra.mxu0 0.0
        %990 = vmatpush.msra.mxu0 0.0
        %991 = vmatpush.msra.mxu0 0.0
        %992 = vmatpush.msra.mxu0 0.0
        %993 = vmatpush.msra.mxu0 0.0
        %994 = vmatpush.msra.mxu0 0.0
        %995 = vmatpush.msra.mxu0 %v975
        %996 = vmatpush.msra.mxu0 %v973
        %997 = vmatpush.msra.mxu0 %v971
        %998 = vmatpush.msra.mxu0 %v969
        %999 = vmatmul.f32.gmra.mxu0 %v981
        %v1000 = vpop.f32.mrf.mxu0
        %v1001 = vadd.f32 %v577, %v1000
        %1002 = vdwg.mxu0
        %v1003 = vsel %vm599, %v1001, 0.0
        %1004 = vadd.xlane.f32.xlu0 %v1003
        %v1005 = vpop.xlane.xlu0 %1004
        %v1006 = vrcp.pop 32.0
        %v1007 = vmul.f32 32.0, %v1006
        %v1008 = vsub.f32 1.0, %v1007
        %v1009 = vmul.f32 %v1006, %v1008
        %v1010 = vadd.f32 %v1006, %v1009
        %vm1011 = vweird.f32 %v1006
        %v1012 = vsel %vm1011, %v1006, %v1010
        %v1013 = vmul.f32 %v1005, %v1012
        %v1014 = vsub.f32 %v1001, %v1013
        %v1015 = vmul.f32 %v1014, %v1014
        %v1016 = vsel %vm599, %v1015, 0.0
        %1017 = vadd.xlane.f32.xlu0 %v1016
        %v1018 = vpop.xlane.xlu0 %1017
        %v1019 = vmul.f32 %v1018, %v1012
        %v1020 = vadd.f32 %v1019, 1e-05
        %v1021 = vrsqrt.pop %v1020
        %v1022 = vmul.f32 %v1021, %v1020
        %v1023 = vmul.f32 %v1022, %v1021
        %v1024 = vmul.f32 0.5, %v1023
        %v1025 = vsub.f32 1.5, %v1024
        %v1026 = vmul.f32 %v1021, %v1025
        %vm1027 = vweird.f32 %v1020
        %vm1028 = vweird.f32 %v1021
        %vm1029 = vmor %vm1027, %vm1028
        %v1030 = vsel %vm1029, %v1021, %v1026
        %v1031 = vmul.f32 %v1014, %v1030
        %v1032 = vperm.slane %v595, 0
        %v1033 = vmul.f32 %v1031, %v1032
        %v1034 = vperm.slane %v596, 0
        %v1035 = vadd.f32 %v1033, %v1034
        %v1037 = vsel %vm599, %v1035, 0
        %1039 = vmatpush.msra.mxu0 0.0
        %1040 = vmatpush.msra.mxu0 0.0
        %1041 = vmatpush.msra.mxu0 0.0
        %1042 = vmatpush.msra.mxu0 0.0
        %1043 = vmatpush.msra.mxu0 0.0
        %1044 = vmatpush.msra.mxu0 0.0
        %1045 = vmatpush.msra.mxu0 0.0
        %1046 = vmatpush.msra.mxu0 0.0
        %1047 = vmatpush.msra.mxu0 0.0
        %1048 = vmatpush.msra.mxu0 0.0
        %1049 = vmatpush.msra.mxu0 0.0
        %1050 = vmatpush.msra.mxu0 0.0
        %1051 = vmatpush.msra.mxu0 %v586
        %1052 = vmatpush.msra.mxu0 %v585
        %1053 = vmatpush.msra.mxu0 %v584
        %1054 = vmatpush.msra.mxu0 %v583
        %1055 = vmatmul.f32.gmra.mxu0 %v1037
        %v1056 = vpop.f32.mrf.mxu0
        %v1057 = vadd.f32 0.0, %v1056
        %1058 = vdwg.mxu0
        %v1059 = vmax.f32 %v1057, 0.0
        %vm1060 = vcmask 523264
        %v1062 = vsel %vm1060, %v1059, 0
        %1064 = vmatpush.msra.mxu0 0.0
        %1065 = vmatpush.msra.mxu0 0.0
        %1066 = vmatpush.msra.mxu0 0.0
        %1067 = vmatpush.msra.mxu0 0.0
        %1068 = vmatpush.msra.mxu0 0.0
        %1069 = vmatpush.msra.mxu0 0.0
        %1070 = vmatpush.msra.mxu0 0.0
        %1071 = vmatpush.msra.mxu0 0.0
        %1072 = vmatpush.msra.mxu0 %v594
        %1073 = vmatpush.msra.mxu0 %v593
        %1074 = vmatpush.msra.mxu0 %v592
        %1075 = vmatpush.msra.mxu0 %v591
        %1076 = vmatpush.msra.mxu0 %v590
        %1077 = vmatpush.msra.mxu0 %v589
        %1078 = vmatpush.msra.mxu0 %v588
        %1079 = vmatpush.msra.mxu0 %v587
        %1080 = vmatmul.f32.gmra.mxu0 %v1062
        %v1081 = vpop.f32.mrf.mxu0
        %v1082 = vadd.f32 %v1035, %v1081
        %1083 = vdwg.mxu0
        %v1084 = vsel %vm599, %v1082, 0.0
        %1085 = vadd.xlane.f32.xlu0 %v1084
        %v1086 = vpop.xlane.xlu0 %1085
        %v1087 = vmul.f32 %v1086, %v1012
        %v1088 = vsub.f32 %v1082, %v1087
        %v1089 = vmul.f32 %v1088, %v1088
        %v1090 = vsel %vm599, %v1089, 0.0
        %1091 = vadd.xlane.f32.xlu0 %v1090
        %v1092 = vpop.xlane.xlu0 %1091
        %v1093 = vmul.f32 %v1092, %v1012
        %v1094 = vadd.f32 %v1093, 1e-05
        %v1095 = vrsqrt.pop %v1094
        %v1096 = vmul.f32 %v1095, %v1094
        %v1097 = vmul.f32 %v1096, %v1095
        %v1098 = vmul.f32 0.5, %v1097
        %v1099 = vsub.f32 1.5, %v1098
        %v1100 = vmul.f32 %v1095, %v1099
        %vm1101 = vweird.f32 %v1094
        %vm1102 = vweird.f32 %v1095
        %vm1103 = vmor %vm1101, %vm1102
        %v1104 = vsel %vm1103, %v1095, %v1100
        %v1105 = vmul.f32 %v1088, %v1104
        %v1106 = vperm.slane %v597, 0
        %v1107 = vmul.f32 %v1105, %v1106
        %v1108 = vperm.slane %v598, 0
        %v1109 = vadd.f32 %v1107, %v1108
        %s1110 = scalar_lea.vmem %s5, 64
        %v1111 = vld [vmem:[%s1110] sm:$0xff]
        %v1112 = vld [vmem:[%s1110 + $0x10] sm:$0xff]
        %v1113 = vld [vmem:[%s1110 + $0x20] sm:$0xff]
        %v1114 = vld [vmem:[%s1110 + $0x30] sm:$0xff]
        %v1115 = vld [vmem:[%s1110 + $0x8] sm:$0xff]
        %v1116 = vld [vmem:[%s1110 + $0x18] sm:$0xff]
        %v1117 = vld [vmem:[%s1110 + $0x28] sm:$0xff]
        %v1118 = vld [vmem:[%s1110 + $0x38] sm:$0xff]
        %s1119 = scalar_lea.vmem %s6, 64
        %v1120 = vld [vmem:[%s1119] sm:$0xff]
        %v1121 = vld [vmem:[%s1119 + $0x8] sm:$0xff]
        %v1122 = vld [vmem:[%s1119 + $0x10] sm:$0xff]
        %v1123 = vld [vmem:[%s1119 + $0x18] sm:$0xff]
        %v1124 = vld [vmem:[%s1119 + $0x20] sm:$0xff]
        %v1125 = vld [vmem:[%s1119 + $0x28] sm:$0xff]
        %v1126 = vld [vmem:[%s1119 + $0x30] sm:$0xff]
        %v1127 = vld [vmem:[%s1119 + $0x38] sm:$0xff]
        %s1128 = scalar_lea.vmem %s7, 4
        %v1129 = vld [vmem:[%s1128] sm:$0x1]
        %v1130 = vld [vmem:[%s1128 + $0x1] sm:$0x1]
        %v1131 = vld [vmem:[%s1128 + $0x2] sm:$0x1]
        %v1132 = vld [vmem:[%s1128 + $0x3] sm:$0x1]
        %v1134 = vsel %vm599, %v1109, 0
        %1136 = vmatpush.msra.mxu0 0.0
        %1137 = vmatpush.msra.mxu0 0.0
        %1138 = vmatpush.msra.mxu0 0.0
        %1139 = vmatpush.msra.mxu0 0.0
        %1140 = vmatpush.msra.mxu0 0.0
        %1141 = vmatpush.msra.mxu0 0.0
        %1142 = vmatpush.msra.mxu0 0.0
        %1143 = vmatpush.msra.mxu0 0.0
        %1144 = vmatpush.msra.mxu0 0.0
        %1145 = vmatpush.msra.mxu0 0.0
        %1146 = vmatpush.msra.mxu0 0.0
        %1147 = vmatpush.msra.mxu0 0.0
        %1148 = vmatpush.msra.mxu0 %v1114
        %1149 = vmatpush.msra.mxu0 %v1113
        %1150 = vmatpush.msra.mxu0 %v1112
        %1151 = vmatpush.msra.mxu0 %v1111
        %1152 = vmatmul.f32.gmra.mxu0 %v1134
        %v1153 = vpop.f32.mrf.mxu0
        %v1154 = vadd.f32 0.0, %v1153
        %1155 = vdwg.mxu0
        %1157 = vrot.lane.b32.xlu0 %v1154, 120
        %v1158 = vpop.permute.xlu0 %1157
        %1159 = vrot.lane.b32.xlu0 %v1154, 112
        %v1160 = vpop.permute.xlu0 %1159
        %1161 = vrot.lane.b32.xlu0 %v1154, 104
        %v1162 = vpop.permute.xlu0 %1161
        %1163 = vrot.lane.b32.xlu0 %v1154, 96
        %v1164 = vpop.permute.xlu0 %1163
        %v1165 = vsel %vm632, %v1154, 0
        %v1167 = vsel %vm632, %v1164, 0
        %1169 = vmatpush.xpose.msra.mxu0 0.0
        %1170 = vmatpush.xpose.msra.mxu0 0.0
        %1171 = vmatpush.xpose.msra.mxu0 0.0
        %1172 = vmatpush.xpose.msra.mxu0 0.0
        %1173 = vmatpush.xpose.msra.mxu0 0.0
        %1174 = vmatpush.xpose.msra.mxu0 0.0
        %1175 = vmatpush.xpose.msra.mxu0 0.0
        %1176 = vmatpush.xpose.msra.mxu0 0.0
        %1177 = vmatpush.xpose.msra.mxu0 0.0
        %1178 = vmatpush.xpose.msra.mxu0 0.0
        %1179 = vmatpush.xpose.msra.mxu0 0.0
        %1180 = vmatpush.xpose.msra.mxu0 0.0
        %1181 = vmatpush.xpose.msra.mxu0 0.0
        %1182 = vmatpush.xpose.msra.mxu0 0.0
        %1183 = vmatpush.xpose.msra.mxu0 0.0
        %1184 = vmatpush.xpose.msra.mxu0 %v1167
        %1185 = vmatmul.f32.gmra.mxu0 %v1165
        %v1186 = vpop.f32.mrf.mxu0
        %v1187 = vadd.f32 0.0, %v1186
        %1188 = vdwg.mxu0
        %1189 = vrot.lane.b32.xlu0 %v1158, 96
        %v1190 = vpop.permute.xlu0 %1189
        %v1191 = vsel %vm632, %v1158, 0
        %v1193 = vsel %vm632, %v1190, 0
        %1195 = vmatpush.xpose.msra.mxu0 0.0
        %1196 = vmatpush.xpose.msra.mxu0 0.0
        %1197 = vmatpush.xpose.msra.mxu0 0.0
        %1198 = vmatpush.xpose.msra.mxu0 0.0
        %1199 = vmatpush.xpose.msra.mxu0 0.0
        %1200 = vmatpush.xpose.msra.mxu0 0.0
        %1201 = vmatpush.xpose.msra.mxu0 0.0
        %1202 = vmatpush.xpose.msra.mxu0 0.0
        %1203 = vmatpush.xpose.msra.mxu0 0.0
        %1204 = vmatpush.xpose.msra.mxu0 0.0
        %1205 = vmatpush.xpose.msra.mxu0 0.0
        %1206 = vmatpush.xpose.msra.mxu0 0.0
        %1207 = vmatpush.xpose.msra.mxu0 0.0
        %1208 = vmatpush.xpose.msra.mxu0 0.0
        %1209 = vmatpush.xpose.msra.mxu0 0.0
        %1210 = vmatpush.xpose.msra.mxu0 %v1193
        %1211 = vmatmul.f32.gmra.mxu0 %v1191
        %v1212 = vpop.f32.mrf.mxu0
        %v1213 = vadd.f32 0.0, %v1212
        %1214 = vdwg.mxu0
        %1215 = vrot.lane.b32.xlu0 %v1160, 96
        %v1216 = vpop.permute.xlu0 %1215
        %v1217 = vsel %vm632, %v1160, 0
        %v1219 = vsel %vm632, %v1216, 0
        %1221 = vmatpush.xpose.msra.mxu0 0.0
        %1222 = vmatpush.xpose.msra.mxu0 0.0
        %1223 = vmatpush.xpose.msra.mxu0 0.0
        %1224 = vmatpush.xpose.msra.mxu0 0.0
        %1225 = vmatpush.xpose.msra.mxu0 0.0
        %1226 = vmatpush.xpose.msra.mxu0 0.0
        %1227 = vmatpush.xpose.msra.mxu0 0.0
        %1228 = vmatpush.xpose.msra.mxu0 0.0
        %1229 = vmatpush.xpose.msra.mxu0 0.0
        %1230 = vmatpush.xpose.msra.mxu0 0.0
        %1231 = vmatpush.xpose.msra.mxu0 0.0
        %1232 = vmatpush.xpose.msra.mxu0 0.0
        %1233 = vmatpush.xpose.msra.mxu0 0.0
        %1234 = vmatpush.xpose.msra.mxu0 0.0
        %1235 = vmatpush.xpose.msra.mxu0 0.0
        %1236 = vmatpush.xpose.msra.mxu0 %v1219
        %1237 = vmatmul.f32.gmra.mxu0 %v1217
        %v1238 = vpop.f32.mrf.mxu0
        %v1239 = vadd.f32 0.0, %v1238
        %1240 = vdwg.mxu0
        %1241 = vrot.lane.b32.xlu0 %v1162, 96
        %v1242 = vpop.permute.xlu0 %1241
        %v1243 = vsel %vm632, %v1162, 0
        %v1245 = vsel %vm632, %v1242, 0
        %1247 = vmatpush.xpose.msra.mxu0 0.0
        %1248 = vmatpush.xpose.msra.mxu0 0.0
        %1249 = vmatpush.xpose.msra.mxu0 0.0
        %1250 = vmatpush.xpose.msra.mxu0 0.0
        %1251 = vmatpush.xpose.msra.mxu0 0.0
        %1252 = vmatpush.xpose.msra.mxu0 0.0
        %1253 = vmatpush.xpose.msra.mxu0 0.0
        %1254 = vmatpush.xpose.msra.mxu0 0.0
        %1255 = vmatpush.xpose.msra.mxu0 0.0
        %1256 = vmatpush.xpose.msra.mxu0 0.0
        %1257 = vmatpush.xpose.msra.mxu0 0.0
        %1258 = vmatpush.xpose.msra.mxu0 0.0
        %1259 = vmatpush.xpose.msra.mxu0 0.0
        %1260 = vmatpush.xpose.msra.mxu0 0.0
        %1261 = vmatpush.xpose.msra.mxu0 0.0
        %1262 = vmatpush.xpose.msra.mxu0 %v1245
        %1263 = vmatmul.f32.gmra.mxu0 %v1243
        %v1264 = vpop.f32.mrf.mxu0
        %v1265 = vadd.f32 0.0, %v1264
        %1266 = vdwg.mxu0
        %v1267 = vmul.f32 %v1187, 0.35355338
        %v1268 = vmul.f32 %v1213, 0.35355338
        %v1269 = vmul.f32 %v1239, 0.35355338
        %v1270 = vmul.f32 %v1265, 0.35355338
        %v1271 = vadd.f32 %v1267, %v578
        %v1272 = vadd.f32 %v1268, %v578
        %v1273 = vadd.f32 %v1269, %v578
        %v1274 = vadd.f32 %v1270, %v578
        %v1275 = vsel %vm632, %v1271, -inf
        %1276 = vmax.xlane.f32.xlu0 %v1275
        %v1277 = vpop.xlane.xlu0 %1276
        %v1278 = vsel %vm632, %v1272, -inf
        %1279 = vmax.xlane.f32.xlu0 %v1278
        %v1280 = vpop.xlane.xlu0 %1279
        %v1281 = vsel %vm632, %v1273, -inf
        %1282 = vmax.xlane.f32.xlu0 %v1281
        %v1283 = vpop.xlane.xlu0 %1282
        %v1284 = vsel %vm632, %v1274, -inf
        %1285 = vmax.xlane.f32.xlu0 %v1284
        %v1286 = vpop.xlane.xlu0 %1285
        %v1287 = vsub.f32 %v1271, %v1277
        %v1288 = vsub.f32 %v1272, %v1280
        %v1289 = vsub.f32 %v1273, %v1283
        %v1290 = vsub.f32 %v1274, %v1286
        %v1291 = vmul.f32 %v1287, 1.442695
        %v1292 = vpow.pop %v1291
        %v1293 = vmul.f32 %v1288, 1.442695
        %v1294 = vpow.pop %v1293
        %v1295 = vmul.f32 %v1289, 1.442695
        %v1296 = vpow.pop %v1295
        %v1297 = vmul.f32 %v1290, 1.442695
        %v1298 = vpow.pop %v1297
        %v1299 = vsel %vm632, %v1292, 0.0
        %1300 = vadd.xlane.f32.xlu0 %v1299
        %v1301 = vpop.xlane.xlu0 %1300
        %v1302 = vsel %vm632, %v1294, 0.0
        %1303 = vadd.xlane.f32.xlu0 %v1302
        %v1304 = vpop.xlane.xlu0 %1303
        %v1305 = vsel %vm632, %v1296, 0.0
        %1306 = vadd.xlane.f32.xlu0 %v1305
        %v1307 = vpop.xlane.xlu0 %1306
        %v1308 = vsel %vm632, %v1298, 0.0
        %1309 = vadd.xlane.f32.xlu0 %v1308
        %v1310 = vpop.xlane.xlu0 %1309
        %v1311 = vrcp.pop %v1301
        %v1312 = vmul.f32 %v1301, %v1311
        %v1313 = vsub.f32 1.0, %v1312
        %v1314 = vmul.f32 %v1311, %v1313
        %v1315 = vadd.f32 %v1311, %v1314
        %vm1316 = vweird.f32 %v1301
        %vm1317 = vweird.f32 %v1311
        %vm1318 = vmor %vm1316, %vm1317
        %v1319 = vsel %vm1318, %v1311, %v1315
        %v1320 = vand.u32 2147483647, %v1301
        %vm1321 = vcmp.eq.f32.partialorder %v1320, 8.507059e+37
        %v1322 = vand.u32 %v1301, 2147483648
        %v1323 = vor.u32 1.1754944e-38, %v1322
        %v1324 = vsel %vm1321, %v1323, %v1319
        %v1325 = vmul.f32 %v1292, %v1324
        %v1326 = vrcp.pop %v1304
        %v1327 = vmul.f32 %v1304, %v1326
        %v1328 = vsub.f32 1.0, %v1327
        %v1329 = vmul.f32 %v1326, %v1328
        %v1330 = vadd.f32 %v1326, %v1329
        %vm1331 = vweird.f32 %v1304
        %vm1332 = vweird.f32 %v1326
        %vm1333 = vmor %vm1331, %vm1332
        %v1334 = vsel %vm1333, %v1326, %v1330
        %v1335 = vand.u32 2147483647, %v1304
        %vm1336 = vcmp.eq.f32.partialorder %v1335, 8.507059e+37
        %v1337 = vand.u32 %v1304, 2147483648
        %v1338 = vor.u32 1.1754944e-38, %v1337
        %v1339 = vsel %vm1336, %v1338, %v1334
        %v1340 = vmul.f32 %v1294, %v1339
        %v1341 = vrcp.pop %v1307
        %v1342 = vmul.f32 %v1307, %v1341
        %v1343 = vsub.f32 1.0, %v1342
        %v1344 = vmul.f32 %v1341, %v1343
        %v1345 = vadd.f32 %v1341, %v1344
        %vm1346 = vweird.f32 %v1307
        %vm1347 = vweird.f32 %v1341
        %vm1348 = vmor %vm1346, %vm1347
        %v1349 = vsel %vm1348, %v1341, %v1345
        %v1350 = vand.u32 2147483647, %v1307
        %vm1351 = vcmp.eq.f32.partialorder %v1350, 8.507059e+37
        %v1352 = vand.u32 %v1307, 2147483648
        %v1353 = vor.u32 1.1754944e-38, %v1352
        %v1354 = vsel %vm1351, %v1353, %v1349
        %v1355 = vmul.f32 %v1296, %v1354
        %v1356 = vrcp.pop %v1310
        %v1357 = vmul.f32 %v1310, %v1356
        %v1358 = vsub.f32 1.0, %v1357
        %v1359 = vmul.f32 %v1356, %v1358
        %v1360 = vadd.f32 %v1356, %v1359
        %vm1361 = vweird.f32 %v1310
        %vm1362 = vweird.f32 %v1356
        %vm1363 = vmor %vm1361, %vm1362
        %v1364 = vsel %vm1363, %v1356, %v1360
        %v1365 = vand.u32 2147483647, %v1310
        %vm1366 = vcmp.eq.f32.partialorder %v1365, 8.507059e+37
        %v1367 = vand.u32 %v1310, 2147483648
        %v1368 = vor.u32 1.1754944e-38, %v1367
        %v1369 = vsel %vm1366, %v1368, %v1364
        %v1370 = vmul.f32 %v1298, %v1369
        %1371 = vrot.lane.b32.xlu0 %v1154, 64
        %v1372 = vpop.permute.xlu0 %1371
        %v1375 = vsel %vm632, %v1325, 0
        %1377 = vmatpush.msra.mxu0 0.0
        %1378 = vmatpush.msra.mxu0 0.0
        %1379 = vmatpush.msra.mxu0 0.0
        %1380 = vmatpush.msra.mxu0 0.0
        %1381 = vmatpush.msra.mxu0 0.0
        %1382 = vmatpush.msra.mxu0 0.0
        %1383 = vmatpush.msra.mxu0 0.0
        %1384 = vmatpush.msra.mxu0 0.0
        %1385 = vmatpush.msra.mxu0 0.0
        %1386 = vmatpush.msra.mxu0 0.0
        %1387 = vmatpush.msra.mxu0 0.0
        %1388 = vmatpush.msra.mxu0 0.0
        %1389 = vmatpush.msra.mxu0 0.0
        %1390 = vmatpush.msra.mxu0 0.0
        %1391 = vmatpush.msra.mxu0 0.0
        %1392 = vmatpush.msra.mxu0 %v1372
        %1393 = vmatmul.f32.gmra.mxu0 %v1375
        %v1394 = vpop.f32.mrf.mxu0
        %v1395 = vadd.f32 0.0, %v1394
        %1396 = vdwg.mxu0
        %1397 = vrot.lane.b32.xlu0 %v1158, 64
        %v1398 = vpop.permute.xlu0 %1397
        %v1401 = vsel %vm632, %v1340, 0
        %1403 = vmatpush.msra.mxu0 0.0
        %1404 = vmatpush.msra.mxu0 0.0
        %1405 = vmatpush.msra.mxu0 0.0
        %1406 = vmatpush.msra.mxu0 0.0
        %1407 = vmatpush.msra.mxu0 0.0
        %1408 = vmatpush.msra.mxu0 0.0
        %1409 = vmatpush.msra.mxu0 0.0
        %1410 = vmatpush.msra.mxu0 0.0
        %1411 = vmatpush.msra.mxu0 0.0
        %1412 = vmatpush.msra.mxu0 0.0
        %1413 = vmatpush.msra.mxu0 0.0
        %1414 = vmatpush.msra.mxu0 0.0
        %1415 = vmatpush.msra.mxu0 0.0
        %1416 = vmatpush.msra.mxu0 0.0
        %1417 = vmatpush.msra.mxu0 0.0
        %1418 = vmatpush.msra.mxu0 %v1398
        %1419 = vmatmul.f32.gmra.mxu0 %v1401
        %v1420 = vpop.f32.mrf.mxu0
        %v1421 = vadd.f32 0.0, %v1420
        %1422 = vdwg.mxu0
        %1423 = vrot.lane.b32.xlu0 %v1160, 64
        %v1424 = vpop.permute.xlu0 %1423
        %v1427 = vsel %vm632, %v1355, 0
        %1429 = vmatpush.msra.mxu0 0.0
        %1430 = vmatpush.msra.mxu0 0.0
        %1431 = vmatpush.msra.mxu0 0.0
        %1432 = vmatpush.msra.mxu0 0.0
        %1433 = vmatpush.msra.mxu0 0.0
        %1434 = vmatpush.msra.mxu0 0.0
        %1435 = vmatpush.msra.mxu0 0.0
        %1436 = vmatpush.msra.mxu0 0.0
        %1437 = vmatpush.msra.mxu0 0.0
        %1438 = vmatpush.msra.mxu0 0.0
        %1439 = vmatpush.msra.mxu0 0.0
        %1440 = vmatpush.msra.mxu0 0.0
        %1441 = vmatpush.msra.mxu0 0.0
        %1442 = vmatpush.msra.mxu0 0.0
        %1443 = vmatpush.msra.mxu0 0.0
        %1444 = vmatpush.msra.mxu0 %v1424
        %1445 = vmatmul.f32.gmra.mxu0 %v1427
        %v1446 = vpop.f32.mrf.mxu0
        %v1447 = vadd.f32 0.0, %v1446
        %1448 = vdwg.mxu0
        %1449 = vrot.lane.b32.xlu0 %v1162, 64
        %v1450 = vpop.permute.xlu0 %1449
        %v1453 = vsel %vm632, %v1370, 0
        %1455 = vmatpush.msra.mxu0 0.0
        %1456 = vmatpush.msra.mxu0 0.0
        %1457 = vmatpush.msra.mxu0 0.0
        %1458 = vmatpush.msra.mxu0 0.0
        %1459 = vmatpush.msra.mxu0 0.0
        %1460 = vmatpush.msra.mxu0 0.0
        %1461 = vmatpush.msra.mxu0 0.0
        %1462 = vmatpush.msra.mxu0 0.0
        %1463 = vmatpush.msra.mxu0 0.0
        %1464 = vmatpush.msra.mxu0 0.0
        %1465 = vmatpush.msra.mxu0 0.0
        %1466 = vmatpush.msra.mxu0 0.0
        %1467 = vmatpush.msra.mxu0 0.0
        %1468 = vmatpush.msra.mxu0 0.0
        %1469 = vmatpush.msra.mxu0 0.0
        %1470 = vmatpush.msra.mxu0 %v1450
        %1471 = vmatmul.f32.gmra.mxu0 %v1453
        %v1472 = vpop.f32.mrf.mxu0
        %v1473 = vadd.f32 0.0, %v1472
        %1474 = vdwg.mxu0
        %1476 = vrot.lane.b32.xlu0 %v1421, 8
        %v1477 = vpop.permute.xlu0 %1476
        %1480 = vrot.lane.b32.xlu0 %v1447, 16
        %v1481 = vpop.permute.xlu0 %1480
        %1484 = vrot.lane.b32.xlu0 %v1473, 24
        %v1485 = vpop.permute.xlu0 %1484
        %v1487 = vsel %vm632, %v1395, %v1477
        %v1488 = vsel %vm956, %v1487, %v1481
        %v1489 = vsel %vm958, %v1488, %v1485
        %s1490 = scalar_lea.vmem %s537, 32 [#allocation2]
        %1491 = vst.msk [vmem:[%s1490] sm:$0xff] %vm632, %v1325
        %1492 = vst.msk [vmem:[%s1490 + $0x8] sm:$0xff] %vm632, %v1340
        %1493 = vst.msk [vmem:[%s1490 + $0x10] sm:$0xff] %vm632, %v1355
        %1494 = vst.msk [vmem:[%s1490 + $0x18] sm:$0xff] %vm632, %v1370
        %1499 = vrot.lane.b32.xlu0 %v1111, 32
        %v1500 = vpop.permute.xlu0 %1499
        %1501 = vrot.lane.b32.xlu0 %v1112, 32
        %v1502 = vpop.permute.xlu0 %1501
        %1503 = vrot.lane.b32.xlu0 %v1113, 32
        %v1504 = vpop.permute.xlu0 %1503
        %1505 = vrot.lane.b32.xlu0 %v1114, 32
        %v1506 = vpop.permute.xlu0 %1505
        %v1512 = vsel %vm599, %v1489, 0
        %1514 = vmatpush.msra.mxu0 0.0
        %1515 = vmatpush.msra.mxu0 0.0
        %1516 = vmatpush.msra.mxu0 0.0
        %1517 = vmatpush.msra.mxu0 0.0
        %1518 = vmatpush.msra.mxu0 0.0
        %1519 = vmatpush.msra.mxu0 0.0
        %1520 = vmatpush.msra.mxu0 0.0
        %1521 = vmatpush.msra.mxu0 0.0
        %1522 = vmatpush.msra.mxu0 0.0
        %1523 = vmatpush.msra.mxu0 0.0
        %1524 = vmatpush.msra.mxu0 0.0
        %1525 = vmatpush.msra.mxu0 0.0
        %1526 = vmatpush.msra.mxu0 %v1506
        %1527 = vmatpush.msra.mxu0 %v1504
        %1528 = vmatpush.msra.mxu0 %v1502
        %1529 = vmatpush.msra.mxu0 %v1500
        %1530 = vmatmul.f32.gmra.mxu0 %v1512
        %v1531 = vpop.f32.mrf.mxu0
        %v1532 = vadd.f32 %v1109, %v1531
        %1533 = vdwg.mxu0
        %v1534 = vsel %vm599, %v1532, 0.0
        %1535 = vadd.xlane.f32.xlu0 %v1534
        %v1536 = vpop.xlane.xlu0 %1535
        %v1537 = vmul.f32 %v1536, %v1012
        %v1538 = vsub.f32 %v1532, %v1537
        %v1539 = vmul.f32 %v1538, %v1538
        %v1540 = vsel %vm599, %v1539, 0.0
        %1541 = vadd.xlane.f32.xlu0 %v1540
        %v1542 = vpop.xlane.xlu0 %1541
        %v1543 = vmul.f32 %v1542, %v1012
        %v1544 = vadd.f32 %v1543, 1e-05
        %v1545 = vrsqrt.pop %v1544
        %v1546 = vmul.f32 %v1545, %v1544
        %v1547 = vmul.f32 %v1546, %v1545
        %v1548 = vmul.f32 0.5, %v1547
        %v1549 = vsub.f32 1.5, %v1548
        %v1550 = vmul.f32 %v1545, %v1549
        %vm1551 = vweird.f32 %v1544
        %vm1552 = vweird.f32 %v1545
        %vm1553 = vmor %vm1551, %vm1552
        %v1554 = vsel %vm1553, %v1545, %v1550
        %v1555 = vmul.f32 %v1538, %v1554
        %v1556 = vperm.slane %v1129, 0
        %v1557 = vmul.f32 %v1555, %v1556
        %v1558 = vperm.slane %v1130, 0
        %v1559 = vadd.f32 %v1557, %v1558
        %v1561 = vsel %vm599, %v1559, 0
        %1563 = vmatpush.msra.mxu0 0.0
        %1564 = vmatpush.msra.mxu0 0.0
        %1565 = vmatpush.msra.mxu0 0.0
        %1566 = vmatpush.msra.mxu0 0.0
        %1567 = vmatpush.msra.mxu0 0.0
        %1568 = vmatpush.msra.mxu0 0.0
        %1569 = vmatpush.msra.mxu0 0.0
        %1570 = vmatpush.msra.mxu0 0.0
        %1571 = vmatpush.msra.mxu0 0.0
        %1572 = vmatpush.msra.mxu0 0.0
        %1573 = vmatpush.msra.mxu0 0.0
        %1574 = vmatpush.msra.mxu0 0.0
        %1575 = vmatpush.msra.mxu0 %v1118
        %1576 = vmatpush.msra.mxu0 %v1117
        %1577 = vmatpush.msra.mxu0 %v1116
        %1578 = vmatpush.msra.mxu0 %v1115
        %1579 = vmatmul.f32.gmra.mxu0 %v1561
        %v1580 = vpop.f32.mrf.mxu0
        %v1581 = vadd.f32 0.0, %v1580
        %1582 = vdwg.mxu0
        %v1583 = vmax.f32 %v1581, 0.0
        %v1585 = vsel %vm1060, %v1583, 0
        %1587 = vmatpush.msra.mxu0 0.0
        %1588 = vmatpush.msra.mxu0 0.0
        %1589 = vmatpush.msra.mxu0 0.0
        %1590 = vmatpush.msra.mxu0 0.0
        %1591 = vmatpush.msra.mxu0 0.0
        %1592 = vmatpush.msra.mxu0 0.0
        %1593 = vmatpush.msra.mxu0 0.0
        %1594 = vmatpush.msra.mxu0 0.0
        %1595 = vmatpush.msra.mxu0 %v1127
        %1596 = vmatpush.msra.mxu0 %v1126
        %1597 = vmatpush.msra.mxu0 %v1125
        %1598 = vmatpush.msra.mxu0 %v1124
        %1599 = vmatpush.msra.mxu0 %v1123
        %1600 = vmatpush.msra.mxu0 %v1122
        %1601 = vmatpush.msra.mxu0 %v1121
        %1602 = vmatpush.msra.mxu0 %v1120
        %1603 = vmatmul.f32.gmra.mxu0 %v1585
        %v1604 = vpop.f32.mrf.mxu0
        %v1605 = vadd.f32 %v1559, %v1604
        %1606 = vdwg.mxu0
        %v1607 = vsel %vm599, %v1605, 0.0
        %1608 = vadd.xlane.f32.xlu0 %v1607
        %v1609 = vpop.xlane.xlu0 %1608
        %v1610 = vmul.f32 %v1609, %v1012
        %v1611 = vsub.f32 %v1605, %v1610
        %v1612 = vmul.f32 %v1611, %v1611
        %v1613 = vsel %vm599, %v1612, 0.0
        %1614 = vadd.xlane.f32.xlu0 %v1613
        %v1615 = vpop.xlane.xlu0 %1614
        %v1616 = vmul.f32 %v1615, %v1012
        %v1617 = vadd.f32 %v1616, 1e-05
        %v1618 = vrsqrt.pop %v1617
        %v1619 = vmul.f32 %v1618, %v1617
        %v1620 = vmul.f32 %v1619, %v1618
        %v1621 = vmul.f32 0.5, %v1620
        %v1622 = vsub.f32 1.5, %v1621
        %v1623 = vmul.f32 %v1618, %v1622
        %vm1624 = vweird.f32 %v1617
        %vm1625 = vweird.f32 %v1618
        %vm1626 = vmor %vm1624, %vm1625
        %v1627 = vsel %vm1626, %v1618, %v1623
        %v1628 = vmul.f32 %v1611, %v1627
        %v1629 = vperm.slane %v1131, 0
        %v1630 = vmul.f32 %v1628, %v1629
        %v1631 = vperm.slane %v1132, 0
        %v1632 = vadd.f32 %v1630, %v1631
        %v1633 = vld [vmem:[%s564] sm:$0xff]
        %v1634 = vld [vmem:[%s572] sm:$0xff]
        %v1635 = vld [vmem:[%s576] sm:$0xff]
        %v1636 = vld [vmem:[%s8] sm:$0xff]
        %v1637 = vld [vmem:[%s8 + $0x18] sm:$0xff]
        %v1638 = vld [vmem:[%s8 + $0x30] sm:$0xff]
        %v1639 = vld [vmem:[%s8 + $0x48] sm:$0xff]
        %v1640 = vld [vmem:[%s8 + $0x8] sm:$0xff]
        %v1641 = vld [vmem:[%s8 + $0x20] sm:$0xff]
        %v1642 = vld [vmem:[%s8 + $0x38] sm:$0xff]
        %v1643 = vld [vmem:[%s8 + $0x50] sm:$0xff]
        %v1644 = vld [vmem:[%s8 + $0x10] sm:$0xff]
        %v1645 = vld [vmem:[%s8 + $0x28] sm:$0xff]
        %v1646 = vld [vmem:[%s8 + $0x40] sm:$0xff]
        %v1647 = vld [vmem:[%s8 + $0x58] sm:$0xff]
        %v1648 = vld [vmem:[%s9] sm:$0xff]
        %v1649 = vld [vmem:[%s9 + $0x8] sm:$0xff]
        %v1650 = vld [vmem:[%s9 + $0x10] sm:$0xff]
        %v1651 = vld [vmem:[%s9 + $0x18] sm:$0xff]
        %v1652 = vld [vmem:[%s9 + $0x20] sm:$0xff]
        %v1653 = vld [vmem:[%s9 + $0x28] sm:$0xff]
        %v1654 = vld [vmem:[%s9 + $0x30] sm:$0xff]
        %v1655 = vld [vmem:[%s9 + $0x38] sm:$0xff]
        %v1656 = vld [vmem:[%s10] sm:$0x1]
        %v1657 = vld [vmem:[%s10 + $0x1] sm:$0x1]
        %v1658 = vld [vmem:[%s10 + $0x2] sm:$0x1]
        %v1659 = vld [vmem:[%s10 + $0x3] sm:$0x1]
        %v1660 = vld [vmem:[%s10 + $0x4] sm:$0x1]
        %v1661 = vld [vmem:[%s10 + $0x5] sm:$0x1]
        %v1663 = vsel %vm599, %v1633, 0
        %1665 = vmatpush.msra.mxu0 0.0
        %1666 = vmatpush.msra.mxu0 0.0
        %1667 = vmatpush.msra.mxu0 0.0
        %1668 = vmatpush.msra.mxu0 0.0
        %1669 = vmatpush.msra.mxu0 0.0
        %1670 = vmatpush.msra.mxu0 0.0
        %1671 = vmatpush.msra.mxu0 0.0
        %1672 = vmatpush.msra.mxu0 0.0
        %1673 = vmatpush.msra.mxu0 0.0
        %1674 = vmatpush.msra.mxu0 0.0
        %1675 = vmatpush.msra.mxu0 0.0
        %1676 = vmatpush.msra.mxu0 0.0
        %1677 = vmatpush.msra.mxu0 %v1639
        %1678 = vmatpush.msra.mxu0 %v1638
        %1679 = vmatpush.msra.mxu0 %v1637
        %1680 = vmatpush.msra.mxu0 %v1636
        %1681 = vmatmul.f32.gmra.mxu0 %v1663
        %v1682 = vpop.f32.mrf.mxu0
        %v1683 = vadd.f32 0.0, %v1682
        %1684 = vdwg.mxu0
        %1686 = vrot.lane.b32.xlu0 %v1683, 120
        %v1687 = vpop.permute.xlu0 %1686
        %1688 = vrot.lane.b32.xlu0 %v1683, 112
        %v1689 = vpop.permute.xlu0 %1688
        %1690 = vrot.lane.b32.xlu0 %v1683, 104
        %v1691 = vpop.permute.xlu0 %1690
        %1692 = vrot.lane.b32.xlu0 %v1683, 96
        %v1693 = vpop.permute.xlu0 %1692
        %v1694 = vsel %vm632, %v1683, 0
        %v1696 = vsel %vm632, %v1693, 0
        %1698 = vmatpush.xpose.msra.mxu0 0.0
        %1699 = vmatpush.xpose.msra.mxu0 0.0
        %1700 = vmatpush.xpose.msra.mxu0 0.0
        %1701 = vmatpush.xpose.msra.mxu0 0.0
        %1702 = vmatpush.xpose.msra.mxu0 0.0
        %1703 = vmatpush.xpose.msra.mxu0 0.0
        %1704 = vmatpush.xpose.msra.mxu0 0.0
        %1705 = vmatpush.xpose.msra.mxu0 0.0
        %1706 = vmatpush.xpose.msra.mxu0 0.0
        %1707 = vmatpush.xpose.msra.mxu0 0.0
        %1708 = vmatpush.xpose.msra.mxu0 0.0
        %1709 = vmatpush.xpose.msra.mxu0 0.0
        %1710 = vmatpush.xpose.msra.mxu0 0.0
        %1711 = vmatpush.xpose.msra.mxu0 0.0
        %1712 = vmatpush.xpose.msra.mxu0 0.0
        %1713 = vmatpush.xpose.msra.mxu0 %v1696
        %1714 = vmatmul.f32.gmra.mxu0 %v1694
        %v1715 = vpop.f32.mrf.mxu0
        %v1716 = vadd.f32 0.0, %v1715
        %1717 = vdwg.mxu0
        %1718 = vrot.lane.b32.xlu0 %v1687, 96
        %v1719 = vpop.permute.xlu0 %1718
        %v1720 = vsel %vm632, %v1687, 0
        %v1722 = vsel %vm632, %v1719, 0
        %1724 = vmatpush.xpose.msra.mxu0 0.0
        %1725 = vmatpush.xpose.msra.mxu0 0.0
        %1726 = vmatpush.xpose.msra.mxu0 0.0
        %1727 = vmatpush.xpose.msra.mxu0 0.0
        %1728 = vmatpush.xpose.msra.mxu0 0.0
        %1729 = vmatpush.xpose.msra.mxu0 0.0
        %1730 = vmatpush.xpose.msra.mxu0 0.0
        %1731 = vmatpush.xpose.msra.mxu0 0.0
        %1732 = vmatpush.xpose.msra.mxu0 0.0
        %1733 = vmatpush.xpose.msra.mxu0 0.0
        %1734 = vmatpush.xpose.msra.mxu0 0.0
        %1735 = vmatpush.xpose.msra.mxu0 0.0
        %1736 = vmatpush.xpose.msra.mxu0 0.0
        %1737 = vmatpush.xpose.msra.mxu0 0.0
        %1738 = vmatpush.xpose.msra.mxu0 0.0
        %1739 = vmatpush.xpose.msra.mxu0 %v1722
        %1740 = vmatmul.f32.gmra.mxu0 %v1720
        %v1741 = vpop.f32.mrf.mxu0
        %v1742 = vadd.f32 0.0, %v1741
        %1743 = vdwg.mxu0
        %1744 = vrot.lane.b32.xlu0 %v1689, 96
        %v1745 = vpop.permute.xlu0 %1744
        %v1746 = vsel %vm632, %v1689, 0
        %v1748 = vsel %vm632, %v1745, 0
        %1750 = vmatpush.xpose.msra.mxu0 0.0
        %1751 = vmatpush.xpose.msra.mxu0 0.0
        %1752 = vmatpush.xpose.msra.mxu0 0.0
        %1753 = vmatpush.xpose.msra.mxu0 0.0
        %1754 = vmatpush.xpose.msra.mxu0 0.0
        %1755 = vmatpush.xpose.msra.mxu0 0.0
        %1756 = vmatpush.xpose.msra.mxu0 0.0
        %1757 = vmatpush.xpose.msra.mxu0 0.0
        %1758 = vmatpush.xpose.msra.mxu0 0.0
        %1759 = vmatpush.xpose.msra.mxu0 0.0
        %1760 = vmatpush.xpose.msra.mxu0 0.0
        %1761 = vmatpush.xpose.msra.mxu0 0.0
        %1762 = vmatpush.xpose.msra.mxu0 0.0
        %1763 = vmatpush.xpose.msra.mxu0 0.0
        %1764 = vmatpush.xpose.msra.mxu0 0.0
        %1765 = vmatpush.xpose.msra.mxu0 %v1748
        %1766 = vmatmul.f32.gmra.mxu0 %v1746
        %v1767 = vpop.f32.mrf.mxu0
        %v1768 = vadd.f32 0.0, %v1767
        %1769 = vdwg.mxu0
        %1770 = vrot.lane.b32.xlu0 %v1691, 96
        %v1771 = vpop.permute.xlu0 %1770
        %v1772 = vsel %vm632, %v1691, 0
        %v1774 = vsel %vm632, %v1771, 0
        %1776 = vmatpush.xpose.msra.mxu0 0.0
        %1777 = vmatpush.xpose.msra.mxu0 0.0
        %1778 = vmatpush.xpose.msra.mxu0 0.0
        %1779 = vmatpush.xpose.msra.mxu0 0.0
        %1780 = vmatpush.xpose.msra.mxu0 0.0
        %1781 = vmatpush.xpose.msra.mxu0 0.0
        %1782 = vmatpush.xpose.msra.mxu0 0.0
        %1783 = vmatpush.xpose.msra.mxu0 0.0
        %1784 = vmatpush.xpose.msra.mxu0 0.0
        %1785 = vmatpush.xpose.msra.mxu0 0.0
        %1786 = vmatpush.xpose.msra.mxu0 0.0
        %1787 = vmatpush.xpose.msra.mxu0 0.0
        %1788 = vmatpush.xpose.msra.mxu0 0.0
        %1789 = vmatpush.xpose.msra.mxu0 0.0
        %1790 = vmatpush.xpose.msra.mxu0 0.0
        %1791 = vmatpush.xpose.msra.mxu0 %v1774
        %1792 = vmatmul.f32.gmra.mxu0 %v1772
        %v1793 = vpop.f32.mrf.mxu0
        %v1794 = vadd.f32 0.0, %v1793
        %1795 = vdwg.mxu0
        %v1796 = vmul.f32 %v1716, 0.35355338
        %v1797 = vmul.f32 %v1742, 0.35355338
        %v1798 = vmul.f32 %v1768, 0.35355338
        %v1799 = vmul.f32 %v1794, 0.35355338
        %v1800 = vadd.f32 %v1796, %v1634
        %v1801 = vadd.f32 %v1797, %v1634
        %v1802 = vadd.f32 %v1798, %v1634
        %v1803 = vadd.f32 %v1799, %v1634
        %v1804 = vsel %vm632, %v1800, -inf
        %1805 = vmax.xlane.f32.xlu0 %v1804
        %v1806 = vpop.xlane.xlu0 %1805
        %v1807 = vsel %vm632, %v1801, -inf
        %1808 = vmax.xlane.f32.xlu0 %v1807
        %v1809 = vpop.xlane.xlu0 %1808
        %v1810 = vsel %vm632, %v1802, -inf
        %1811 = vmax.xlane.f32.xlu0 %v1810
        %v1812 = vpop.xlane.xlu0 %1811
        %v1813 = vsel %vm632, %v1803, -inf
        %1814 = vmax.xlane.f32.xlu0 %v1813
        %v1815 = vpop.xlane.xlu0 %1814
        %v1816 = vsub.f32 %v1800, %v1806
        %v1817 = vsub.f32 %v1801, %v1809
        %v1818 = vsub.f32 %v1802, %v1812
        %v1819 = vsub.f32 %v1803, %v1815
        %v1820 = vmul.f32 %v1816, 1.442695
        %v1821 = vpow.pop %v1820
        %v1822 = vmul.f32 %v1817, 1.442695
        %v1823 = vpow.pop %v1822
        %v1824 = vmul.f32 %v1818, 1.442695
        %v1825 = vpow.pop %v1824
        %v1826 = vmul.f32 %v1819, 1.442695
        %v1827 = vpow.pop %v1826
        %v1828 = vsel %vm632, %v1821, 0.0
        %1829 = vadd.xlane.f32.xlu0 %v1828
        %v1830 = vpop.xlane.xlu0 %1829
        %v1831 = vsel %vm632, %v1823, 0.0
        %1832 = vadd.xlane.f32.xlu0 %v1831
        %v1833 = vpop.xlane.xlu0 %1832
        %v1834 = vsel %vm632, %v1825, 0.0
        %1835 = vadd.xlane.f32.xlu0 %v1834
        %v1836 = vpop.xlane.xlu0 %1835
        %v1837 = vsel %vm632, %v1827, 0.0
        %1838 = vadd.xlane.f32.xlu0 %v1837
        %v1839 = vpop.xlane.xlu0 %1838
        %v1840 = vrcp.pop %v1830
        %v1841 = vmul.f32 %v1830, %v1840
        %v1842 = vsub.f32 1.0, %v1841
        %v1843 = vmul.f32 %v1840, %v1842
        %v1844 = vadd.f32 %v1840, %v1843
        %vm1845 = vweird.f32 %v1830
        %vm1846 = vweird.f32 %v1840
        %vm1847 = vmor %vm1845, %vm1846
        %v1848 = vsel %vm1847, %v1840, %v1844
        %v1849 = vand.u32 2147483647, %v1830
        %vm1850 = vcmp.eq.f32.partialorder %v1849, 8.507059e+37
        %v1851 = vand.u32 %v1830, 2147483648
        %v1852 = vor.u32 1.1754944e-38, %v1851
        %v1853 = vsel %vm1850, %v1852, %v1848
        %v1854 = vmul.f32 %v1821, %v1853
        %v1855 = vrcp.pop %v1833
        %v1856 = vmul.f32 %v1833, %v1855
        %v1857 = vsub.f32 1.0, %v1856
        %v1858 = vmul.f32 %v1855, %v1857
        %v1859 = vadd.f32 %v1855, %v1858
        %vm1860 = vweird.f32 %v1833
        %vm1861 = vweird.f32 %v1855
        %vm1862 = vmor %vm1860, %vm1861
        %v1863 = vsel %vm1862, %v1855, %v1859
        %v1864 = vand.u32 2147483647, %v1833
        %vm1865 = vcmp.eq.f32.partialorder %v1864, 8.507059e+37
        %v1866 = vand.u32 %v1833, 2147483648
        %v1867 = vor.u32 1.1754944e-38, %v1866
        %v1868 = vsel %vm1865, %v1867, %v1863
        %v1869 = vmul.f32 %v1823, %v1868
        %v1870 = vrcp.pop %v1836
        %v1871 = vmul.f32 %v1836, %v1870
        %v1872 = vsub.f32 1.0, %v1871
        %v1873 = vmul.f32 %v1870, %v1872
        %v1874 = vadd.f32 %v1870, %v1873
        %vm1875 = vweird.f32 %v1836
        %vm1876 = vweird.f32 %v1870
        %vm1877 = vmor %vm1875, %vm1876
        %v1878 = vsel %vm1877, %v1870, %v1874
        %v1879 = vand.u32 2147483647, %v1836
        %vm1880 = vcmp.eq.f32.partialorder %v1879, 8.507059e+37
        %v1881 = vand.u32 %v1836, 2147483648
        %v1882 = vor.u32 1.1754944e-38, %v1881
        %v1883 = vsel %vm1880, %v1882, %v1878
        %v1884 = vmul.f32 %v1825, %v1883
        %v1885 = vrcp.pop %v1839
        %v1886 = vmul.f32 %v1839, %v1885
        %v1887 = vsub.f32 1.0, %v1886
        %v1888 = vmul.f32 %v1885, %v1887
        %v1889 = vadd.f32 %v1885, %v1888
        %vm1890 = vweird.f32 %v1839
        %vm1891 = vweird.f32 %v1885
        %vm1892 = vmor %vm1890, %vm1891
        %v1893 = vsel %vm1892, %v1885, %v1889
        %v1894 = vand.u32 2147483647, %v1839
        %vm1895 = vcmp.eq.f32.partialorder %v1894, 8.507059e+37
        %v1896 = vand.u32 %v1839, 2147483648
        %v1897 = vor.u32 1.1754944e-38, %v1896
        %v1898 = vsel %vm1895, %v1897, %v1893
        %v1899 = vmul.f32 %v1827, %v1898
        %1900 = vrot.lane.b32.xlu0 %v1683, 64
        %v1901 = vpop.permute.xlu0 %1900
        %v1904 = vsel %vm632, %v1854, 0
        %1906 = vmatpush.msra.mxu0 0.0
        %1907 = vmatpush.msra.mxu0 0.0
        %1908 = vmatpush.msra.mxu0 0.0
        %1909 = vmatpush.msra.mxu0 0.0
        %1910 = vmatpush.msra.mxu0 0.0
        %1911 = vmatpush.msra.mxu0 0.0
        %1912 = vmatpush.msra.mxu0 0.0
        %1913 = vmatpush.msra.mxu0 0.0
        %1914 = vmatpush.msra.mxu0 0.0
        %1915 = vmatpush.msra.mxu0 0.0
        %1916 = vmatpush.msra.mxu0 0.0
        %1917 = vmatpush.msra.mxu0 0.0
        %1918 = vmatpush.msra.mxu0 0.0
        %1919 = vmatpush.msra.mxu0 0.0
        %1920 = vmatpush.msra.mxu0 0.0
        %1921 = vmatpush.msra.mxu0 %v1901
        %1922 = vmatmul.f32.gmra.mxu0 %v1904
        %v1923 = vpop.f32.mrf.mxu0
        %v1924 = vadd.f32 0.0, %v1923
        %1925 = vdwg.mxu0
        %1926 = vrot.lane.b32.xlu0 %v1687, 64
        %v1927 = vpop.permute.xlu0 %1926
        %v1930 = vsel %vm632, %v1869, 0
        %1932 = vmatpush.msra.mxu0 0.0
        %1933 = vmatpush.msra.mxu0 0.0
        %1934 = vmatpush.msra.mxu0 0.0
        %1935 = vmatpush.msra.mxu0 0.0
        %1936 = vmatpush.msra.mxu0 0.0
        %1937 = vmatpush.msra.mxu0 0.0
        %1938 = vmatpush.msra.mxu0 0.0
        %1939 = vmatpush.msra.mxu0 0.0
        %1940 = vmatpush.msra.mxu0 0.0
        %1941 = vmatpush.msra.mxu0 0.0
        %1942 = vmatpush.msra.mxu0 0.0
        %1943 = vmatpush.msra.mxu0 0.0
        %1944 = vmatpush.msra.mxu0 0.0
        %1945 = vmatpush.msra.mxu0 0.0
        %1946 = vmatpush.msra.mxu0 0.0
        %1947 = vmatpush.msra.mxu0 %v1927
        %1948 = vmatmul.f32.gmra.mxu0 %v1930
        %v1949 = vpop.f32.mrf.mxu0
        %v1950 = vadd.f32 0.0, %v1949
        %1951 = vdwg.mxu0
        %1952 = vrot.lane.b32.xlu0 %v1689, 64
        %v1953 = vpop.permute.xlu0 %1952
        %v1956 = vsel %vm632, %v1884, 0
        %1958 = vmatpush.msra.mxu0 0.0
        %1959 = vmatpush.msra.mxu0 0.0
        %1960 = vmatpush.msra.mxu0 0.0
        %1961 = vmatpush.msra.mxu0 0.0
        %1962 = vmatpush.msra.mxu0 0.0
        %1963 = vmatpush.msra.mxu0 0.0
        %1964 = vmatpush.msra.mxu0 0.0
        %1965 = vmatpush.msra.mxu0 0.0
        %1966 = vmatpush.msra.mxu0 0.0
        %1967 = vmatpush.msra.mxu0 0.0
        %1968 = vmatpush.msra.mxu0 0.0
        %1969 = vmatpush.msra.mxu0 0.0
        %1970 = vmatpush.msra.mxu0 0.0
        %1971 = vmatpush.msra.mxu0 0.0
        %1972 = vmatpush.msra.mxu0 0.0
        %1973 = vmatpush.msra.mxu0 %v1953
        %1974 = vmatmul.f32.gmra.mxu0 %v1956
        %v1975 = vpop.f32.mrf.mxu0
        %v1976 = vadd.f32 0.0, %v1975
        %1977 = vdwg.mxu0
        %1978 = vrot.lane.b32.xlu0 %v1691, 64
        %v1979 = vpop.permute.xlu0 %1978
        %v1982 = vsel %vm632, %v1899, 0
        %1984 = vmatpush.msra.mxu0 0.0
        %1985 = vmatpush.msra.mxu0 0.0
        %1986 = vmatpush.msra.mxu0 0.0
        %1987 = vmatpush.msra.mxu0 0.0
        %1988 = vmatpush.msra.mxu0 0.0
        %1989 = vmatpush.msra.mxu0 0.0
        %1990 = vmatpush.msra.mxu0 0.0
        %1991 = vmatpush.msra.mxu0 0.0
        %1992 = vmatpush.msra.mxu0 0.0
        %1993 = vmatpush.msra.mxu0 0.0
        %1994 = vmatpush.msra.mxu0 0.0
        %1995 = vmatpush.msra.mxu0 0.0
        %1996 = vmatpush.msra.mxu0 0.0
        %1997 = vmatpush.msra.mxu0 0.0
        %1998 = vmatpush.msra.mxu0 0.0
        %1999 = vmatpush.msra.mxu0 %v1979
        %2000 = vmatmul.f32.gmra.mxu0 %v1982
        %v2001 = vpop.f32.mrf.mxu0
        %v2002 = vadd.f32 0.0, %v2001
        %2003 = vdwg.mxu0
        %2005 = vrot.lane.b32.xlu0 %v1950, 8
        %v2006 = vpop.permute.xlu0 %2005
        %2009 = vrot.lane.b32.xlu0 %v1976, 16
        %v2010 = vpop.permute.xlu0 %2009
        %2013 = vrot.lane.b32.xlu0 %v2002, 24
        %v2014 = vpop.permute.xlu0 %2013
        %v2016 = vsel %vm632, %v1924, %v2006
        %v2017 = vsel %vm956, %v2016, %v2010
        %v2018 = vsel %vm958, %v2017, %v2014
        %2019 = vst.msk [vmem:[%s543] sm:$0xff] %vm632, %v1854
        %2020 = vst.msk [vmem:[%s543 + $0x8] sm:$0xff] %vm632, %v1869
        %2021 = vst.msk [vmem:[%s543 + $0x10] sm:$0xff] %vm632, %v1884
        %2022 = vst.msk [vmem:[%s543 + $0x18] sm:$0xff] %vm632, %v1899
        %2027 = vrot.lane.b32.xlu0 %v1636, 32
        %v2028 = vpop.permute.xlu0 %2027
        %2029 = vrot.lane.b32.xlu0 %v1637, 32
        %v2030 = vpop.permute.xlu0 %2029
        %2031 = vrot.lane.b32.xlu0 %v1638, 32
        %v2032 = vpop.permute.xlu0 %2031
        %2033 = vrot.lane.b32.xlu0 %v1639, 32
        %v2034 = vpop.permute.xlu0 %2033
        %v2040 = vsel %vm599, %v2018, 0
        %2042 = vmatpush.msra.mxu0 0.0
        %2043 = vmatpush.msra.mxu0 0.0
        %2044 = vmatpush.msra.mxu0 0.0
        %2045 = vmatpush.msra.mxu0 0.0
        %2046 = vmatpush.msra.mxu0 0.0
        %2047 = vmatpush.msra.mxu0 0.0
        %2048 = vmatpush.msra.mxu0 0.0
        %2049 = vmatpush.msra.mxu0 0.0
        %2050 = vmatpush.msra.mxu0 0.0
        %2051 = vmatpush.msra.mxu0 0.0
        %2052 = vmatpush.msra.mxu0 0.0
        %2053 = vmatpush.msra.mxu0 0.0
        %2054 = vmatpush.msra.mxu0 %v2034
        %2055 = vmatpush.msra.mxu0 %v2032
        %2056 = vmatpush.msra.mxu0 %v2030
        %2057 = vmatpush.msra.mxu0 %v2028
        %2058 = vmatmul.f32.gmra.mxu0 %v2040
        %v2059 = vpop.f32.mrf.mxu0
        %v2060 = vadd.f32 %v1633, %v2059
        %2061 = vdwg.mxu0
        %v2062 = vsel %vm599, %v2060, 0.0
        %2063 = vadd.xlane.f32.xlu0 %v2062
        %v2064 = vpop.xlane.xlu0 %2063
        %v2065 = vmul.f32 %v2064, %v1012
        %v2066 = vsub.f32 %v2060, %v2065
        %v2067 = vmul.f32 %v2066, %v2066
        %v2068 = vsel %vm599, %v2067, 0.0
        %2069 = vadd.xlane.f32.xlu0 %v2068
        %v2070 = vpop.xlane.xlu0 %2069
        %v2071 = vmul.f32 %v2070, %v1012
        %v2072 = vadd.f32 %v2071, 1e-05
        %v2073 = vrsqrt.pop %v2072
        %v2074 = vmul.f32 %v2073, %v2072
        %v2075 = vmul.f32 %v2074, %v2073
        %v2076 = vmul.f32 0.5, %v2075
        %v2077 = vsub.f32 1.5, %v2076
        %v2078 = vmul.f32 %v2073, %v2077
        %vm2079 = vweird.f32 %v2072
        %vm2080 = vweird.f32 %v2073
        %vm2081 = vmor %vm2079, %vm2080
        %v2082 = vsel %vm2081, %v2073, %v2078
        %v2083 = vmul.f32 %v2066, %v2082
        %v2084 = vperm.slane %v1656, 0
        %v2085 = vmul.f32 %v2083, %v2084
        %v2086 = vperm.slane %v1657, 0
        %v2087 = vadd.f32 %v2085, %v2086
        %v2089 = vsel %vm599, %v2087, 0
        %2091 = vmatpush.msra.mxu0 0.0
        %2092 = vmatpush.msra.mxu0 0.0
        %2093 = vmatpush.msra.mxu0 0.0
        %2094 = vmatpush.msra.mxu0 0.0
        %2095 = vmatpush.msra.mxu0 0.0
        %2096 = vmatpush.msra.mxu0 0.0
        %2097 = vmatpush.msra.mxu0 0.0
        %2098 = vmatpush.msra.mxu0 0.0
        %2099 = vmatpush.msra.mxu0 0.0
        %2100 = vmatpush.msra.mxu0 0.0
        %2101 = vmatpush.msra.mxu0 0.0
        %2102 = vmatpush.msra.mxu0 0.0
        %2103 = vmatpush.msra.mxu0 %v1643
        %2104 = vmatpush.msra.mxu0 %v1642
        %2105 = vmatpush.msra.mxu0 %v1641
        %2106 = vmatpush.msra.mxu0 %v1640
        %2107 = vmatmul.f32.gmra.mxu0 %v2089
        %v2108 = vpop.f32.mrf.mxu0
        %v2109 = vadd.f32 0.0, %v2108
        %2110 = vdwg.mxu0
        %2115 = vrot.lane.b32.xlu0 %v1640, 96
        %v2116 = vpop.permute.xlu0 %2115
        %2117 = vrot.lane.b32.xlu0 %v1641, 96
        %v2118 = vpop.permute.xlu0 %2117
        %2119 = vrot.lane.b32.xlu0 %v1642, 96
        %v2120 = vpop.permute.xlu0 %2119
        %2121 = vrot.lane.b32.xlu0 %v1643, 96
        %v2122 = vpop.permute.xlu0 %2121
        %v2128 = vsel %vm599, %v1632, 0
        %2130 = vmatpush.msra.mxu0 0.0
        %2131 = vmatpush.msra.mxu0 0.0
        %2132 = vmatpush.msra.mxu0 0.0
        %2133 = vmatpush.msra.mxu0 0.0
        %2134 = vmatpush.msra.mxu0 0.0
        %2135 = vmatpush.msra.mxu0 0.0
        %2136 = vmatpush.msra.mxu0 0.0
        %2137 = vmatpush.msra.mxu0 0.0
        %2138 = vmatpush.msra.mxu0 0.0
        %2139 = vmatpush.msra.mxu0 0.0
        %2140 = vmatpush.msra.mxu0 0.0
        %2141 = vmatpush.msra.mxu0 0.0
        %2142 = vmatpush.msra.mxu0 %v2122
        %2143 = vmatpush.msra.mxu0 %v2120
        %2144 = vmatpush.msra.mxu0 %v2118
        %2145 = vmatpush.msra.mxu0 %v2116
        %2146 = vmatmul.f32.gmra.mxu0 %v2128
        %v2147 = vpop.f32.mrf.mxu0
        %v2148 = vadd.f32 0.0, %v2147
        %2149 = vdwg.mxu0
        %2151 = vrot.lane.b32.xlu0 %v2109, 120
        %v2152 = vpop.permute.xlu0 %2151
        %2153 = vrot.lane.b32.xlu0 %v2109, 112
        %v2154 = vpop.permute.xlu0 %2153
        %2155 = vrot.lane.b32.xlu0 %v2109, 104
        %v2156 = vpop.permute.xlu0 %2155
        %2158 = vrot.lane.b32.xlu0 %v2148, 120
        %v2159 = vpop.permute.xlu0 %2158
        %2160 = vrot.lane.b32.xlu0 %v2148, 112
        %v2161 = vpop.permute.xlu0 %2160
        %2162 = vrot.lane.b32.xlu0 %v2148, 104
        %v2163 = vpop.permute.xlu0 %2162
        %v2164 = vsel %vm632, %v2109, 0
        %v2166 = vsel %vm632, %v2148, 0
        %2168 = vmatpush.xpose.msra.mxu0 0.0
        %2169 = vmatpush.xpose.msra.mxu0 0.0
        %2170 = vmatpush.xpose.msra.mxu0 0.0
        %2171 = vmatpush.xpose.msra.mxu0 0.0
        %2172 = vmatpush.xpose.msra.mxu0 0.0
        %2173 = vmatpush.xpose.msra.mxu0 0.0
        %2174 = vmatpush.xpose.msra.mxu0 0.0
        %2175 = vmatpush.xpose.msra.mxu0 0.0
        %2176 = vmatpush.xpose.msra.mxu0 0.0
        %2177 = vmatpush.xpose.msra.mxu0 0.0
        %2178 = vmatpush.xpose.msra.mxu0 0.0
        %2179 = vmatpush.xpose.msra.mxu0 0.0
        %2180 = vmatpush.xpose.msra.mxu0 0.0
        %2181 = vmatpush.xpose.msra.mxu0 0.0
        %2182 = vmatpush.xpose.msra.mxu0 0.0
        %2183 = vmatpush.xpose.msra.mxu0 %v2166
        %2184 = vmatmul.f32.gmra.mxu0 %v2164
        %v2185 = vpop.f32.mrf.mxu0
        %v2186 = vadd.f32 0.0, %v2185
        %2187 = vdwg.mxu0
        %v2188 = vsel %vm632, %v2152, 0
        %v2190 = vsel %vm632, %v2159, 0
        %2192 = vmatpush.xpose.msra.mxu0 0.0
        %2193 = vmatpush.xpose.msra.mxu0 0.0
        %2194 = vmatpush.xpose.msra.mxu0 0.0
        %2195 = vmatpush.xpose.msra.mxu0 0.0
        %2196 = vmatpush.xpose.msra.mxu0 0.0
        %2197 = vmatpush.xpose.msra.mxu0 0.0
        %2198 = vmatpush.xpose.msra.mxu0 0.0
        %2199 = vmatpush.xpose.msra.mxu0 0.0
        %2200 = vmatpush.xpose.msra.mxu0 0.0
        %2201 = vmatpush.xpose.msra.mxu0 0.0
        %2202 = vmatpush.xpose.msra.mxu0 0.0
        %2203 = vmatpush.xpose.msra.mxu0 0.0
        %2204 = vmatpush.xpose.msra.mxu0 0.0
        %2205 = vmatpush.xpose.msra.mxu0 0.0
        %2206 = vmatpush.xpose.msra.mxu0 0.0
        %2207 = vmatpush.xpose.msra.mxu0 %v2190
        %2208 = vmatmul.f32.gmra.mxu0 %v2188
        %v2209 = vpop.f32.mrf.mxu0
        %v2210 = vadd.f32 0.0, %v2209
        %2211 = vdwg.mxu0
        %v2212 = vsel %vm632, %v2154, 0
        %v2214 = vsel %vm632, %v2161, 0
        %2216 = vmatpush.xpose.msra.mxu0 0.0
        %2217 = vmatpush.xpose.msra.mxu0 0.0
        %2218 = vmatpush.xpose.msra.mxu0 0.0
        %2219 = vmatpush.xpose.msra.mxu0 0.0
        %2220 = vmatpush.xpose.msra.mxu0 0.0
        %2221 = vmatpush.xpose.msra.mxu0 0.0
        %2222 = vmatpush.xpose.msra.mxu0 0.0
        %2223 = vmatpush.xpose.msra.mxu0 0.0
        %2224 = vmatpush.xpose.msra.mxu0 0.0
        %2225 = vmatpush.xpose.msra.mxu0 0.0
        %2226 = vmatpush.xpose.msra.mxu0 0.0
        %2227 = vmatpush.xpose.msra.mxu0 0.0
        %2228 = vmatpush.xpose.msra.mxu0 0.0
        %2229 = vmatpush.xpose.msra.mxu0 0.0
        %2230 = vmatpush.xpose.msra.mxu0 0.0
        %2231 = vmatpush.xpose.msra.mxu0 %v2214
        %2232 = vmatmul.f32.gmra.mxu0 %v2212
        %v2233 = vpop.f32.mrf.mxu0
        %v2234 = vadd.f32 0.0, %v2233
        %2235 = vdwg.mxu0
        %v2236 = vsel %vm632, %v2156, 0
        %v2238 = vsel %vm632, %v2163, 0
        %2240 = vmatpush.xpose.msra.mxu0 0.0
        %2241 = vmatpush.xpose.msra.mxu0 0.0
        %2242 = vmatpush.xpose.msra.mxu0 0.0
        %2243 = vmatpush.xpose.msra.mxu0 0.0
        %2244 = vmatpush.xpose.msra.mxu0 0.0
        %2245 = vmatpush.xpose.msra.mxu0 0.0
        %2246 = vmatpush.xpose.msra.mxu0 0.0
        %2247 = vmatpush.xpose.msra.mxu0 0.0
        %2248 = vmatpush.xpose.msra.mxu0 0.0
        %2249 = vmatpush.xpose.msra.mxu0 0.0
        %2250 = vmatpush.xpose.msra.mxu0 0.0
        %2251 = vmatpush.xpose.msra.mxu0 0.0
        %2252 = vmatpush.xpose.msra.mxu0 0.0
        %2253 = vmatpush.xpose.msra.mxu0 0.0
        %2254 = vmatpush.xpose.msra.mxu0 0.0
        %2255 = vmatpush.xpose.msra.mxu0 %v2238
        %2256 = vmatmul.f32.gmra.mxu0 %v2236
        %v2257 = vpop.f32.mrf.mxu0
        %v2258 = vadd.f32 0.0, %v2257
        %2259 = vdwg.mxu0
        %v2260 = vmul.f32 %v2186, 0.35355338
        %v2261 = vmul.f32 %v2210, 0.35355338
        %v2262 = vmul.f32 %v2234, 0.35355338
        %v2263 = vmul.f32 %v2258, 0.35355338
        %v2264 = vadd.f32 %v2260, %v1635
        %v2265 = vadd.f32 %v2261, %v1635
        %v2266 = vadd.f32 %v2262, %v1635
        %v2267 = vadd.f32 %v2263, %v1635
        %v2268 = vsel %vm632, %v2264, -inf
        %2269 = vmax.xlane.f32.xlu0 %v2268
        %v2270 = vpop.xlane.xlu0 %2269
        %v2271 = vsel %vm632, %v2265, -inf
        %2272 = vmax.xlane.f32.xlu0 %v2271
        %v2273 = vpop.xlane.xlu0 %2272
        %v2274 = vsel %vm632, %v2266, -inf
        %2275 = vmax.xlane.f32.xlu0 %v2274
        %v2276 = vpop.xlane.xlu0 %2275
        %v2277 = vsel %vm632, %v2267, -inf
        %2278 = vmax.xlane.f32.xlu0 %v2277
        %v2279 = vpop.xlane.xlu0 %2278
        %v2280 = vsub.f32 %v2264, %v2270
        %v2281 = vsub.f32 %v2265, %v2273
        %v2282 = vsub.f32 %v2266, %v2276
        %v2283 = vsub.f32 %v2267, %v2279
        %v2284 = vmul.f32 %v2280, 1.442695
        %v2285 = vpow.pop %v2284
        %v2286 = vmul.f32 %v2281, 1.442695
        %v2287 = vpow.pop %v2286
        %v2288 = vmul.f32 %v2282, 1.442695
        %v2289 = vpow.pop %v2288
        %v2290 = vmul.f32 %v2283, 1.442695
        %v2291 = vpow.pop %v2290
        %v2292 = vsel %vm632, %v2285, 0.0
        %2293 = vadd.xlane.f32.xlu0 %v2292
        %v2294 = vpop.xlane.xlu0 %2293
        %v2295 = vsel %vm632, %v2287, 0.0
        %2296 = vadd.xlane.f32.xlu0 %v2295
        %v2297 = vpop.xlane.xlu0 %2296
        %v2298 = vsel %vm632, %v2289, 0.0
        %2299 = vadd.xlane.f32.xlu0 %v2298
        %v2300 = vpop.xlane.xlu0 %2299
        %v2301 = vsel %vm632, %v2291, 0.0
        %2302 = vadd.xlane.f32.xlu0 %v2301
        %v2303 = vpop.xlane.xlu0 %2302
        %v2304 = vrcp.pop %v2294
        %v2305 = vmul.f32 %v2294, %v2304
        %v2306 = vsub.f32 1.0, %v2305
        %v2307 = vmul.f32 %v2304, %v2306
        %v2308 = vadd.f32 %v2304, %v2307
        %vm2309 = vweird.f32 %v2294
        %vm2310 = vweird.f32 %v2304
        %vm2311 = vmor %vm2309, %vm2310
        %v2312 = vsel %vm2311, %v2304, %v2308
        %v2313 = vand.u32 2147483647, %v2294
        %vm2314 = vcmp.eq.f32.partialorder %v2313, 8.507059e+37
        %v2315 = vand.u32 %v2294, 2147483648
        %v2316 = vor.u32 1.1754944e-38, %v2315
        %v2317 = vsel %vm2314, %v2316, %v2312
        %v2318 = vmul.f32 %v2285, %v2317
        %v2319 = vrcp.pop %v2297
        %v2320 = vmul.f32 %v2297, %v2319
        %v2321 = vsub.f32 1.0, %v2320
        %v2322 = vmul.f32 %v2319, %v2321
        %v2323 = vadd.f32 %v2319, %v2322
        %vm2324 = vweird.f32 %v2297
        %vm2325 = vweird.f32 %v2319
        %vm2326 = vmor %vm2324, %vm2325
        %v2327 = vsel %vm2326, %v2319, %v2323
        %v2328 = vand.u32 2147483647, %v2297
        %vm2329 = vcmp.eq.f32.partialorder %v2328, 8.507059e+37
        %v2330 = vand.u32 %v2297, 2147483648
        %v2331 = vor.u32 1.1754944e-38, %v2330
        %v2332 = vsel %vm2329, %v2331, %v2327
        %v2333 = vmul.f32 %v2287, %v2332
        %v2334 = vrcp.pop %v2300
        %v2335 = vmul.f32 %v2300, %v2334
        %v2336 = vsub.f32 1.0, %v2335
        %v2337 = vmul.f32 %v2334, %v2336
        %v2338 = vadd.f32 %v2334, %v2337
        %vm2339 = vweird.f32 %v2300
        %vm2340 = vweird.f32 %v2334
        %vm2341 = vmor %vm2339, %vm2340
        %v2342 = vsel %vm2341, %v2334, %v2338
        %v2343 = vand.u32 2147483647, %v2300
        %vm2344 = vcmp.eq.f32.partialorder %v2343, 8.507059e+37
        %v2345 = vand.u32 %v2300, 2147483648
        %v2346 = vor.u32 1.1754944e-38, %v2345
        %v2347 = vsel %vm2344, %v2346, %v2342
        %v2348 = vmul.f32 %v2289, %v2347
        %v2349 = vrcp.pop %v2303
        %v2350 = vmul.f32 %v2303, %v2349
        %v2351 = vsub.f32 1.0, %v2350
        %v2352 = vmul.f32 %v2349, %v2351
        %v2353 = vadd.f32 %v2349, %v2352
        %vm2354 = vweird.f32 %v2303
        %vm2355 = vweird.f32 %v2349
        %vm2356 = vmor %vm2354, %vm2355
        %v2357 = vsel %vm2356, %v2349, %v2353
        %v2358 = vand.u32 2147483647, %v2303
        %vm2359 = vcmp.eq.f32.partialorder %v2358, 8.507059e+37
        %v2360 = vand.u32 %v2303, 2147483648
        %v2361 = vor.u32 1.1754944e-38, %v2360
        %v2362 = vsel %vm2359, %v2361, %v2357
        %v2363 = vmul.f32 %v2291, %v2362
        %2364 = vrot.lane.b32.xlu0 %v2148, 96
        %v2365 = vpop.permute.xlu0 %2364
        %v2368 = vsel %vm632, %v2318, 0
        %2370 = vmatpush.msra.mxu0 0.0
        %2371 = vmatpush.msra.mxu0 0.0
        %2372 = vmatpush.msra.mxu0 0.0
        %2373 = vmatpush.msra.mxu0 0.0
        %2374 = vmatpush.msra.mxu0 0.0
        %2375 = vmatpush.msra.mxu0 0.0
        %2376 = vmatpush.msra.mxu0 0.0
        %2377 = vmatpush.msra.mxu0 0.0
        %2378 = vmatpush.msra.mxu0 0.0
        %2379 = vmatpush.msra.mxu0 0.0
        %2380 = vmatpush.msra.mxu0 0.0
        %2381 = vmatpush.msra.mxu0 0.0
        %2382 = vmatpush.msra.mxu0 0.0
        %2383 = vmatpush.msra.mxu0 0.0
        %2384 = vmatpush.msra.mxu0 0.0
        %2385 = vmatpush.msra.mxu0 %v2365
        %2386 = vmatmul.f32.gmra.mxu0 %v2368
        %v2387 = vpop.f32.mrf.mxu0
        %v2388 = vadd.f32 0.0, %v2387
        %2389 = vdwg.mxu0
        %2390 = vrot.lane.b32.xlu0 %v2159, 96
        %v2391 = vpop.permute.xlu0 %2390
        %v2394 = vsel %vm632, %v2333, 0
        %2396 = vmatpush.msra.mxu0 0.0
        %2397 = vmatpush.msra.mxu0 0.0
        %2398 = vmatpush.msra.mxu0 0.0
        %2399 = vmatpush.msra.mxu0 0.0
        %2400 = vmatpush.msra.mxu0 0.0
        %2401 = vmatpush.msra.mxu0 0.0
        %2402 = vmatpush.msra.mxu0 0.0
        %2403 = vmatpush.msra.mxu0 0.0
        %2404 = vmatpush.msra.mxu0 0.0
        %2405 = vmatpush.msra.mxu0 0.0
        %2406 = vmatpush.msra.mxu0 0.0
        %2407 = vmatpush.msra.mxu0 0.0
        %2408 = vmatpush.msra.mxu0 0.0
        %2409 = vmatpush.msra.mxu0 0.0
        %2410 = vmatpush.msra.mxu0 0.0
        %2411 = vmatpush.msra.mxu0 %v2391
        %2412 = vmatmul.f32.gmra.mxu0 %v2394
        %v2413 = vpop.f32.mrf.mxu0
        %v2414 = vadd.f32 0.0, %v2413
        %2415 = vdwg.mxu0
        %2416 = vrot.lane.b32.xlu0 %v2161, 96
        %v2417 = vpop.permute.xlu0 %2416
        %v2420 = vsel %vm632, %v2348, 0
        %2422 = vmatpush.msra.mxu0 0.0
        %2423 = vmatpush.msra.mxu0 0.0
        %2424 = vmatpush.msra.mxu0 0.0
        %2425 = vmatpush.msra.mxu0 0.0
        %2426 = vmatpush.msra.mxu0 0.0
        %2427 = vmatpush.msra.mxu0 0.0
        %2428 = vmatpush.msra.mxu0 0.0
        %2429 = vmatpush.msra.mxu0 0.0
        %2430 = vmatpush.msra.mxu0 0.0
        %2431 = vmatpush.msra.mxu0 0.0
        %2432 = vmatpush.msra.mxu0 0.0
        %2433 = vmatpush.msra.mxu0 0.0
        %2434 = vmatpush.msra.mxu0 0.0
        %2435 = vmatpush.msra.mxu0 0.0
        %2436 = vmatpush.msra.mxu0 0.0
        %2437 = vmatpush.msra.mxu0 %v2417
        %2438 = vmatmul.f32.gmra.mxu0 %v2420
        %v2439 = vpop.f32.mrf.mxu0
        %v2440 = vadd.f32 0.0, %v2439
        %2441 = vdwg.mxu0
        %2442 = vrot.lane.b32.xlu0 %v2163, 96
        %v2443 = vpop.permute.xlu0 %2442
        %v2446 = vsel %vm632, %v2363, 0
        %2448 = vmatpush.msra.mxu0 0.0
        %2449 = vmatpush.msra.mxu0 0.0
        %2450 = vmatpush.msra.mxu0 0.0
        %2451 = vmatpush.msra.mxu0 0.0
        %2452 = vmatpush.msra.mxu0 0.0
        %2453 = vmatpush.msra.mxu0 0.0
        %2454 = vmatpush.msra.mxu0 0.0
        %2455 = vmatpush.msra.mxu0 0.0
        %2456 = vmatpush.msra.mxu0 0.0
        %2457 = vmatpush.msra.mxu0 0.0
        %2458 = vmatpush.msra.mxu0 0.0
        %2459 = vmatpush.msra.mxu0 0.0
        %2460 = vmatpush.msra.mxu0 0.0
        %2461 = vmatpush.msra.mxu0 0.0
        %2462 = vmatpush.msra.mxu0 0.0
        %2463 = vmatpush.msra.mxu0 %v2443
        %2464 = vmatmul.f32.gmra.mxu0 %v2446
        %v2465 = vpop.f32.mrf.mxu0
        %v2466 = vadd.f32 0.0, %v2465
        %2467 = vdwg.mxu0
        %2469 = vrot.lane.b32.xlu0 %v2414, 8
        %v2470 = vpop.permute.xlu0 %2469
        %2473 = vrot.lane.b32.xlu0 %v2440, 16
        %v2474 = vpop.permute.xlu0 %2473
        %2477 = vrot.lane.b32.xlu0 %v2466, 24
        %v2478 = vpop.permute.xlu0 %2477
        %v2480 = vsel %vm632, %v2388, %v2470
        %v2481 = vsel %vm956, %v2480, %v2474
        %v2482 = vsel %vm958, %v2481, %v2478
        %2483 = vst.msk [vmem:[%s549] sm:$0xff] %vm632, %v2318
        %2484 = vst.msk [vmem:[%s549 + $0x8] sm:$0xff] %vm632, %v2333
        %2485 = vst.msk [vmem:[%s549 + $0x10] sm:$0xff] %vm632, %v2348
        %2486 = vst.msk [vmem:[%s549 + $0x18] sm:$0xff] %vm632, %v2363
        %2487 = vrot.lane.b32.xlu0 %v1640, 32
        %v2488 = vpop.permute.xlu0 %2487
        %2489 = vrot.lane.b32.xlu0 %v1641, 32
        %v2490 = vpop.permute.xlu0 %2489
        %2491 = vrot.lane.b32.xlu0 %v1642, 32
        %v2492 = vpop.permute.xlu0 %2491
        %2493 = vrot.lane.b32.xlu0 %v1643, 32
        %v2494 = vpop.permute.xlu0 %2493
        %v2500 = vsel %vm599, %v2482, 0
        %2502 = vmatpush.msra.mxu0 0.0
        %2503 = vmatpush.msra.mxu0 0.0
        %2504 = vmatpush.msra.mxu0 0.0
        %2505 = vmatpush.msra.mxu0 0.0
        %2506 = vmatpush.msra.mxu0 0.0
        %2507 = vmatpush.msra.mxu0 0.0
        %2508 = vmatpush.msra.mxu0 0.0
        %2509 = vmatpush.msra.mxu0 0.0
        %2510 = vmatpush.msra.mxu0 0.0
        %2511 = vmatpush.msra.mxu0 0.0
        %2512 = vmatpush.msra.mxu0 0.0
        %2513 = vmatpush.msra.mxu0 0.0
        %2514 = vmatpush.msra.mxu0 %v2494
        %2515 = vmatpush.msra.mxu0 %v2492
        %2516 = vmatpush.msra.mxu0 %v2490
        %2517 = vmatpush.msra.mxu0 %v2488
        %2518 = vmatmul.f32.gmra.mxu0 %v2500
        %v2519 = vpop.f32.mrf.mxu0
        %v2520 = vadd.f32 %v2087, %v2519
        %2521 = vdwg.mxu0
        %v2522 = vsel %vm599, %v2520, 0.0
        %2523 = vadd.xlane.f32.xlu0 %v2522
        %v2524 = vpop.xlane.xlu0 %2523
        %v2525 = vmul.f32 %v2524, %v1012
        %v2526 = vsub.f32 %v2520, %v2525
        %v2527 = vmul.f32 %v2526, %v2526
        %v2528 = vsel %vm599, %v2527, 0.0
        %2529 = vadd.xlane.f32.xlu0 %v2528
        %v2530 = vpop.xlane.xlu0 %2529
        %v2531 = vmul.f32 %v2530, %v1012
        %v2532 = vadd.f32 %v2531, 1e-05
        %v2533 = vrsqrt.pop %v2532
        %v2534 = vmul.f32 %v2533, %v2532
        %v2535 = vmul.f32 %v2534, %v2533
        %v2536 = vmul.f32 0.5, %v2535
        %v2537 = vsub.f32 1.5, %v2536
        %v2538 = vmul.f32 %v2533, %v2537
        %vm2539 = vweird.f32 %v2532
        %vm2540 = vweird.f32 %v2533
        %vm2541 = vmor %vm2539, %vm2540
        %v2542 = vsel %vm2541, %v2533, %v2538
        %v2543 = vmul.f32 %v2526, %v2542
        %v2544 = vperm.slane %v1658, 0
        %v2545 = vmul.f32 %v2543, %v2544
        %v2546 = vperm.slane %v1659, 0
        %v2547 = vadd.f32 %v2545, %v2546
        %v2549 = vsel %vm599, %v2547, 0
        %2551 = vmatpush.msra.mxu0 0.0
        %2552 = vmatpush.msra.mxu0 0.0
        %2553 = vmatpush.msra.mxu0 0.0
        %2554 = vmatpush.msra.mxu0 0.0
        %2555 = vmatpush.msra.mxu0 0.0
        %2556 = vmatpush.msra.mxu0 0.0
        %2557 = vmatpush.msra.mxu0 0.0
        %2558 = vmatpush.msra.mxu0 0.0
        %2559 = vmatpush.msra.mxu0 0.0
        %2560 = vmatpush.msra.mxu0 0.0
        %2561 = vmatpush.msra.mxu0 0.0
        %2562 = vmatpush.msra.mxu0 0.0
        %2563 = vmatpush.msra.mxu0 %v1647
        %2564 = vmatpush.msra.mxu0 %v1646
        %2565 = vmatpush.msra.mxu0 %v1645
        %2566 = vmatpush.msra.mxu0 %v1644
        %2567 = vmatmul.f32.gmra.mxu0 %v2549
        %v2568 = vpop.f32.mrf.mxu0
        %v2569 = vadd.f32 0.0, %v2568
        %2570 = vdwg.mxu0
        %v2571 = vmax.f32 %v2569, 0.0
        %v2573 = vsel %vm1060, %v2571, 0
        %2575 = vmatpush.msra.mxu0 0.0
        %2576 = vmatpush.msra.mxu0 0.0
        %2577 = vmatpush.msra.mxu0 0.0
        %2578 = vmatpush.msra.mxu0 0.0
        %2579 = vmatpush.msra.mxu0 0.0
        %2580 = vmatpush.msra.mxu0 0.0
        %2581 = vmatpush.msra.mxu0 0.0
        %2582 = vmatpush.msra.mxu0 0.0
        %2583 = vmatpush.msra.mxu0 %v1655
        %2584 = vmatpush.msra.mxu0 %v1654
        %2585 = vmatpush.msra.mxu0 %v1653
        %2586 = vmatpush.msra.mxu0 %v1652
        %2587 = vmatpush.msra.mxu0 %v1651
        %2588 = vmatpush.msra.mxu0 %v1650
        %2589 = vmatpush.msra.mxu0 %v1649
        %2590 = vmatpush.msra.mxu0 %v1648
        %2591 = vmatmul.f32.gmra.mxu0 %v2573
        %v2592 = vpop.f32.mrf.mxu0
        %v2593 = vadd.f32 %v2547, %v2592
        %2594 = vdwg.mxu0
        %v2595 = vsel %vm599, %v2593, 0.0
        %2596 = vadd.xlane.f32.xlu0 %v2595
        %v2597 = vpop.xlane.xlu0 %2596
        %v2598 = vmul.f32 %v2597, %v1012
        %v2599 = vsub.f32 %v2593, %v2598
        %v2600 = vmul.f32 %v2599, %v2599
        %v2601 = vsel %vm599, %v2600, 0.0
        %2602 = vadd.xlane.f32.xlu0 %v2601
        %v2603 = vpop.xlane.xlu0 %2602
        %v2604 = vmul.f32 %v2603, %v1012
        %v2605 = vadd.f32 %v2604, 1e-05
        %v2606 = vrsqrt.pop %v2605
        %v2607 = vmul.f32 %v2606, %v2605
        %v2608 = vmul.f32 %v2607, %v2606
        %v2609 = vmul.f32 0.5, %v2608
        %v2610 = vsub.f32 1.5, %v2609
        %v2611 = vmul.f32 %v2606, %v2610
        %vm2612 = vweird.f32 %v2605
        %vm2613 = vweird.f32 %v2606
        %vm2614 = vmor %vm2612, %vm2613
        %v2615 = vsel %vm2614, %v2606, %v2611
        %v2616 = vmul.f32 %v2599, %v2615
        %v2617 = vperm.slane %v1660, 0
        %v2618 = vmul.f32 %v2616, %v2617
        %v2619 = vperm.slane %v1661, 0
        %v2620 = vadd.f32 %v2618, %v2619
        %s2621 = scalar_lea.vmem %s8, 96
        %v2622 = vld [vmem:[%s2621] sm:$0xff]
        %v2623 = vld [vmem:[%s2621 + $0x18] sm:$0xff]
        %v2624 = vld [vmem:[%s2621 + $0x30] sm:$0xff]
        %v2625 = vld [vmem:[%s2621 + $0x48] sm:$0xff]
        %v2626 = vld [vmem:[%s2621 + $0x8] sm:$0xff]
        %v2627 = vld [vmem:[%s2621 + $0x20] sm:$0xff]
        %v2628 = vld [vmem:[%s2621 + $0x38] sm:$0xff]
        %v2629 = vld [vmem:[%s2621 + $0x50] sm:$0xff]
        %v2630 = vld [vmem:[%s2621 + $0x10] sm:$0xff]
        %v2631 = vld [vmem:[%s2621 + $0x28] sm:$0xff]
        %v2632 = vld [vmem:[%s2621 + $0x40] sm:$0xff]
        %v2633 = vld [vmem:[%s2621 + $0x58] sm:$0xff]
        %s2634 = scalar_lea.vmem %s9, 64
        %v2635 = vld [vmem:[%s2634] sm:$0xff]
        %v2636 = vld [vmem:[%s2634 + $0x8] sm:$0xff]
        %v2637 = vld [vmem:[%s2634 + $0x10] sm:$0xff]
        %v2638 = vld [vmem:[%s2634 + $0x18] sm:$0xff]
        %v2639 = vld [vmem:[%s2634 + $0x20] sm:$0xff]
        %v2640 = vld [vmem:[%s2634 + $0x28] sm:$0xff]
        %v2641 = vld [vmem:[%s2634 + $0x30] sm:$0xff]
        %v2642 = vld [vmem:[%s2634 + $0x38] sm:$0xff]
        %s2643 = scalar_lea.vmem %s10, 8
        %v2644 = vld [vmem:[%s2643] sm:$0x1]
        %v2645 = vld [vmem:[%s2643 + $0x1] sm:$0x1]
        %v2646 = vld [vmem:[%s2643 + $0x2] sm:$0x1]
        %v2647 = vld [vmem:[%s2643 + $0x3] sm:$0x1]
        %v2648 = vld [vmem:[%s2643 + $0x4] sm:$0x1]
        %v2649 = vld [vmem:[%s2643 + $0x5] sm:$0x1]
        %v2651 = vsel %vm599, %v2620, 0
        %2653 = vmatpush.msra.mxu0 0.0
        %2654 = vmatpush.msra.mxu0 0.0
        %2655 = vmatpush.msra.mxu0 0.0
        %2656 = vmatpush.msra.mxu0 0.0
        %2657 = vmatpush.msra.mxu0 0.0
        %2658 = vmatpush.msra.mxu0 0.0
        %2659 = vmatpush.msra.mxu0 0.0
        %2660 = vmatpush.msra.mxu0 0.0
        %2661 = vmatpush.msra.mxu0 0.0
        %2662 = vmatpush.msra.mxu0 0.0
        %2663 = vmatpush.msra.mxu0 0.0
        %2664 = vmatpush.msra.mxu0 0.0
        %2665 = vmatpush.msra.mxu0 %v2625
        %2666 = vmatpush.msra.mxu0 %v2624
        %2667 = vmatpush.msra.mxu0 %v2623
        %2668 = vmatpush.msra.mxu0 %v2622
        %2669 = vmatmul.f32.gmra.mxu0 %v2651
        %v2670 = vpop.f32.mrf.mxu0
        %v2671 = vadd.f32 0.0, %v2670
        %2672 = vdwg.mxu0
        %2674 = vrot.lane.b32.xlu0 %v2671, 120
        %v2675 = vpop.permute.xlu0 %2674
        %2676 = vrot.lane.b32.xlu0 %v2671, 112
        %v2677 = vpop.permute.xlu0 %2676
        %2678 = vrot.lane.b32.xlu0 %v2671, 104
        %v2679 = vpop.permute.xlu0 %2678
        %2680 = vrot.lane.b32.xlu0 %v2671, 96
        %v2681 = vpop.permute.xlu0 %2680
        %v2682 = vsel %vm632, %v2671, 0
        %v2684 = vsel %vm632, %v2681, 0
        %2686 = vmatpush.xpose.msra.mxu0 0.0
        %2687 = vmatpush.xpose.msra.mxu0 0.0
        %2688 = vmatpush.xpose.msra.mxu0 0.0
        %2689 = vmatpush.xpose.msra.mxu0 0.0
        %2690 = vmatpush.xpose.msra.mxu0 0.0
        %2691 = vmatpush.xpose.msra.mxu0 0.0
        %2692 = vmatpush.xpose.msra.mxu0 0.0
        %2693 = vmatpush.xpose.msra.mxu0 0.0
        %2694 = vmatpush.xpose.msra.mxu0 0.0
        %2695 = vmatpush.xpose.msra.mxu0 0.0
        %2696 = vmatpush.xpose.msra.mxu0 0.0
        %2697 = vmatpush.xpose.msra.mxu0 0.0
        %2698 = vmatpush.xpose.msra.mxu0 0.0
        %2699 = vmatpush.xpose.msra.mxu0 0.0
        %2700 = vmatpush.xpose.msra.mxu0 0.0
        %2701 = vmatpush.xpose.msra.mxu0 %v2684
        %2702 = vmatmul.f32.gmra.mxu0 %v2682
        %v2703 = vpop.f32.mrf.mxu0
        %v2704 = vadd.f32 0.0, %v2703
        %2705 = vdwg.mxu0
        %2706 = vrot.lane.b32.xlu0 %v2675, 96
        %v2707 = vpop.permute.xlu0 %2706
        %v2708 = vsel %vm632, %v2675, 0
        %v2710 = vsel %vm632, %v2707, 0
        %2712 = vmatpush.xpose.msra.mxu0 0.0
        %2713 = vmatpush.xpose.msra.mxu0 0.0
        %2714 = vmatpush.xpose.msra.mxu0 0.0
        %2715 = vmatpush.xpose.msra.mxu0 0.0
        %2716 = vmatpush.xpose.msra.mxu0 0.0
        %2717 = vmatpush.xpose.msra.mxu0 0.0
        %2718 = vmatpush.xpose.msra.mxu0 0.0
        %2719 = vmatpush.xpose.msra.mxu0 0.0
        %2720 = vmatpush.xpose.msra.mxu0 0.0
        %2721 = vmatpush.xpose.msra.mxu0 0.0
        %2722 = vmatpush.xpose.msra.mxu0 0.0
        %2723 = vmatpush.xpose.msra.mxu0 0.0
        %2724 = vmatpush.xpose.msra.mxu0 0.0
        %2725 = vmatpush.xpose.msra.mxu0 0.0
        %2726 = vmatpush.xpose.msra.mxu0 0.0
        %2727 = vmatpush.xpose.msra.mxu0 %v2710
        %2728 = vmatmul.f32.gmra.mxu0 %v2708
        %v2729 = vpop.f32.mrf.mxu0
        %v2730 = vadd.f32 0.0, %v2729
        %2731 = vdwg.mxu0
        %2732 = vrot.lane.b32.xlu0 %v2677, 96
        %v2733 = vpop.permute.xlu0 %2732
        %v2734 = vsel %vm632, %v2677, 0
        %v2736 = vsel %vm632, %v2733, 0
        %2738 = vmatpush.xpose.msra.mxu0 0.0
        %2739 = vmatpush.xpose.msra.mxu0 0.0
        %2740 = vmatpush.xpose.msra.mxu0 0.0
        %2741 = vmatpush.xpose.msra.mxu0 0.0
        %2742 = vmatpush.xpose.msra.mxu0 0.0
        %2743 = vmatpush.xpose.msra.mxu0 0.0
        %2744 = vmatpush.xpose.msra.mxu0 0.0
        %2745 = vmatpush.xpose.msra.mxu0 0.0
        %2746 = vmatpush.xpose.msra.mxu0 0.0
        %2747 = vmatpush.xpose.msra.mxu0 0.0
        %2748 = vmatpush.xpose.msra.mxu0 0.0
        %2749 = vmatpush.xpose.msra.mxu0 0.0
        %2750 = vmatpush.xpose.msra.mxu0 0.0
        %2751 = vmatpush.xpose.msra.mxu0 0.0
        %2752 = vmatpush.xpose.msra.mxu0 0.0
        %2753 = vmatpush.xpose.msra.mxu0 %v2736
        %2754 = vmatmul.f32.gmra.mxu0 %v2734
        %v2755 = vpop.f32.mrf.mxu0
        %v2756 = vadd.f32 0.0, %v2755
        %2757 = vdwg.mxu0
        %2758 = vrot.lane.b32.xlu0 %v2679, 96
        %v2759 = vpop.permute.xlu0 %2758
        %v2760 = vsel %vm632, %v2679, 0
        %v2762 = vsel %vm632, %v2759, 0
        %2764 = vmatpush.xpose.msra.mxu0 0.0
        %2765 = vmatpush.xpose.msra.mxu0 0.0
        %2766 = vmatpush.xpose.msra.mxu0 0.0
        %2767 = vmatpush.xpose.msra.mxu0 0.0
        %2768 = vmatpush.xpose.msra.mxu0 0.0
        %2769 = vmatpush.xpose.msra.mxu0 0.0
        %2770 = vmatpush.xpose.msra.mxu0 0.0
        %2771 = vmatpush.xpose.msra.mxu0 0.0
        %2772 = vmatpush.xpose.msra.mxu0 0.0
        %2773 = vmatpush.xpose.msra.mxu0 0.0
        %2774 = vmatpush.xpose.msra.mxu0 0.0
        %2775 = vmatpush.xpose.msra.mxu0 0.0
        %2776 = vmatpush.xpose.msra.mxu0 0.0
        %2777 = vmatpush.xpose.msra.mxu0 0.0
        %2778 = vmatpush.xpose.msra.mxu0 0.0
        %2779 = vmatpush.xpose.msra.mxu0 %v2762
        %2780 = vmatmul.f32.gmra.mxu0 %v2760
        %v2781 = vpop.f32.mrf.mxu0
        %v2782 = vadd.f32 0.0, %v2781
        %2783 = vdwg.mxu0
        %v2784 = vmul.f32 %v2704, 0.35355338
        %v2785 = vmul.f32 %v2730, 0.35355338
        %v2786 = vmul.f32 %v2756, 0.35355338
        %v2787 = vmul.f32 %v2782, 0.35355338
        %v2788 = vadd.f32 %v2784, %v1634
        %v2789 = vadd.f32 %v2785, %v1634
        %v2790 = vadd.f32 %v2786, %v1634
        %v2791 = vadd.f32 %v2787, %v1634
        %v2792 = vsel %vm632, %v2788, -inf
        %2793 = vmax.xlane.f32.xlu0 %v2792
        %v2794 = vpop.xlane.xlu0 %2793
        %v2795 = vsel %vm632, %v2789, -inf
        %2796 = vmax.xlane.f32.xlu0 %v2795
        %v2797 = vpop.xlane.xlu0 %2796
        %v2798 = vsel %vm632, %v2790, -inf
        %2799 = vmax.xlane.f32.xlu0 %v2798
        %v2800 = vpop.xlane.xlu0 %2799
        %v2801 = vsel %vm632, %v2791, -inf
        %2802 = vmax.xlane.f32.xlu0 %v2801
        %v2803 = vpop.xlane.xlu0 %2802
        %v2804 = vsub.f32 %v2788, %v2794
        %v2805 = vsub.f32 %v2789, %v2797
        %v2806 = vsub.f32 %v2790, %v2800
        %v2807 = vsub.f32 %v2791, %v2803
        %v2808 = vmul.f32 %v2804, 1.442695
        %v2809 = vpow.pop %v2808
        %v2810 = vmul.f32 %v2805, 1.442695
        %v2811 = vpow.pop %v2810
        %v2812 = vmul.f32 %v2806, 1.442695
        %v2813 = vpow.pop %v2812
        %v2814 = vmul.f32 %v2807, 1.442695
        %v2815 = vpow.pop %v2814
        %v2816 = vsel %vm632, %v2809, 0.0
        %2817 = vadd.xlane.f32.xlu0 %v2816
        %v2818 = vpop.xlane.xlu0 %2817
        %v2819 = vsel %vm632, %v2811, 0.0
        %2820 = vadd.xlane.f32.xlu0 %v2819
        %v2821 = vpop.xlane.xlu0 %2820
        %v2822 = vsel %vm632, %v2813, 0.0
        %2823 = vadd.xlane.f32.xlu0 %v2822
        %v2824 = vpop.xlane.xlu0 %2823
        %v2825 = vsel %vm632, %v2815, 0.0
        %2826 = vadd.xlane.f32.xlu0 %v2825
        %v2827 = vpop.xlane.xlu0 %2826
        %v2828 = vrcp.pop %v2818
        %v2829 = vmul.f32 %v2818, %v2828
        %v2830 = vsub.f32 1.0, %v2829
        %v2831 = vmul.f32 %v2828, %v2830
        %v2832 = vadd.f32 %v2828, %v2831
        %vm2833 = vweird.f32 %v2818
        %vm2834 = vweird.f32 %v2828
        %vm2835 = vmor %vm2833, %vm2834
        %v2836 = vsel %vm2835, %v2828, %v2832
        %v2837 = vand.u32 2147483647, %v2818
        %vm2838 = vcmp.eq.f32.partialorder %v2837, 8.507059e+37
        %v2839 = vand.u32 %v2818, 2147483648
        %v2840 = vor.u32 1.1754944e-38, %v2839
        %v2841 = vsel %vm2838, %v2840, %v2836
        %v2842 = vmul.f32 %v2809, %v2841
        %v2843 = vrcp.pop %v2821
        %v2844 = vmul.f32 %v2821, %v2843
        %v2845 = vsub.f32 1.0, %v2844
        %v2846 = vmul.f32 %v2843, %v2845
        %v2847 = vadd.f32 %v2843, %v2846
        %vm2848 = vweird.f32 %v2821
        %vm2849 = vweird.f32 %v2843
        %vm2850 = vmor %vm2848, %vm2849
        %v2851 = vsel %vm2850, %v2843, %v2847
        %v2852 = vand.u32 2147483647, %v2821
        %vm2853 = vcmp.eq.f32.partialorder %v2852, 8.507059e+37
        %v2854 = vand.u32 %v2821, 2147483648
        %v2855 = vor.u32 1.1754944e-38, %v2854
        %v2856 = vsel %vm2853, %v2855, %v2851
        %v2857 = vmul.f32 %v2811, %v2856
        %v2858 = vrcp.pop %v2824
        %v2859 = vmul.f32 %v2824, %v2858
        %v2860 = vsub.f32 1.0, %v2859
        %v2861 = vmul.f32 %v2858, %v2860
        %v2862 = vadd.f32 %v2858, %v2861
        %vm2863 = vweird.f32 %v2824
        %vm2864 = vweird.f32 %v2858
        %vm2865 = vmor %vm2863, %vm2864
        %v2866 = vsel %vm2865, %v2858, %v2862
        %v2867 = vand.u32 2147483647, %v2824
        %vm2868 = vcmp.eq.f32.partialorder %v2867, 8.507059e+37
        %v2869 = vand.u32 %v2824, 2147483648
        %v2870 = vor.u32 1.1754944e-38, %v2869
        %v2871 = vsel %vm2868, %v2870, %v2866
        %v2872 = vmul.f32 %v2813, %v2871
        %v2873 = vrcp.pop %v2827
        %v2874 = vmul.f32 %v2827, %v2873
        %v2875 = vsub.f32 1.0, %v2874
        %v2876 = vmul.f32 %v2873, %v2875
        %v2877 = vadd.f32 %v2873, %v2876
        %vm2878 = vweird.f32 %v2827
        %vm2879 = vweird.f32 %v2873
        %vm2880 = vmor %vm2878, %vm2879
        %v2881 = vsel %vm2880, %v2873, %v2877
        %v2882 = vand.u32 2147483647, %v2827
        %vm2883 = vcmp.eq.f32.partialorder %v2882, 8.507059e+37
        %v2884 = vand.u32 %v2827, 2147483648
        %v2885 = vor.u32 1.1754944e-38, %v2884
        %v2886 = vsel %vm2883, %v2885, %v2881
        %v2887 = vmul.f32 %v2815, %v2886
        %2888 = vrot.lane.b32.xlu0 %v2671, 64
        %v2889 = vpop.permute.xlu0 %2888
        %v2892 = vsel %vm632, %v2842, 0
        %2894 = vmatpush.msra.mxu0 0.0
        %2895 = vmatpush.msra.mxu0 0.0
        %2896 = vmatpush.msra.mxu0 0.0
        %2897 = vmatpush.msra.mxu0 0.0
        %2898 = vmatpush.msra.mxu0 0.0
        %2899 = vmatpush.msra.mxu0 0.0
        %2900 = vmatpush.msra.mxu0 0.0
        %2901 = vmatpush.msra.mxu0 0.0
        %2902 = vmatpush.msra.mxu0 0.0
        %2903 = vmatpush.msra.mxu0 0.0
        %2904 = vmatpush.msra.mxu0 0.0
        %2905 = vmatpush.msra.mxu0 0.0
        %2906 = vmatpush.msra.mxu0 0.0
        %2907 = vmatpush.msra.mxu0 0.0
        %2908 = vmatpush.msra.mxu0 0.0
        %2909 = vmatpush.msra.mxu0 %v2889
        %2910 = vmatmul.f32.gmra.mxu0 %v2892
        %v2911 = vpop.f32.mrf.mxu0
        %v2912 = vadd.f32 0.0, %v2911
        %2913 = vdwg.mxu0
        %2914 = vrot.lane.b32.xlu0 %v2675, 64
        %v2915 = vpop.permute.xlu0 %2914
        %v2918 = vsel %vm632, %v2857, 0
        %2920 = vmatpush.msra.mxu0 0.0
        %2921 = vmatpush.msra.mxu0 0.0
        %2922 = vmatpush.msra.mxu0 0.0
        %2923 = vmatpush.msra.mxu0 0.0
        %2924 = vmatpush.msra.mxu0 0.0
        %2925 = vmatpush.msra.mxu0 0.0
        %2926 = vmatpush.msra.mxu0 0.0
        %2927 = vmatpush.msra.mxu0 0.0
        %2928 = vmatpush.msra.mxu0 0.0
        %2929 = vmatpush.msra.mxu0 0.0
        %2930 = vmatpush.msra.mxu0 0.0
        %2931 = vmatpush.msra.mxu0 0.0
        %2932 = vmatpush.msra.mxu0 0.0
        %2933 = vmatpush.msra.mxu0 0.0
        %2934 = vmatpush.msra.mxu0 0.0
        %2935 = vmatpush.msra.mxu0 %v2915
        %2936 = vmatmul.f32.gmra.mxu0 %v2918
        %v2937 = vpop.f32.mrf.mxu0
        %v2938 = vadd.f32 0.0, %v2937
        %2939 = vdwg.mxu0
        %2940 = vrot.lane.b32.xlu0 %v2677, 64
        %v2941 = vpop.permute.xlu0 %2940
        %v2944 = vsel %vm632, %v2872, 0
        %2946 = vmatpush.msra.mxu0 0.0
        %2947 = vmatpush.msra.mxu0 0.0
        %2948 = vmatpush.msra.mxu0 0.0
        %2949 = vmatpush.msra.mxu0 0.0
        %2950 = vmatpush.msra.mxu0 0.0
        %2951 = vmatpush.msra.mxu0 0.0
        %2952 = vmatpush.msra.mxu0 0.0
        %2953 = vmatpush.msra.mxu0 0.0
        %2954 = vmatpush.msra.mxu0 0.0
        %2955 = vmatpush.msra.mxu0 0.0
        %2956 = vmatpush.msra.mxu0 0.0
        %2957 = vmatpush.msra.mxu0 0.0
        %2958 = vmatpush.msra.mxu0 0.0
        %2959 = vmatpush.msra.mxu0 0.0
        %2960 = vmatpush.msra.mxu0 0.0
        %2961 = vmatpush.msra.mxu0 %v2941
        %2962 = vmatmul.f32.gmra.mxu0 %v2944
        %v2963 = vpop.f32.mrf.mxu0
        %v2964 = vadd.f32 0.0, %v2963
        %2965 = vdwg.mxu0
        %2966 = vrot.lane.b32.xlu0 %v2679, 64
        %v2967 = vpop.permute.xlu0 %2966
        %v2970 = vsel %vm632, %v2887, 0
        %2972 = vmatpush.msra.mxu0 0.0
        %2973 = vmatpush.msra.mxu0 0.0
        %2974 = vmatpush.msra.mxu0 0.0
        %2975 = vmatpush.msra.mxu0 0.0
        %2976 = vmatpush.msra.mxu0 0.0
        %2977 = vmatpush.msra.mxu0 0.0
        %2978 = vmatpush.msra.mxu0 0.0
        %2979 = vmatpush.msra.mxu0 0.0
        %2980 = vmatpush.msra.mxu0 0.0
        %2981 = vmatpush.msra.mxu0 0.0
        %2982 = vmatpush.msra.mxu0 0.0
        %2983 = vmatpush.msra.mxu0 0.0
        %2984 = vmatpush.msra.mxu0 0.0
        %2985 = vmatpush.msra.mxu0 0.0
        %2986 = vmatpush.msra.mxu0 0.0
        %2987 = vmatpush.msra.mxu0 %v2967
        %2988 = vmatmul.f32.gmra.mxu0 %v2970
        %v2989 = vpop.f32.mrf.mxu0
        %v2990 = vadd.f32 0.0, %v2989
        %2991 = vdwg.mxu0
        %2993 = vrot.lane.b32.xlu0 %v2938, 8
        %v2994 = vpop.permute.xlu0 %2993
        %2997 = vrot.lane.b32.xlu0 %v2964, 16
        %v2998 = vpop.permute.xlu0 %2997
        %3001 = vrot.lane.b32.xlu0 %v2990, 24
        %v3002 = vpop.permute.xlu0 %3001
        %v3004 = vsel %vm632, %v2912, %v2994
        %v3005 = vsel %vm956, %v3004, %v2998
        %v3006 = vsel %vm958, %v3005, %v3002
        %s3007 = scalar_lea.vmem %s543, 32 [#allocation3]
        %3008 = vst.msk [vmem:[%s3007] sm:$0xff] %vm632, %v2842
        %3009 = vst.msk [vmem:[%s3007 + $0x8] sm:$0xff] %vm632, %v2857
        %3010 = vst.msk [vmem:[%s3007 + $0x10] sm:$0xff] %vm632, %v2872
        %3011 = vst.msk [vmem:[%s3007 + $0x18] sm:$0xff] %vm632, %v2887
        %3016 = vrot.lane.b32.xlu0 %v2622, 32
        %v3017 = vpop.permute.xlu0 %3016
        %3018 = vrot.lane.b32.xlu0 %v2623, 32
        %v3019 = vpop.permute.xlu0 %3018
        %3020 = vrot.lane.b32.xlu0 %v2624, 32
        %v3021 = vpop.permute.xlu0 %3020
        %3022 = vrot.lane.b32.xlu0 %v2625, 32
        %v3023 = vpop.permute.xlu0 %3022
        %v3029 = vsel %vm599, %v3006, 0
        %3031 = vmatpush.msra.mxu0 0.0
        %3032 = vmatpush.msra.mxu0 0.0
        %3033 = vmatpush.msra.mxu0 0.0
        %3034 = vmatpush.msra.mxu0 0.0
        %3035 = vmatpush.msra.mxu0 0.0
        %3036 = vmatpush.msra.mxu0 0.0
        %3037 = vmatpush.msra.mxu0 0.0
        %3038 = vmatpush.msra.mxu0 0.0
        %3039 = vmatpush.msra.mxu0 0.0
        %3040 = vmatpush.msra.mxu0 0.0
        %3041 = vmatpush.msra.mxu0 0.0
        %3042 = vmatpush.msra.mxu0 0.0
        %3043 = vmatpush.msra.mxu0 %v3023
        %3044 = vmatpush.msra.mxu0 %v3021
        %3045 = vmatpush.msra.mxu0 %v3019
        %3046 = vmatpush.msra.mxu0 %v3017
        %3047 = vmatmul.f32.gmra.mxu0 %v3029
        %v3048 = vpop.f32.mrf.mxu0
        %v3049 = vadd.f32 %v2620, %v3048
        %3050 = vdwg.mxu0
        %v3051 = vsel %vm599, %v3049, 0.0
        %3052 = vadd.xlane.f32.xlu0 %v3051
        %v3053 = vpop.xlane.xlu0 %3052
        %v3054 = vmul.f32 %v3053, %v1012
        %v3055 = vsub.f32 %v3049, %v3054
        %v3056 = vmul.f32 %v3055, %v3055
        %v3057 = vsel %vm599, %v3056, 0.0
        %3058 = vadd.xlane.f32.xlu0 %v3057
        %v3059 = vpop.xlane.xlu0 %3058
        %v3060 = vmul.f32 %v3059, %v1012
        %v3061 = vadd.f32 %v3060, 1e-05
        %v3062 = vrsqrt.pop %v3061
        %v3063 = vmul.f32 %v3062, %v3061
        %v3064 = vmul.f32 %v3063, %v3062
        %v3065 = vmul.f32 0.5, %v3064
        %v3066 = vsub.f32 1.5, %v3065
        %v3067 = vmul.f32 %v3062, %v3066
        %vm3068 = vweird.f32 %v3061
        %vm3069 = vweird.f32 %v3062
        %vm3070 = vmor %vm3068, %vm3069
        %v3071 = vsel %vm3070, %v3062, %v3067
        %v3072 = vmul.f32 %v3055, %v3071
        %v3073 = vperm.slane %v2644, 0
        %v3074 = vmul.f32 %v3072, %v3073
        %v3075 = vperm.slane %v2645, 0
        %v3076 = vadd.f32 %v3074, %v3075
        %v3078 = vsel %vm599, %v3076, 0
        %3080 = vmatpush.msra.mxu0 0.0
        %3081 = vmatpush.msra.mxu0 0.0
        %3082 = vmatpush.msra.mxu0 0.0
        %3083 = vmatpush.msra.mxu0 0.0
        %3084 = vmatpush.msra.mxu0 0.0
        %3085 = vmatpush.msra.mxu0 0.0
        %3086 = vmatpush.msra.mxu0 0.0
        %3087 = vmatpush.msra.mxu0 0.0
        %3088 = vmatpush.msra.mxu0 0.0
        %3089 = vmatpush.msra.mxu0 0.0
        %3090 = vmatpush.msra.mxu0 0.0
        %3091 = vmatpush.msra.mxu0 0.0
        %3092 = vmatpush.msra.mxu0 %v2629
        %3093 = vmatpush.msra.mxu0 %v2628
        %3094 = vmatpush.msra.mxu0 %v2627
        %3095 = vmatpush.msra.mxu0 %v2626
        %3096 = vmatmul.f32.gmra.mxu0 %v3078
        %v3097 = vpop.f32.mrf.mxu0
        %v3098 = vadd.f32 0.0, %v3097
        %3099 = vdwg.mxu0
        %3104 = vrot.lane.b32.xlu0 %v2626, 96
        %v3105 = vpop.permute.xlu0 %3104
        %3106 = vrot.lane.b32.xlu0 %v2627, 96
        %v3107 = vpop.permute.xlu0 %3106
        %3108 = vrot.lane.b32.xlu0 %v2628, 96
        %v3109 = vpop.permute.xlu0 %3108
        %3110 = vrot.lane.b32.xlu0 %v2629, 96
        %v3111 = vpop.permute.xlu0 %3110
        %3116 = vmatpush.msra.mxu0 0.0
        %3117 = vmatpush.msra.mxu0 0.0
        %3118 = vmatpush.msra.mxu0 0.0
        %3119 = vmatpush.msra.mxu0 0.0
        %3120 = vmatpush.msra.mxu0 0.0
        %3121 = vmatpush.msra.mxu0 0.0
        %3122 = vmatpush.msra.mxu0 0.0
        %3123 = vmatpush.msra.mxu0 0.0
        %3124 = vmatpush.msra.mxu0 0.0
        %3125 = vmatpush.msra.mxu0 0.0
        %3126 = vmatpush.msra.mxu0 0.0
        %3127 = vmatpush.msra.mxu0 0.0
        %3128 = vmatpush.msra.mxu0 %v3111
        %3129 = vmatpush.msra.mxu0 %v3109
        %3130 = vmatpush.msra.mxu0 %v3107
        %3131 = vmatpush.msra.mxu0 %v3105
        %3132 = vmatmul.f32.gmra.mxu0 %v2128
        %v3133 = vpop.f32.mrf.mxu0
        %v3134 = vadd.f32 0.0, %v3133
        %3135 = vdwg.mxu0
        %3137 = vrot.lane.b32.xlu0 %v3098, 120
        %v3138 = vpop.permute.xlu0 %3137
        %3139 = vrot.lane.b32.xlu0 %v3098, 112
        %v3140 = vpop.permute.xlu0 %3139
        %3141 = vrot.lane.b32.xlu0 %v3098, 104
        %v3142 = vpop.permute.xlu0 %3141
        %3144 = vrot.lane.b32.xlu0 %v3134, 120
        %v3145 = vpop.permute.xlu0 %3144
        %3146 = vrot.lane.b32.xlu0 %v3134, 112
        %v3147 = vpop.permute.xlu0 %3146
        %3148 = vrot.lane.b32.xlu0 %v3134, 104
        %v3149 = vpop.permute.xlu0 %3148
        %v3150 = vsel %vm632, %v3098, 0
        %v3152 = vsel %vm632, %v3134, 0
        %3154 = vmatpush.xpose.msra.mxu0 0.0
        %3155 = vmatpush.xpose.msra.mxu0 0.0
        %3156 = vmatpush.xpose.msra.mxu0 0.0
        %3157 = vmatpush.xpose.msra.mxu0 0.0
        %3158 = vmatpush.xpose.msra.mxu0 0.0
        %3159 = vmatpush.xpose.msra.mxu0 0.0
        %3160 = vmatpush.xpose.msra.mxu0 0.0
        %3161 = vmatpush.xpose.msra.mxu0 0.0
        %3162 = vmatpush.xpose.msra.mxu0 0.0
        %3163 = vmatpush.xpose.msra.mxu0 0.0
        %3164 = vmatpush.xpose.msra.mxu0 0.0
        %3165 = vmatpush.xpose.msra.mxu0 0.0
        %3166 = vmatpush.xpose.msra.mxu0 0.0
        %3167 = vmatpush.xpose.msra.mxu0 0.0
        %3168 = vmatpush.xpose.msra.mxu0 0.0
        %3169 = vmatpush.xpose.msra.mxu0 %v3152
        %3170 = vmatmul.f32.gmra.mxu0 %v3150
        %v3171 = vpop.f32.mrf.mxu0
        %v3172 = vadd.f32 0.0, %v3171
        %3173 = vdwg.mxu0
        %v3174 = vsel %vm632, %v3138, 0
        %v3176 = vsel %vm632, %v3145, 0
        %3178 = vmatpush.xpose.msra.mxu0 0.0
        %3179 = vmatpush.xpose.msra.mxu0 0.0
        %3180 = vmatpush.xpose.msra.mxu0 0.0
        %3181 = vmatpush.xpose.msra.mxu0 0.0
        %3182 = vmatpush.xpose.msra.mxu0 0.0
        %3183 = vmatpush.xpose.msra.mxu0 0.0
        %3184 = vmatpush.xpose.msra.mxu0 0.0
        %3185 = vmatpush.xpose.msra.mxu0 0.0
        %3186 = vmatpush.xpose.msra.mxu0 0.0
        %3187 = vmatpush.xpose.msra.mxu0 0.0
        %3188 = vmatpush.xpose.msra.mxu0 0.0
        %3189 = vmatpush.xpose.msra.mxu0 0.0
        %3190 = vmatpush.xpose.msra.mxu0 0.0
        %3191 = vmatpush.xpose.msra.mxu0 0.0
        %3192 = vmatpush.xpose.msra.mxu0 0.0
        %3193 = vmatpush.xpose.msra.mxu0 %v3176
        %3194 = vmatmul.f32.gmra.mxu0 %v3174
        %v3195 = vpop.f32.mrf.mxu0
        %v3196 = vadd.f32 0.0, %v3195
        %3197 = vdwg.mxu0
        %v3198 = vsel %vm632, %v3140, 0
        %v3200 = vsel %vm632, %v3147, 0
        %3202 = vmatpush.xpose.msra.mxu0 0.0
        %3203 = vmatpush.xpose.msra.mxu0 0.0
        %3204 = vmatpush.xpose.msra.mxu0 0.0
        %3205 = vmatpush.xpose.msra.mxu0 0.0
        %3206 = vmatpush.xpose.msra.mxu0 0.0
        %3207 = vmatpush.xpose.msra.mxu0 0.0
        %3208 = vmatpush.xpose.msra.mxu0 0.0
        %3209 = vmatpush.xpose.msra.mxu0 0.0
        %3210 = vmatpush.xpose.msra.mxu0 0.0
        %3211 = vmatpush.xpose.msra.mxu0 0.0
        %3212 = vmatpush.xpose.msra.mxu0 0.0
        %3213 = vmatpush.xpose.msra.mxu0 0.0
        %3214 = vmatpush.xpose.msra.mxu0 0.0
        %3215 = vmatpush.xpose.msra.mxu0 0.0
        %3216 = vmatpush.xpose.msra.mxu0 0.0
        %3217 = vmatpush.xpose.msra.mxu0 %v3200
        %3218 = vmatmul.f32.gmra.mxu0 %v3198
        %v3219 = vpop.f32.mrf.mxu0
        %v3220 = vadd.f32 0.0, %v3219
        %3221 = vdwg.mxu0
        %v3222 = vsel %vm632, %v3142, 0
        %v3224 = vsel %vm632, %v3149, 0
        %3226 = vmatpush.xpose.msra.mxu0 0.0
        %3227 = vmatpush.xpose.msra.mxu0 0.0
        %3228 = vmatpush.xpose.msra.mxu0 0.0
        %3229 = vmatpush.xpose.msra.mxu0 0.0
        %3230 = vmatpush.xpose.msra.mxu0 0.0
        %3231 = vmatpush.xpose.msra.mxu0 0.0
        %3232 = vmatpush.xpose.msra.mxu0 0.0
        %3233 = vmatpush.xpose.msra.mxu0 0.0
        %3234 = vmatpush.xpose.msra.mxu0 0.0
        %3235 = vmatpush.xpose.msra.mxu0 0.0
        %3236 = vmatpush.xpose.msra.mxu0 0.0
        %3237 = vmatpush.xpose.msra.mxu0 0.0
        %3238 = vmatpush.xpose.msra.mxu0 0.0
        %3239 = vmatpush.xpose.msra.mxu0 0.0
        %3240 = vmatpush.xpose.msra.mxu0 0.0
        %3241 = vmatpush.xpose.msra.mxu0 %v3224
        %3242 = vmatmul.f32.gmra.mxu0 %v3222
        %v3243 = vpop.f32.mrf.mxu0
        %v3244 = vadd.f32 0.0, %v3243
        %3245 = vdwg.mxu0
        %v3246 = vmul.f32 %v3172, 0.35355338
        %v3247 = vmul.f32 %v3196, 0.35355338
        %v3248 = vmul.f32 %v3220, 0.35355338
        %v3249 = vmul.f32 %v3244, 0.35355338
        %v3250 = vadd.f32 %v3246, %v1635
        %v3251 = vadd.f32 %v3247, %v1635
        %v3252 = vadd.f32 %v3248, %v1635
        %v3253 = vadd.f32 %v3249, %v1635
        %v3254 = vsel %vm632, %v3250, -inf
        %3255 = vmax.xlane.f32.xlu0 %v3254
        %v3256 = vpop.xlane.xlu0 %3255
        %v3257 = vsel %vm632, %v3251, -inf
        %3258 = vmax.xlane.f32.xlu0 %v3257
        %v3259 = vpop.xlane.xlu0 %3258
        %v3260 = vsel %vm632, %v3252, -inf
        %3261 = vmax.xlane.f32.xlu0 %v3260
        %v3262 = vpop.xlane.xlu0 %3261
        %v3263 = vsel %vm632, %v3253, -inf
        %3264 = vmax.xlane.f32.xlu0 %v3263
        %v3265 = vpop.xlane.xlu0 %3264
        %v3266 = vsub.f32 %v3250, %v3256
        %v3267 = vsub.f32 %v3251, %v3259
        %v3268 = vsub.f32 %v3252, %v3262
        %v3269 = vsub.f32 %v3253, %v3265
        %v3270 = vmul.f32 %v3266, 1.442695
        %v3271 = vpow.pop %v3270
        %v3272 = vmul.f32 %v3267, 1.442695
        %v3273 = vpow.pop %v3272
        %v3274 = vmul.f32 %v3268, 1.442695
        %v3275 = vpow.pop %v3274
        %v3276 = vmul.f32 %v3269, 1.442695
        %v3277 = vpow.pop %v3276
        %v3278 = vsel %vm632, %v3271, 0.0
        %3279 = vadd.xlane.f32.xlu0 %v3278
        %v3280 = vpop.xlane.xlu0 %3279
        %v3281 = vsel %vm632, %v3273, 0.0
        %3282 = vadd.xlane.f32.xlu0 %v3281
        %v3283 = vpop.xlane.xlu0 %3282
        %v3284 = vsel %vm632, %v3275, 0.0
        %3285 = vadd.xlane.f32.xlu0 %v3284
        %v3286 = vpop.xlane.xlu0 %3285
        %v3287 = vsel %vm632, %v3277, 0.0
        %3288 = vadd.xlane.f32.xlu0 %v3287
        %v3289 = vpop.xlane.xlu0 %3288
        %v3290 = vrcp.pop %v3280
        %v3291 = vmul.f32 %v3280, %v3290
        %v3292 = vsub.f32 1.0, %v3291
        %v3293 = vmul.f32 %v3290, %v3292
        %v3294 = vadd.f32 %v3290, %v3293
        %vm3295 = vweird.f32 %v3280
        %vm3296 = vweird.f32 %v3290
        %vm3297 = vmor %vm3295, %vm3296
        %v3298 = vsel %vm3297, %v3290, %v3294
        %v3299 = vand.u32 2147483647, %v3280
        %vm3300 = vcmp.eq.f32.partialorder %v3299, 8.507059e+37
        %v3301 = vand.u32 %v3280, 2147483648
        %v3302 = vor.u32 1.1754944e-38, %v3301
        %v3303 = vsel %vm3300, %v3302, %v3298
        %v3304 = vmul.f32 %v3271, %v3303
        %v3305 = vrcp.pop %v3283
        %v3306 = vmul.f32 %v3283, %v3305
        %v3307 = vsub.f32 1.0, %v3306
        %v3308 = vmul.f32 %v3305, %v3307
        %v3309 = vadd.f32 %v3305, %v3308
        %vm3310 = vweird.f32 %v3283
        %vm3311 = vweird.f32 %v3305
        %vm3312 = vmor %vm3310, %vm3311
        %v3313 = vsel %vm3312, %v3305, %v3309
        %v3314 = vand.u32 2147483647, %v3283
        %vm3315 = vcmp.eq.f32.partialorder %v3314, 8.507059e+37
        %v3316 = vand.u32 %v3283, 2147483648
        %v3317 = vor.u32 1.1754944e-38, %v3316
        %v3318 = vsel %vm3315, %v3317, %v3313
        %v3319 = vmul.f32 %v3273, %v3318
        %v3320 = vrcp.pop %v3286
        %v3321 = vmul.f32 %v3286, %v3320
        %v3322 = vsub.f32 1.0, %v3321
        %v3323 = vmul.f32 %v3320, %v3322
        %v3324 = vadd.f32 %v3320, %v3323
        %vm3325 = vweird.f32 %v3286
        %vm3326 = vweird.f32 %v3320
        %vm3327 = vmor %vm3325, %vm3326
        %v3328 = vsel %vm3327, %v3320, %v3324
        %v3329 = vand.u32 2147483647, %v3286
        %vm3330 = vcmp.eq.f32.partialorder %v3329, 8.507059e+37
        %v3331 = vand.u32 %v3286, 2147483648
        %v3332 = vor.u32 1.1754944e-38, %v3331
        %v3333 = vsel %vm3330, %v3332, %v3328
        %v3334 = vmul.f32 %v3275, %v3333
        %v3335 = vrcp.pop %v3289
        %v3336 = vmul.f32 %v3289, %v3335
        %v3337 = vsub.f32 1.0, %v3336
        %v3338 = vmul.f32 %v3335, %v3337
        %v3339 = vadd.f32 %v3335, %v3338
        %vm3340 = vweird.f32 %v3289
        %vm3341 = vweird.f32 %v3335
        %vm3342 = vmor %vm3340, %vm3341
        %v3343 = vsel %vm3342, %v3335, %v3339
        %v3344 = vand.u32 2147483647, %v3289
        %vm3345 = vcmp.eq.f32.partialorder %v3344, 8.507059e+37
        %v3346 = vand.u32 %v3289, 2147483648
        %v3347 = vor.u32 1.1754944e-38, %v3346
        %v3348 = vsel %vm3345, %v3347, %v3343
        %v3349 = vmul.f32 %v3277, %v3348
        %3350 = vrot.lane.b32.xlu0 %v3134, 96
        %v3351 = vpop.permute.xlu0 %3350
        %v3354 = vsel %vm632, %v3304, 0
        %3356 = vmatpush.msra.mxu0 0.0
        %3357 = vmatpush.msra.mxu0 0.0
        %3358 = vmatpush.msra.mxu0 0.0
        %3359 = vmatpush.msra.mxu0 0.0
        %3360 = vmatpush.msra.mxu0 0.0
        %3361 = vmatpush.msra.mxu0 0.0
        %3362 = vmatpush.msra.mxu0 0.0
        %3363 = vmatpush.msra.mxu0 0.0
        %3364 = vmatpush.msra.mxu0 0.0
        %3365 = vmatpush.msra.mxu0 0.0
        %3366 = vmatpush.msra.mxu0 0.0
        %3367 = vmatpush.msra.mxu0 0.0
        %3368 = vmatpush.msra.mxu0 0.0
        %3369 = vmatpush.msra.mxu0 0.0
        %3370 = vmatpush.msra.mxu0 0.0
        %3371 = vmatpush.msra.mxu0 %v3351
        %3372 = vmatmul.f32.gmra.mxu0 %v3354
        %v3373 = vpop.f32.mrf.mxu0
        %v3374 = vadd.f32 0.0, %v3373
        %3375 = vdwg.mxu0
        %3376 = vrot.lane.b32.xlu0 %v3145, 96
        %v3377 = vpop.permute.xlu0 %3376
        %v3380 = vsel %vm632, %v3319, 0
        %3382 = vmatpush.msra.mxu0 0.0
        %3383 = vmatpush.msra.mxu0 0.0
        %3384 = vmatpush.msra.mxu0 0.0
        %3385 = vmatpush.msra.mxu0 0.0
        %3386 = vmatpush.msra.mxu0 0.0
        %3387 = vmatpush.msra.mxu0 0.0
        %3388 = vmatpush.msra.mxu0 0.0
        %3389 = vmatpush.msra.mxu0 0.0
        %3390 = vmatpush.msra.mxu0 0.0
        %3391 = vmatpush.msra.mxu0 0.0
        %3392 = vmatpush.msra.mxu0 0.0
        %3393 = vmatpush.msra.mxu0 0.0
        %3394 = vmatpush.msra.mxu0 0.0
        %3395 = vmatpush.msra.mxu0 0.0
        %3396 = vmatpush.msra.mxu0 0.0
        %3397 = vmatpush.msra.mxu0 %v3377
        %3398 = vmatmul.f32.gmra.mxu0 %v3380
        %v3399 = vpop.f32.mrf.mxu0
        %v3400 = vadd.f32 0.0, %v3399
        %3401 = vdwg.mxu0
        %3402 = vrot.lane.b32.xlu0 %v3147, 96
        %v3403 = vpop.permute.xlu0 %3402
        %v3406 = vsel %vm632, %v3334, 0
        %3408 = vmatpush.msra.mxu0 0.0
        %3409 = vmatpush.msra.mxu0 0.0
        %3410 = vmatpush.msra.mxu0 0.0
        %3411 = vmatpush.msra.mxu0 0.0
        %3412 = vmatpush.msra.mxu0 0.0
        %3413 = vmatpush.msra.mxu0 0.0
        %3414 = vmatpush.msra.mxu0 0.0
        %3415 = vmatpush.msra.mxu0 0.0
        %3416 = vmatpush.msra.mxu0 0.0
        %3417 = vmatpush.msra.mxu0 0.0
        %3418 = vmatpush.msra.mxu0 0.0
        %3419 = vmatpush.msra.mxu0 0.0
        %3420 = vmatpush.msra.mxu0 0.0
        %3421 = vmatpush.msra.mxu0 0.0
        %3422 = vmatpush.msra.mxu0 0.0
        %3423 = vmatpush.msra.mxu0 %v3403
        %3424 = vmatmul.f32.gmra.mxu0 %v3406
        %v3425 = vpop.f32.mrf.mxu0
        %v3426 = vadd.f32 0.0, %v3425
        %3427 = vdwg.mxu0
        %3428 = vrot.lane.b32.xlu0 %v3149, 96
        %v3429 = vpop.permute.xlu0 %3428
        %v3432 = vsel %vm632, %v3349, 0
        %3434 = vmatpush.msra.mxu0 0.0
        %3435 = vmatpush.msra.mxu0 0.0
        %3436 = vmatpush.msra.mxu0 0.0
        %3437 = vmatpush.msra.mxu0 0.0
        %3438 = vmatpush.msra.mxu0 0.0
        %3439 = vmatpush.msra.mxu0 0.0
        %3440 = vmatpush.msra.mxu0 0.0
        %3441 = vmatpush.msra.mxu0 0.0
        %3442 = vmatpush.msra.mxu0 0.0
        %3443 = vmatpush.msra.mxu0 0.0
        %3444 = vmatpush.msra.mxu0 0.0
        %3445 = vmatpush.msra.mxu0 0.0
        %3446 = vmatpush.msra.mxu0 0.0
        %3447 = vmatpush.msra.mxu0 0.0
        %3448 = vmatpush.msra.mxu0 0.0
        %3449 = vmatpush.msra.mxu0 %v3429
        %3450 = vmatmul.f32.gmra.mxu0 %v3432
        %v3451 = vpop.f32.mrf.mxu0
        %v3452 = vadd.f32 0.0, %v3451
        %3453 = vdwg.mxu0
        %3455 = vrot.lane.b32.xlu0 %v3400, 8
        %v3456 = vpop.permute.xlu0 %3455
        %3459 = vrot.lane.b32.xlu0 %v3426, 16
        %v3460 = vpop.permute.xlu0 %3459
        %3463 = vrot.lane.b32.xlu0 %v3452, 24
        %v3464 = vpop.permute.xlu0 %3463
        %v3466 = vsel %vm632, %v3374, %v3456
        %v3467 = vsel %vm956, %v3466, %v3460
        %v3468 = vsel %vm958, %v3467, %v3464
        %s3469 = scalar_lea.vmem %s549, 32 [#allocation4]
        %3470 = vst.msk [vmem:[%s3469] sm:$0xff] %vm632, %v3304
        %3471 = vst.msk [vmem:[%s3469 + $0x8] sm:$0xff] %vm632, %v3319
        %3472 = vst.msk [vmem:[%s3469 + $0x10] sm:$0xff] %vm632, %v3334
        %3473 = vst.msk [vmem:[%s3469 + $0x18] sm:$0xff] %vm632, %v3349
        %3474 = vrot.lane.b32.xlu0 %v2626, 32
        %v3475 = vpop.permute.xlu0 %3474
        %3476 = vrot.lane.b32.xlu0 %v2627, 32
        %v3477 = vpop.permute.xlu0 %3476
        %3478 = vrot.lane.b32.xlu0 %v2628, 32
        %v3479 = vpop.permute.xlu0 %3478
        %3480 = vrot.lane.b32.xlu0 %v2629, 32
        %v3481 = vpop.permute.xlu0 %3480
        %v3487 = vsel %vm599, %v3468, 0
        %3489 = vmatpush.msra.mxu0 0.0
        %3490 = vmatpush.msra.mxu0 0.0
        %3491 = vmatpush.msra.mxu0 0.0
        %3492 = vmatpush.msra.mxu0 0.0
        %3493 = vmatpush.msra.mxu0 0.0
        %3494 = vmatpush.msra.mxu0 0.0
        %3495 = vmatpush.msra.mxu0 0.0
        %3496 = vmatpush.msra.mxu0 0.0
        %3497 = vmatpush.msra.mxu0 0.0
        %3498 = vmatpush.msra.mxu0 0.0
        %3499 = vmatpush.msra.mxu0 0.0
        %3500 = vmatpush.msra.mxu0 0.0
        %3501 = vmatpush.msra.mxu0 %v3481
        %3502 = vmatpush.msra.mxu0 %v3479
        %3503 = vmatpush.msra.mxu0 %v3477
        %3504 = vmatpush.msra.mxu0 %v3475
        %3505 = vmatmul.f32.gmra.mxu0 %v3487
        %v3506 = vpop.f32.mrf.mxu0
        %v3507 = vadd.f32 %v3076, %v3506
        %3508 = vdwg.mxu0
        %v3509 = vsel %vm599, %v3507, 0.0
        %3510 = vadd.xlane.f32.xlu0 %v3509
        %v3511 = vpop.xlane.xlu0 %3510
        %v3512 = vmul.f32 %v3511, %v1012
        %v3513 = vsub.f32 %v3507, %v3512
        %v3514 = vmul.f32 %v3513, %v3513
        %v3515 = vsel %vm599, %v3514, 0.0
        %3516 = vadd.xlane.f32.xlu0 %v3515
        %v3517 = vpop.xlane.xlu0 %3516
        %v3518 = vmul.f32 %v3517, %v1012
        %v3519 = vadd.f32 %v3518, 1e-05
        %v3520 = vrsqrt.pop %v3519
        %v3521 = vmul.f32 %v3520, %v3519
        %v3522 = vmul.f32 %v3521, %v3520
        %v3523 = vmul.f32 0.5, %v3522
        %v3524 = vsub.f32 1.5, %v3523
        %v3525 = vmul.f32 %v3520, %v3524
        %vm3526 = vweird.f32 %v3519
        %vm3527 = vweird.f32 %v3520
        %vm3528 = vmor %vm3526, %vm3527
        %v3529 = vsel %vm3528, %v3520, %v3525
        %v3530 = vmul.f32 %v3513, %v3529
        %v3531 = vperm.slane %v2646, 0
        %v3532 = vmul.f32 %v3530, %v3531
        %v3533 = vperm.slane %v2647, 0
        %v3534 = vadd.f32 %v3532, %v3533
        %v3536 = vsel %vm599, %v3534, 0
        %3538 = vmatpush.msra.mxu0 0.0
        %3539 = vmatpush.msra.mxu0 0.0
        %3540 = vmatpush.msra.mxu0 0.0
        %3541 = vmatpush.msra.mxu0 0.0
        %3542 = vmatpush.msra.mxu0 0.0
        %3543 = vmatpush.msra.mxu0 0.0
        %3544 = vmatpush.msra.mxu0 0.0
        %3545 = vmatpush.msra.mxu0 0.0
        %3546 = vmatpush.msra.mxu0 0.0
        %3547 = vmatpush.msra.mxu0 0.0
        %3548 = vmatpush.msra.mxu0 0.0
        %3549 = vmatpush.msra.mxu0 0.0
        %3550 = vmatpush.msra.mxu0 %v2633
        %3551 = vmatpush.msra.mxu0 %v2632
        %3552 = vmatpush.msra.mxu0 %v2631
        %3553 = vmatpush.msra.mxu0 %v2630
        %3554 = vmatmul.f32.gmra.mxu0 %v3536
        %v3555 = vpop.f32.mrf.mxu0
        %v3556 = vadd.f32 0.0, %v3555
        %3557 = vdwg.mxu0
        %v3558 = vmax.f32 %v3556, 0.0
        %v3560 = vsel %vm1060, %v3558, 0
        %3562 = vmatpush.msra.mxu0 0.0
        %3563 = vmatpush.msra.mxu0 0.0
        %3564 = vmatpush.msra.mxu0 0.0
        %3565 = vmatpush.msra.mxu0 0.0
        %3566 = vmatpush.msra.mxu0 0.0
        %3567 = vmatpush.msra.mxu0 0.0
        %3568 = vmatpush.msra.mxu0 0.0
        %3569 = vmatpush.msra.mxu0 0.0
        %3570 = vmatpush.msra.mxu0 %v2642
        %3571 = vmatpush.msra.mxu0 %v2641
        %3572 = vmatpush.msra.mxu0 %v2640
        %3573 = vmatpush.msra.mxu0 %v2639
        %3574 = vmatpush.msra.mxu0 %v2638
        %3575 = vmatpush.msra.mxu0 %v2637
        %3576 = vmatpush.msra.mxu0 %v2636
        %3577 = vmatpush.msra.mxu0 %v2635
        %3578 = vmatmul.f32.gmra.mxu0 %v3560
        %v3579 = vpop.f32.mrf.mxu0
        %v3580 = vadd.f32 %v3534, %v3579
        %3581 = vdwg.mxu0
        %v3582 = vsel %vm599, %v3580, 0.0
        %3583 = vadd.xlane.f32.xlu0 %v3582
        %v3584 = vpop.xlane.xlu0 %3583
        %v3585 = vmul.f32 %v3584, %v1012
        %v3586 = vsub.f32 %v3580, %v3585
        %v3587 = vmul.f32 %v3586, %v3586
        %v3588 = vsel %vm599, %v3587, 0.0
        %3589 = vadd.xlane.f32.xlu0 %v3588
        %v3590 = vpop.xlane.xlu0 %3589
        %v3591 = vmul.f32 %v3590, %v1012
        %v3592 = vadd.f32 %v3591, 1e-05
        %v3593 = vrsqrt.pop %v3592
        %v3594 = vmul.f32 %v3593, %v3592
        %v3595 = vmul.f32 %v3594, %v3593
        %v3596 = vmul.f32 0.5, %v3595
        %v3597 = vsub.f32 1.5, %v3596
        %v3598 = vmul.f32 %v3593, %v3597
        %vm3599 = vweird.f32 %v3592
        %vm3600 = vweird.f32 %v3593
        %vm3601 = vmor %vm3599, %vm3600
        %v3602 = vsel %vm3601, %v3593, %v3598
        %v3603 = vmul.f32 %v3586, %v3602
        %v3604 = vperm.slane %v2648, 0
        %v3605 = vmul.f32 %v3603, %v3604
        %v3606 = vperm.slane %v2649, 0
        %v3607 = vadd.f32 %v3605, %v3606
        %v3608 = vld [vmem:[%s11] sm:$0xff]
        %v3609 = vld [vmem:[%s11 + $0x8] sm:$0xff]
        %v3610 = vld [vmem:[%s11 + $0x10] sm:$0xff]
        %v3611 = vld [vmem:[%s11 + $0x18] sm:$0xff]
        %v3613 = vsel %vm599, %v3607, 0
        %3615 = vmatpush.msra.mxu0 0.0
        %3616 = vmatpush.msra.mxu0 0.0
        %3617 = vmatpush.msra.mxu0 0.0
        %3618 = vmatpush.msra.mxu0 0.0
        %3619 = vmatpush.msra.mxu0 0.0
        %3620 = vmatpush.msra.mxu0 0.0
        %3621 = vmatpush.msra.mxu0 0.0
        %3622 = vmatpush.msra.mxu0 0.0
        %3623 = vmatpush.msra.mxu0 0.0
        %3624 = vmatpush.msra.mxu0 0.0
        %3625 = vmatpush.msra.mxu0 0.0
        %3626 = vmatpush.msra.mxu0 0.0
        %3627 = vmatpush.msra.mxu0 %v3611
        %3628 = vmatpush.msra.mxu0 %v3610
        %3629 = vmatpush.msra.mxu0 %v3609
        %3630 = vmatpush.msra.mxu0 %v3608
        %3631 = vmatmul.f32.gmra.mxu0 %v3613
        %v3632 = vpop.f32.mrf.mxu0
        %v3633 = vadd.f32 0.0, %v3632
        %3634 = vdwg.mxu0
        %3635 = vst [vmem:[%s556] sm:$0xff] %v3633
        %s3636 = sand.u32 %s315, 1
        %s3637 = sand.u32 %s315, 1
        %s3638 = smul.addr %s3637, 64
        %s3639 = scalar_lea.vmem [#allocation2], %s3638
        %s3640 = sand.u32 %s341, 1
        %s3641 = sand.u32 %s341, 1
        %s3642 = smul.addr %s3641, 64
        %s3643 = scalar_lea.vmem [#allocation3], %s3642
        %s3644 = sand.u32 %s367, 1
        %s3645 = sand.u32 %s367, 1
        %s3646 = smul.addr %s3645, 64
        %s3647 = scalar_lea.vmem [#allocation4], %s3646
        %s3648 = sand.u32 %s393, 1
        %s3649 = scalar_lea.sflag [#allocation6], %s3648
        %s3650 = sand.u32 %s393, 1
        %s3651 = smul.addr %s3650, 8
        %s3652 = scalar_lea.vmem [#allocation5], %s3651
        // Predicated region
        $region69: #{transformer_forward.1} parent=67 // pred_check
          %p3653 = pneg %p325
        $region70: #{transformer_forward.1} parent=67 // pred_check_branch
          %3655 = sbr.rel (%p3653) target = $region72
        $region71: #{transformer_forward.1} parent=67 // pred_region
          %s3656 = smul.addr %s30, 4
          %s3657 = smul.addr %s3656, 8
          %s3658 = scalar_lea.vmem %s12, %s3657
          // Predicated region
          $region73: #{transformer_forward.1} parent=71 // pred_check
            _
          $region74: #{transformer_forward.1} parent=71 // pred_check_branch
            %3660 = sbr.rel (0) target = $region76
          $region75: #{transformer_forward.1} parent=71 // pred_region
            // Predicated region
            $region77: #{transformer_forward.1} parent=75 // pred_check
              _
            $region78: #{transformer_forward.1} parent=75 // pred_check_branch
              %3662 = sbr.rel (0) target = $region80
            $region79: #{transformer_forward.1} parent=75 // pred_region
              // Predicated region
              $region92: #{transformer_forward.1} parent=79 // pred_check
                _
              $region93: #{transformer_forward.1} parent=79 // pred_check_branch
                %3692 = sbr.rel (0) target = $region95
              $region94: #{transformer_forward.1} parent=79 // pred_region
                loop: start=0, step=1, limit=1
                $region96: #{transformer_forward.1} parent=94 // loop_pre_header
                  _
                $region97: #{transformer_forward.1} parent=94 // loop_header
                  %s3694 = sphi 0, %s3698
                  %p3695 = scmp.ge.s32.totalorder %s3694, 1
                  %s3699 = sphi %s3639, %s3639
                  %s3700 = sphi %s3658, %s3658
                $region98: #{transformer_forward.1} parent=94 // loop_header_branch
                  %3697 = sbr.rel (%p3695) target = $region102
                $region99: #{transformer_forward.1} parent=94 // loop_body
                  %v3701 = vld [vmem:[%s3699] sm:$0xff]
                  %3702 = vst [vmem:[%s3700] sm:$0xff] %v3701
                  %v3703 = vld [vmem:[%s3699 + $0x8] sm:$0xff]
                  %3704 = vst [vmem:[%s3700 + $0x8] sm:$0xff] %v3703
                  %v3705 = vld [vmem:[%s3699 + $0x10] sm:$0xff]
                  %3706 = vst [vmem:[%s3700 + $0x10] sm:$0xff] %v3705
                  %v3707 = vld [vmem:[%s3699 + $0x18] sm:$0xff]
                  %3708 = vst [vmem:[%s3700 + $0x18] sm:$0xff] %v3707
                  %v3709 = vld [vmem:[%s3699 + $0x20] sm:$0xff]
                  %3710 = vst [vmem:[%s3700 + $0x40] sm:$0xff] %v3709
                  %v3711 = vld [vmem:[%s3699 + $0x28] sm:$0xff]
                  %3712 = vst [vmem:[%s3700 + $0x48] sm:$0xff] %v3711
                  %v3713 = vld [vmem:[%s3699 + $0x30] sm:$0xff]
                  %3714 = vst [vmem:[%s3700 + $0x50] sm:$0xff] %v3713
                  %v3715 = vld [vmem:[%s3699 + $0x38] sm:$0xff]
                  %3716 = vst [vmem:[%s3700 + $0x58] sm:$0xff] %v3715
                $region100: #{transformer_forward.1} parent=94 // loop_footer
                  %s3698 = sadd.s32 1, %s3694
                $region101: #{transformer_forward.1} parent=94 // loop_footer_branch
                  %3693 = sbr.rel target = $region97
                $region102: #{transformer_forward.1} parent=94 // loop_exit
                  _
              $region95: #{transformer_forward.1} parent=79 // pred_fallthru
                _
              // Predicated region
              $region103: #{transformer_forward.1} parent=79 // pred_check
                _
              $region104: #{transformer_forward.1} parent=79 // pred_check_branch
                %3718 = sbr.rel target = $region106
              $region105: #{transformer_forward.1} parent=79 // pred_region
                _
              $region106: #{transformer_forward.1} parent=79 // pred_fallthru
                _
            $region80: #{transformer_forward.1} parent=75 // pred_fallthru
              _
            // Predicated region
            $region81: #{transformer_forward.1} parent=75 // pred_check
              _
            $region82: #{transformer_forward.1} parent=75 // pred_check_branch
              %3664 = sbr.rel target = $region84
            $region83: #{transformer_forward.1} parent=75 // pred_region
              %s3666 = ssub.s32 256, 1
              loop: start=0, step=1, limit=1
              $region85: #{transformer_forward.1} parent=83 // loop_pre_header
                _
              $region86: #{transformer_forward.1} parent=83 // loop_header
                %s3668 = sphi 0, %s3672
                %p3669 = scmp.ge.s32.totalorder %s3668, 1
                %s3673 = sphi %s3639, %s3639
                %s3674 = sphi %s3658, %s3658
              $region87: #{transformer_forward.1} parent=83 // loop_header_branch
                %3671 = sbr.rel (%p3669) target = $region91
              $region88: #{transformer_forward.1} parent=83 // loop_body
                %v3675 = vld [vmem:[%s3673] sm:%s3666]
                %3676 = vst [vmem:[%s3674] sm:%s3666] %v3675
                %v3677 = vld [vmem:[%s3673 + $0x8] sm:%s3666]
                %3678 = vst [vmem:[%s3674 + $0x8] sm:%s3666] %v3677
                %v3679 = vld [vmem:[%s3673 + $0x10] sm:%s3666]
                %3680 = vst [vmem:[%s3674 + $0x10] sm:%s3666] %v3679
                %v3681 = vld [vmem:[%s3673 + $0x18] sm:%s3666]
                %3682 = vst [vmem:[%s3674 + $0x18] sm:%s3666] %v3681
                %v3683 = vld [vmem:[%s3673 + $0x20] sm:%s3666]
                %3684 = vst [vmem:[%s3674 + $0x40] sm:%s3666] %v3683
                %v3685 = vld [vmem:[%s3673 + $0x28] sm:%s3666]
                %3686 = vst [vmem:[%s3674 + $0x48] sm:%s3666] %v3685
                %v3687 = vld [vmem:[%s3673 + $0x30] sm:%s3666]
                %3688 = vst [vmem:[%s3674 + $0x50] sm:%s3666] %v3687
                %v3689 = vld [vmem:[%s3673 + $0x38] sm:%s3666]
                %3690 = vst [vmem:[%s3674 + $0x58] sm:%s3666] %v3689
              $region89: #{transformer_forward.1} parent=83 // loop_footer
                %s3672 = sadd.s32 1, %s3668
              $region90: #{transformer_forward.1} parent=83 // loop_footer_branch
                %3667 = sbr.rel target = $region86
              $region91: #{transformer_forward.1} parent=83 // loop_exit
                _
            $region84: #{transformer_forward.1} parent=75 // pred_fallthru
              _
          $region76: #{transformer_forward.1} parent=71 // pred_fallthru
            _
          %3719 = vnop
        $region72: #{transformer_forward.1} parent=67 // pred_fallthru
          _
        // Predicated region
        $region107: #{transformer_forward.1} parent=67 // pred_check
          %p3720 = pneg %p351
        $region108: #{transformer_forward.1} parent=67 // pred_check_branch
          %3722 = sbr.rel (%p3720) target = $region110
        $region109: #{transformer_forward.1} parent=67 // pred_region
          %s3723 = smul.addr %s30, 4
          %s3724 = smul.addr %s3723, 8
          %s3725 = scalar_lea.vmem %s13, %s3724
          // Predicated region
          $region111: #{transformer_forward.1} parent=109 // pred_check
            _
          $region112: #{transformer_forward.1} parent=109 // pred_check_branch
            %3727 = sbr.rel (0) target = $region114
          $region113: #{transformer_forward.1} parent=109 // pred_region
            // Predicated region
            $region115: #{transformer_forward.1} parent=113 // pred_check
              _
            $region116: #{transformer_forward.1} parent=113 // pred_check_branch
              %3729 = sbr.rel (0) target = $region118
            $region117: #{transformer_forward.1} parent=113 // pred_region
              // Predicated region
              $region130: #{transformer_forward.1} parent=117 // pred_check
                _
              $region131: #{transformer_forward.1} parent=117 // pred_check_branch
                %3759 = sbr.rel (0) target = $region133
              $region132: #{transformer_forward.1} parent=117 // pred_region
                loop: start=0, step=1, limit=1
                $region134: #{transformer_forward.1} parent=132 // loop_pre_header
                  _
                $region135: #{transformer_forward.1} parent=132 // loop_header
                  %s3761 = sphi 0, %s3765
                  %p3762 = scmp.ge.s32.totalorder %s3761, 1
                  %s3766 = sphi %s3643, %s3643
                  %s3767 = sphi %s3725, %s3725
                $region136: #{transformer_forward.1} parent=132 // loop_header_branch
                  %3764 = sbr.rel (%p3762) target = $region140
                $region137: #{transformer_forward.1} parent=132 // loop_body
                  %v3768 = vld [vmem:[%s3766] sm:$0xff]
                  %3769 = vst [vmem:[%s3767] sm:$0xff] %v3768
                  %v3770 = vld [vmem:[%s3766 + $0x8] sm:$0xff]
                  %3771 = vst [vmem:[%s3767 + $0x8] sm:$0xff] %v3770
                  %v3772 = vld [vmem:[%s3766 + $0x10] sm:$0xff]
                  %3773 = vst [vmem:[%s3767 + $0x10] sm:$0xff] %v3772
                  %v3774 = vld [vmem:[%s3766 + $0x18] sm:$0xff]
                  %3775 = vst [vmem:[%s3767 + $0x18] sm:$0xff] %v3774
                  %v3776 = vld [vmem:[%s3766 + $0x20] sm:$0xff]
                  %3777 = vst [vmem:[%s3767 + $0x40] sm:$0xff] %v3776
                  %v3778 = vld [vmem:[%s3766 + $0x28] sm:$0xff]
                  %3779 = vst [vmem:[%s3767 + $0x48] sm:$0xff] %v3778
                  %v3780 = vld [vmem:[%s3766 + $0x30] sm:$0xff]
                  %3781 = vst [vmem:[%s3767 + $0x50] sm:$0xff] %v3780
                  %v3782 = vld [vmem:[%s3766 + $0x38] sm:$0xff]
                  %3783 = vst [vmem:[%s3767 + $0x58] sm:$0xff] %v3782
                $region138: #{transformer_forward.1} parent=132 // loop_footer
                  %s3765 = sadd.s32 1, %s3761
                $region139: #{transformer_forward.1} parent=132 // loop_footer_branch
                  %3760 = sbr.rel target = $region135
                $region140: #{transformer_forward.1} parent=132 // loop_exit
                  _
              $region133: #{transformer_forward.1} parent=117 // pred_fallthru
                _
              // Predicated region
              $region141: #{transformer_forward.1} parent=117 // pred_check
                _
              $region142: #{transformer_forward.1} parent=117 // pred_check_branch
                %3785 = sbr.rel target = $region144
              $region143: #{transformer_forward.1} parent=117 // pred_region
                _
              $region144: #{transformer_forward.1} parent=117 // pred_fallthru
                _
            $region118: #{transformer_forward.1} parent=113 // pred_fallthru
              _
            // Predicated region
            $region119: #{transformer_forward.1} parent=113 // pred_check
              _
            $region120: #{transformer_forward.1} parent=113 // pred_check_branch
              %3731 = sbr.rel target = $region122
            $region121: #{transformer_forward.1} parent=113 // pred_region
              %s3733 = ssub.s32 256, 1
              loop: start=0, step=1, limit=1
              $region123: #{transformer_forward.1} parent=121 // loop_pre_header
                _
              $region124: #{transformer_forward.1} parent=121 // loop_header
                %s3735 = sphi 0, %s3739
                %p3736 = scmp.ge.s32.totalorder %s3735, 1
                %s3740 = sphi %s3643, %s3643
                %s3741 = sphi %s3725, %s3725
              $region125: #{transformer_forward.1} parent=121 // loop_header_branch
                %3738 = sbr.rel (%p3736) target = $region129
              $region126: #{transformer_forward.1} parent=121 // loop_body
                %v3742 = vld [vmem:[%s3740] sm:%s3733]
                %3743 = vst [vmem:[%s3741] sm:%s3733] %v3742
                %v3744 = vld [vmem:[%s3740 + $0x8] sm:%s3733]
                %3745 = vst [vmem:[%s3741 + $0x8] sm:%s3733] %v3744
                %v3746 = vld [vmem:[%s3740 + $0x10] sm:%s3733]
                %3747 = vst [vmem:[%s3741 + $0x10] sm:%s3733] %v3746
                %v3748 = vld [vmem:[%s3740 + $0x18] sm:%s3733]
                %3749 = vst [vmem:[%s3741 + $0x18] sm:%s3733] %v3748
                %v3750 = vld [vmem:[%s3740 + $0x20] sm:%s3733]
                %3751 = vst [vmem:[%s3741 + $0x40] sm:%s3733] %v3750
                %v3752 = vld [vmem:[%s3740 + $0x28] sm:%s3733]
                %3753 = vst [vmem:[%s3741 + $0x48] sm:%s3733] %v3752
                %v3754 = vld [vmem:[%s3740 + $0x30] sm:%s3733]
                %3755 = vst [vmem:[%s3741 + $0x50] sm:%s3733] %v3754
                %v3756 = vld [vmem:[%s3740 + $0x38] sm:%s3733]
                %3757 = vst [vmem:[%s3741 + $0x58] sm:%s3733] %v3756
              $region127: #{transformer_forward.1} parent=121 // loop_footer
                %s3739 = sadd.s32 1, %s3735
              $region128: #{transformer_forward.1} parent=121 // loop_footer_branch
                %3734 = sbr.rel target = $region124
              $region129: #{transformer_forward.1} parent=121 // loop_exit
                _
            $region122: #{transformer_forward.1} parent=113 // pred_fallthru
              _
          $region114: #{transformer_forward.1} parent=109 // pred_fallthru
            _
          %3786 = vnop
        $region110: #{transformer_forward.1} parent=67 // pred_fallthru
          _
        // Predicated region
        $region145: #{transformer_forward.1} parent=67 // pred_check
          %p3787 = pneg %p377
        $region146: #{transformer_forward.1} parent=67 // pred_check_branch
          %3789 = sbr.rel (%p3787) target = $region148
        $region147: #{transformer_forward.1} parent=67 // pred_region
          %s3790 = smul.addr %s30, 4
          %s3791 = smul.addr %s3790, 8
          %s3792 = scalar_lea.vmem %s14, %s3791
          // Predicated region
          $region149: #{transformer_forward.1} parent=147 // pred_check
            _
          $region150: #{transformer_forward.1} parent=147 // pred_check_branch
            %3794 = sbr.rel (0) target = $region152
          $region151: #{transformer_forward.1} parent=147 // pred_region
            // Predicated region
            $region153: #{transformer_forward.1} parent=151 // pred_check
              _
            $region154: #{transformer_forward.1} parent=151 // pred_check_branch
              %3796 = sbr.rel (0) target = $region156
            $region155: #{transformer_forward.1} parent=151 // pred_region
              // Predicated region
              $region168: #{transformer_forward.1} parent=155 // pred_check
                _
              $region169: #{transformer_forward.1} parent=155 // pred_check_branch
                %3826 = sbr.rel (0) target = $region171
              $region170: #{transformer_forward.1} parent=155 // pred_region
                loop: start=0, step=1, limit=1
                $region172: #{transformer_forward.1} parent=170 // loop_pre_header
                  _
                $region173: #{transformer_forward.1} parent=170 // loop_header
                  %s3828 = sphi 0, %s3832
                  %p3829 = scmp.ge.s32.totalorder %s3828, 1
                  %s3833 = sphi %s3647, %s3647
                  %s3834 = sphi %s3792, %s3792
                $region174: #{transformer_forward.1} parent=170 // loop_header_branch
                  %3831 = sbr.rel (%p3829) target = $region178
                $region175: #{transformer_forward.1} parent=170 // loop_body
                  %v3835 = vld [vmem:[%s3833] sm:$0xff]
                  %3836 = vst [vmem:[%s3834] sm:$0xff] %v3835
                  %v3837 = vld [vmem:[%s3833 + $0x8] sm:$0xff]
                  %3838 = vst [vmem:[%s3834 + $0x8] sm:$0xff] %v3837
                  %v3839 = vld [vmem:[%s3833 + $0x10] sm:$0xff]
                  %3840 = vst [vmem:[%s3834 + $0x10] sm:$0xff] %v3839
                  %v3841 = vld [vmem:[%s3833 + $0x18] sm:$0xff]
                  %3842 = vst [vmem:[%s3834 + $0x18] sm:$0xff] %v3841
                  %v3843 = vld [vmem:[%s3833 + $0x20] sm:$0xff]
                  %3844 = vst [vmem:[%s3834 + $0x40] sm:$0xff] %v3843
                  %v3845 = vld [vmem:[%s3833 + $0x28] sm:$0xff]
                  %3846 = vst [vmem:[%s3834 + $0x48] sm:$0xff] %v3845
                  %v3847 = vld [vmem:[%s3833 + $0x30] sm:$0xff]
                  %3848 = vst [vmem:[%s3834 + $0x50] sm:$0xff] %v3847
                  %v3849 = vld [vmem:[%s3833 + $0x38] sm:$0xff]
                  %3850 = vst [vmem:[%s3834 + $0x58] sm:$0xff] %v3849
                $region176: #{transformer_forward.1} parent=170 // loop_footer
                  %s3832 = sadd.s32 1, %s3828
                $region177: #{transformer_forward.1} parent=170 // loop_footer_branch
                  %3827 = sbr.rel target = $region173
                $region178: #{transformer_forward.1} parent=170 // loop_exit
                  _
              $region171: #{transformer_forward.1} parent=155 // pred_fallthru
                _
              // Predicated region
              $region179: #{transformer_forward.1} parent=155 // pred_check
                _
              $region180: #{transformer_forward.1} parent=155 // pred_check_branch
                %3852 = sbr.rel target = $region182
              $region181: #{transformer_forward.1} parent=155 // pred_region
                _
              $region182: #{transformer_forward.1} parent=155 // pred_fallthru
                _
            $region156: #{transformer_forward.1} parent=151 // pred_fallthru
              _
            // Predicated region
            $region157: #{transformer_forward.1} parent=151 // pred_check
              _
            $region158: #{transformer_forward.1} parent=151 // pred_check_branch
              %3798 = sbr.rel target = $region160
            $region159: #{transformer_forward.1} parent=151 // pred_region
              %s3800 = ssub.s32 256, 1
              loop: start=0, step=1, limit=1
              $region161: #{transformer_forward.1} parent=159 // loop_pre_header
                _
              $region162: #{transformer_forward.1} parent=159 // loop_header
                %s3802 = sphi 0, %s3806
                %p3803 = scmp.ge.s32.totalorder %s3802, 1
                %s3807 = sphi %s3647, %s3647
                %s3808 = sphi %s3792, %s3792
              $region163: #{transformer_forward.1} parent=159 // loop_header_branch
                %3805 = sbr.rel (%p3803) target = $region167
              $region164: #{transformer_forward.1} parent=159 // loop_body
                %v3809 = vld [vmem:[%s3807] sm:%s3800]
                %3810 = vst [vmem:[%s3808] sm:%s3800] %v3809
                %v3811 = vld [vmem:[%s3807 + $0x8] sm:%s3800]
                %3812 = vst [vmem:[%s3808 + $0x8] sm:%s3800] %v3811
                %v3813 = vld [vmem:[%s3807 + $0x10] sm:%s3800]
                %3814 = vst [vmem:[%s3808 + $0x10] sm:%s3800] %v3813
                %v3815 = vld [vmem:[%s3807 + $0x18] sm:%s3800]
                %3816 = vst [vmem:[%s3808 + $0x18] sm:%s3800] %v3815
                %v3817 = vld [vmem:[%s3807 + $0x20] sm:%s3800]
                %3818 = vst [vmem:[%s3808 + $0x40] sm:%s3800] %v3817
                %v3819 = vld [vmem:[%s3807 + $0x28] sm:%s3800]
                %3820 = vst [vmem:[%s3808 + $0x48] sm:%s3800] %v3819
                %v3821 = vld [vmem:[%s3807 + $0x30] sm:%s3800]
                %3822 = vst [vmem:[%s3808 + $0x50] sm:%s3800] %v3821
                %v3823 = vld [vmem:[%s3807 + $0x38] sm:%s3800]
                %3824 = vst [vmem:[%s3808 + $0x58] sm:%s3800] %v3823
              $region165: #{transformer_forward.1} parent=159 // loop_footer
                %s3806 = sadd.s32 1, %s3802
              $region166: #{transformer_forward.1} parent=159 // loop_footer_branch
                %3801 = sbr.rel target = $region162
              $region167: #{transformer_forward.1} parent=159 // loop_exit
                _
            $region160: #{transformer_forward.1} parent=151 // pred_fallthru
              _
          $region152: #{transformer_forward.1} parent=147 // pred_fallthru
            _
          %3853 = vnop
        $region148: #{transformer_forward.1} parent=67 // pred_fallthru
          _
        // Predicated region
        $region183: #{transformer_forward.1} parent=67 // pred_check
          %p3854 = pneg %p403
        $region184: #{transformer_forward.1} parent=67 // pred_check_branch
          %3856 = sbr.rel (%p3854) target = $region186
        $region185: #{transformer_forward.1} parent=67 // pred_region
          %3858 = vsyncadd %s3649, 0
          %s3859 = smul.addr %s30, 8
          %s3860 = scalar_lea.hbm %s15, %s3859
          %s3862 = sshll.u32 %s3652, 4
          %s3863 = int_to_ptr.vmem [resolvable:$true] %s3862
          %s3864 = sshll.u32 %s3860, 4
          %s3865 = int_to_ptr.hbm [resolvable:$true] %s3864
          %3867 = dma.vmem_to_hbm [thread:$0]  %s3863, 128, %s3865, %s3649
        $region186: #{transformer_forward.1} parent=67 // pred_fallthru
          _
      $region68: #{transformer_forward.1} parent=5 // pred_fallthru
        _
      %p3868 = scmp.le.s32.totalorder 2, %s25
      // Predicated region
      $region187: #{transformer_forward.1} parent=5 // pred_check
        %p3869 = pneg %p3868
      $region188: #{transformer_forward.1} parent=5 // pred_check_branch
        %3871 = sbr.rel (%p3869) target = $region190
      $region189: #{transformer_forward.1} parent=5 // pred_region
        %s3872 = ssub.s32 %s25, 2
        // Predicated region
        $region191: #{transformer_forward.1} parent=189 // pred_check
          %p3873 = pneg %p331
        $region192: #{transformer_forward.1} parent=189 // pred_check_branch
          %3875 = sbr.rel (%p3873) target = $region194
        $region193: #{transformer_forward.1} parent=189 // pred_region
          %s3876 = sand.u32 %s316, 1
          %s3877 = sand.u32 %s316, 1
          %s3878 = smul.addr %s3877, 64
          %s3879 = scalar_lea.vmem [#allocation2], %s3878
        $region194: #{transformer_forward.1} parent=189 // pred_fallthru
          _
        // Predicated region
        $region195: #{transformer_forward.1} parent=189 // pred_check
          %p3880 = pneg %p357
        $region196: #{transformer_forward.1} parent=189 // pred_check_branch
          %3882 = sbr.rel (%p3880) target = $region198
        $region197: #{transformer_forward.1} parent=189 // pred_region
          %s3883 = sand.u32 %s342, 1
          %s3884 = sand.u32 %s342, 1
          %s3885 = smul.addr %s3884, 64
          %s3886 = scalar_lea.vmem [#allocation3], %s3885
        $region198: #{transformer_forward.1} parent=189 // pred_fallthru
          _
        // Predicated region
        $region199: #{transformer_forward.1} parent=189 // pred_check
          %p3887 = pneg %p383
        $region200: #{transformer_forward.1} parent=189 // pred_check_branch
          %3889 = sbr.rel (%p3887) target = $region202
        $region201: #{transformer_forward.1} parent=189 // pred_region
          %s3890 = sand.u32 %s368, 1
          %s3891 = sand.u32 %s368, 1
          %s3892 = smul.addr %s3891, 64
          %s3893 = scalar_lea.vmem [#allocation4], %s3892
        $region202: #{transformer_forward.1} parent=189 // pred_fallthru
          _
        // Predicated region
        $region203: #{transformer_forward.1} parent=189 // pred_check
          %p3894 = pneg %p409
        $region204: #{transformer_forward.1} parent=189 // pred_check_branch
          %3896 = sbr.rel (%p3894) target = $region206
        $region205: #{transformer_forward.1} parent=189 // pred_region
          %s3897 = sand.u32 %s394, 1
          %s3898 = scalar_lea.sflag [#allocation6], %s3897
          %s3899 = sand.u32 %s394, 1
          %s3900 = smul.addr %s3899, 8
          %s3901 = scalar_lea.vmem [#allocation5], %s3900
          %3903 = dma.done %s3898, 128
        $region206: #{transformer_forward.1} parent=189 // pred_fallthru
          _
      $region190: #{transformer_forward.1} parent=5 // pred_fallthru
        _
    $region6: #{transformer_forward.1} parent=1 // loop_footer
      %s29 = sadd.s32 1, %s25
    $region7: #{transformer_forward.1} parent=1 // loop_footer_branch
      %24 = sbr.rel target = $region3
    $region8: #{transformer_forward.1} parent=1 // loop_exit
      _
    %3904 = vsyncpa [#allocation6], 1
    %s3905 = scalar_lea.sflag [#allocation6], 1
    %3906 = vsyncpa %s3905, 1

</llo_original>
